<compile_context>
chip_gen: v6e
topology: v6e:2x2x1
jax: 0.10.0
libtpu: 0.0.40
codegen_flags: <defaults>
</compile_context>

<pallas_src>
import functools

import jax
import jax.numpy as jnp
import numpy as np
from jax.experimental import pallas as pl
from jax.experimental.pallas import tpu as pltpu

LANE = 128
UNROLL = 4                       # time steps fused per recurrence grid step
VMEM_LIMIT = 48 * 1024 * 1024    # safe on v5e/v6e (128 MiB) and v7x (64 MiB)


def _round_up(x, m):
    return ((x + m - 1) // m) * m


def _row_block_and_pad(rows, cap=512):
    """Row-block size plus padded row count (never collapses to tiny blocks)."""
    rb = min(cap, _round_up(rows, 16))
    return rb, _round_up(rows, rb)


# ----------------------------------------------------------------------------
# Pallas kernels
# ----------------------------------------------------------------------------
def _inproj_kernel(x_ref, w_ref, b_ref, o_ref):
    """(rb, E)bf16 @ (E, 8S)bf16 + (1, 8S)f32 -> (rb, 8S) bf16 gate pre-acts."""
    o_ref[...] = (jnp.dot(x_ref[...], w_ref[...],
                          preferred_element_type=jnp.float32)
                  + b_ref[...]).astype(o_ref.dtype)


def _bilstm_kernel(lens_ref, gxf_ref, gxb_ref, whh_ref, of_ref, ob_ref,
                   h_sc, c_sc, *, seq_len, hidden, unroll):
    """One grid step = `unroll` time steps of the fused (fwd + bwd) LSTM.

    lens_ref : (Bp, 1) int32        sequence lengths
    gxf_ref  : (U, Bp, 4S) bf16     precomputed fwd input gates, times j*U..j*U+U-1
    gxb_ref  : (U, Bp, 4S) bf16     precomputed bwd input gates (block reversed)
    whh_ref  : (2S, 8S) bf16        block-diag [[Whh_f, 0], [0, Whh_b]] (cols i,f,o,g)
    of_ref   : (U, Bp, S) bf16      fwd hidden outputs
    ob_ref   : (U, Bp, S) bf16      bwd hidden outputs
    h_sc,c_sc: (Bp, 2S) f32         carried [fwd | bwd] state (VMEM scratch)
    """
    S = hidden
    j = pl.program_id(0)

    @pl.when(j == 0)
    def _():
        h_sc[...] = jnp.zeros_like(h_sc)
        c_sc[...] = jnp.zeros_like(c_sc)

    lens = lens_ref[...]                     # (Bp, 1) int32
    whh = whh_ref[...]                       # (2S, 8S) bf16, VMEM-resident

    for u in range(unroll):                  # fully unrolled, static indices
        ub = unroll - 1 - u
        t_f = j * unroll + u                 # forward absolute time
        t_b = (seq_len - 1) - t_f            # backward absolute time

        # One MXU call updates both directions (bf16 operands, f32 accumulate).
        rec = jnp.dot(h_sc[...].astype(jnp.bfloat16), whh,
                      preferred_element_type=jnp.float32)        # (Bp, 8S)

        gates_f = gxf_ref[u].astype(jnp.float32) + rec[:, :4 * S]
        gates_b = gxb_ref[ub].astype(jnp.float32) + rec[:, 4 * S:]

        # Gate column order per direction is [i, f, o, g]: one sigmoid over the
        # contiguous i/f/o slab and one tanh over g.
        sig_f = jax.nn.sigmoid(gates_f[:, :3 * S])
        sig_b = jax.nn.sigmoid(gates_b[:, :3 * S])
        g_f = jnp.tanh(gates_f[:, 3 * S:])
        g_b = jnp.tanh(gates_b[:, 3 * S:])

        c_f = sig_f[:, S:2 * S] * c_sc[:, :S] + sig_f[:, :S] * g_f
        c_b = sig_b[:, S:2 * S] * c_sc[:, S:] + sig_b[:, :S] * g_b
        h_f = sig_f[:, 2 * S:] * jnp.tanh(c_f)
        h_b = sig_b[:, 2 * S:] * jnp.tanh(c_b)

        mask_f = t_f < lens                  # (Bp, 1) bool
        mask_b = t_b < lens

        # Hold previous (zero) state outside the valid range -> reverse
        # direction starts fresh at lengths[b]-1, like pack_padded_sequence.
        c_sc[:, :S] = jnp.where(mask_f, c_f, c_sc[:, :S])
        h_sc[:, :S] = jnp.where(mask_f, h_f, h_sc[:, :S])
        c_sc[:, S:] = jnp.where(mask_b, c_b, c_sc[:, S:])
        h_sc[:, S:] = jnp.where(mask_b, h_b, h_sc[:, S:])

        of_ref[u] = jnp.where(mask_f, h_f, 0.0).astype(of_ref.dtype)
        ob_ref[ub] = jnp.where(mask_b, h_b, 0.0).astype(ob_ref.dtype)


def _linear_kernel(hf_ref, hb_ref, wf_ref, wb_ref, b_ref, o_ref):
    """scores = h_f @ W_f + h_b @ W_b + b  (no feature concat needed)."""
    o_ref[...] = (jnp.dot(hf_ref[...], wf_ref[...],
                          preferred_element_type=jnp.float32)
                  + jnp.dot(hb_ref[...], wb_ref[...],
                            preferred_element_type=jnp.float32)
                  + b_ref[...])


# ----------------------------------------------------------------------------
# pallas_call wrappers
# ----------------------------------------------------------------------------
def run_input_projection(x2d, w_comb, bias_comb):
    rows, E = x2d.shape
    G = w_comb.shape[1]
    rb, rows_pad = _row_block_and_pad(rows)
    if rows_pad != rows:
        x2d = jnp.pad(x2d, ((0, rows_pad - rows), (0, 0)))
    out = pl.pallas_call(
        _inproj_kernel,
        out_shape=jax.ShapeDtypeStruct((rows_pad, G), jnp.bfloat16),
        grid=(rows_pad // rb,),
        in_specs=[pl.BlockSpec((rb, E), lambda i: (i, 0)),
                  pl.BlockSpec((E, G), lambda i: (0, 0)),
                  pl.BlockSpec((1, G), lambda i: (0, 0))],
        out_specs=pl.BlockSpec((rb, G), lambda i: (i, 0)),
        compiler_params=pltpu.CompilerParams(
            dimension_semantics=("parallel",),
            vmem_limit_bytes=VMEM_LIMIT),
    )(x2d, w_comb, bias_comb)
    return out[:rows]


def run_bilstm(lens2d, gates_x, whh_block, *, seq_len, hidden, unroll):
    T, Bp, _ = gates_x.shape
    S = hidden
    nb = T // unroll
    kernel = functools.partial(_bilstm_kernel, seq_len=seq_len, hidden=S,
                               unroll=unroll)
    return pl.pallas_call(
        kernel,
        out_shape=(jax.ShapeDtypeStruct((T, Bp, S), jnp.bfloat16),
                   jax.ShapeDtypeStruct((T, Bp, S), jnp.bfloat16)),
        grid=(nb,),
        in_specs=[
            pl.BlockSpec((Bp, 1), lambda j: (0, 0)),                       # lens
            pl.BlockSpec((unroll, Bp, 4 * S), lambda j: (j, 0, 0)),        # fwd gx
            pl.BlockSpec((unroll, Bp, 4 * S),
                         lambda j: (nb - 1 - j, 0, 1)),                    # bwd gx
            pl.BlockSpec((2 * S, 8 * S), lambda j: (0, 0)),                # W_hh
        ],
        out_specs=(
            pl.BlockSpec((unroll, Bp, S), lambda j: (j, 0, 0)),            # h fwd
            pl.BlockSpec((unroll, Bp, S), lambda j: (nb - 1 - j, 0, 0)),   # h bwd
        ),
        scratch_shapes=[pltpu.VMEM((Bp, 2 * S), jnp.float32),              # h
                        pltpu.VMEM((Bp, 2 * S), jnp.float32)],             # c
        compiler_params=pltpu.CompilerParams(
            dimension_semantics=("arbitrary",),
            vmem_limit_bytes=VMEM_LIMIT),
    )(lens2d, gates_x, gates_x, whh_block)


def run_output_projection(hf2d, hb2d, wf, wb, bias):
    rows, S = hf2d.shape
    TAGSp = wf.shape[1]
    rb, rows_pad = _row_block_and_pad(rows)
    if rows_pad != rows:
        hf2d = jnp.pad(hf2d, ((0, rows_pad - rows), (0, 0)))
        hb2d = jnp.pad(hb2d, ((0, rows_pad - rows), (0, 0)))
    out = pl.pallas_call(
        _linear_kernel,
        out_shape=jax.ShapeDtypeStruct((rows_pad, TAGSp), jnp.float32),
        grid=(rows_pad // rb,),
        in_specs=[pl.BlockSpec((rb, S), lambda i: (i, 0)),
                  pl.BlockSpec((rb, S), lambda i: (i, 0)),
                  pl.BlockSpec((S, TAGSp), lambda i: (0, 0)),
                  pl.BlockSpec((S, TAGSp), lambda i: (0, 0)),
                  pl.BlockSpec((1, TAGSp), lambda i: (0, 0))],
        out_specs=pl.BlockSpec((rb, TAGSp), lambda i: (i, 0)),
        compiler_params=pltpu.CompilerParams(
            dimension_semantics=("parallel",),
            vmem_limit_bytes=VMEM_LIMIT),
    )(hf2d, hb2d, wf, wb, bias)
    return out[:rows]


# ----------------------------------------------------------------------------
# Parameter preparation (pad / reorder / bf16-cast for the kernels)
# ----------------------------------------------------------------------------
def _pad_axis(x, axis, new_size):
    pad = [(0, 0)] * x.ndim
    pad[axis] = (0, new_size - x.shape[axis])
    return jnp.pad(x, pad)


def _reorder_and_pad_gates(w, H, S):
    """(..., 4H) in torch gate order [i,f,g,o] -> (..., 4S) in order [i,f,o,g]."""
    i = w[..., 0 * H:1 * H]
    f = w[..., 1 * H:2 * H]
    g = w[..., 2 * H:3 * H]
    o = w[..., 3 * H:4 * H]
    return jnp.concatenate([_pad_axis(b, -1, S) for b in (i, f, o, g)], axis=-1)


def _prepare_kernel_params(params, S, TAGSp):
    H = params["whh_f_t"].shape[0]

    wih_f = _reorder_and_pad_gates(params["wih_f_t"], H, S)      # (E, 4S)
    wih_b = _reorder_and_pad_gates(params["wih_b_t"], H, S)      # (E, 4S)
    wih_comb = jnp.concatenate([wih_f, wih_b], -1).astype(jnp.bfloat16)

    whh_f = _pad_axis(_reorder_and_pad_gates(params["whh_f_t"], H, S), 0, S)
    whh_b = _pad_axis(_reorder_and_pad_gates(params["whh_b_t"], H, S), 0, S)
    zeros = jnp.zeros((S, 4 * S), jnp.float32)
    whh_block = jnp.concatenate(
        [jnp.concatenate([whh_f, zeros], axis=-1),
         jnp.concatenate([zeros, whh_b], axis=-1)], axis=0).astype(jnp.bfloat16)

    b_f = _reorder_and_pad_gates(params["b_f"], H, S)            # (1, 4S)
    b_b = _reorder_and_pad_gates(params["b_b"], H, S)
    bias_comb = jnp.concatenate([b_f, b_b], axis=-1)             # (1, 8S) f32

    lin_w_t = params["lin_w_t"]                                  # (2H, tags)
    lin_wf = _pad_axis(_pad_axis(lin_w_t[:H], 0, S), -1, TAGSp).astype(jnp.bfloat16)
    lin_wb = _pad_axis(_pad_axis(lin_w_t[H:], 0, S), -1, TAGSp).astype(jnp.bfloat16)
    lin_b = _pad_axis(params["lin_b"], -1, TAGSp)                # (1, TAGSp) f32

    return dict(wih_comb=wih_comb, whh_block=whh_block, bias_comb=bias_comb,
                lin_wf=lin_wf, lin_wb=lin_wb, lin_b=lin_b)


# ----------------------------------------------------------------------------
# Forward pass
# ----------------------------------------------------------------------------
@jax.jit
def bilstm_fc_forward(sents, lengths, params):
    """sents: (B, T) int32 ids, lengths: (B,) int32 -> scores (B, T, num_tags)."""
    B, T = sents.shape
    E = params["emb"].shape[1]
    H = params["whh_f_t"].shape[0]
    num_tags = params["lin_w_t"].shape[1]

    S = _round_up(H, LANE)              # padded per-direction hidden
    TAGSp = _round_up(num_tags, LANE)   # padded tag count
    Bp = _round_up(B, 16)               # padded batch (bf16 (16,128) tiles)
    U = UNROLL
    Tp = _round_up(T, U)                # padded sequence length

    kp = _prepare_kernel_params(params, S, TAGSp)

    sents_p = jnp.pad(sents, ((0, Bp - B), (0, Tp - T)))
    lens_p = jnp.pad(lengths.astype(jnp.int32), (0, Bp - B))

    # Embedding lookup in time-major order (Tp, Bp, E) — the gather stays in
    # XLA; everything downstream is Pallas.
    emb_tb = jnp.take(params["emb"], sents_p.T, axis=0)
    x2d = emb_tb.reshape(Tp * Bp, E).astype(jnp.bfloat16)

    # Hoisted input projection for both directions: one big tiled matmul.
    gates_x = run_input_projection(x2d, kp["wih_comb"], kp["bias_comb"])
    gates_x = gates_x.reshape(Tp, Bp, 8 * S)          # bf16

    # Fused bidirectional recurrence, UNROLL steps per grid iteration.
    lens2d = lens_p.reshape(Bp, 1)
    h_f, h_b = run_bilstm(lens2d, gates_x, kp["whh_block"],
                          seq_len=Tp, hidden=S, unroll=U)

    # Output projection with split weights (no feature concat in HBM).
    scores2d = run_output_projection(h_f.reshape(Tp * Bp, S),
                                     h_b.reshape(Tp * Bp, S),
                                     kp["lin_wf"], kp["lin_wb"], kp["lin_b"])
    scores = scores2d.reshape(Tp, Bp, TAGSp)[:T, :B, :num_tags]
    return jnp.transpose(scores, (1, 0, 2))   # tiny (T,B,tags) -> (B,T,tags)


# ----------------------------------------------------------------------------
# Pure-JAX reference (mirrors the kernel's bf16-on-MXU / f32-accumulate and
# the bf16 storage of the hoisted input-gate pre-activations)
# ----------------------------------------------------------------------------
def _lstm_dir_ref(gx, lens, whh_t, reverse):
    T, B, _ = gx.shape
    H = whh_t.shape[0]
    whh_bf = whh_t.astype(jnp.bfloat16)

    def step(carry, t):
        h, c = carry
        gates = gx[t] + jnp.dot(h.astype(jnp.bfloat16), whh_bf,
                                preferred_element_type=jnp.float32)
        i_g = jax.nn.sigmoid(gates[:, :H])
        f_g = jax.nn.sigmoid(gates[:, H:2 * H])
        g_g = jnp.tanh(gates[:, 2 * H:3 * H])
        o_g = jax.nn.sigmoid(gates[:, 3 * H:])
        c_new = f_g * c + i_g * g_g
        h_new = o_g * jnp.tanh(c_new)
        m = (t < lens)[:, None]
        out = jnp.where(m, h_new, 0.0)
        return (jnp.where(m, h_new, h), jnp.where(m, c_new, c)), out

    ts = jnp.arange(T - 1, -1, -1) if reverse else jnp.arange(T)
    init = (jnp.zeros((B, H), jnp.float32), jnp.zeros((B, H), jnp.float32))
    _, outs = jax.lax.scan(step, init, ts)
    return outs[::-1] if reverse else outs


def bilstm_fc_ref(sents, lengths, params):
    emb_tbd = params["emb"][sents].transpose(1, 0, 2)      # (T, B, E)
    x_bf = emb_tbd.astype(jnp.bfloat16)
    lens = lengths.astype(jnp.int32)

    def gx(wih_t, b):
        g = (jnp.dot(x_bf, wih_t.astype(jnp.bfloat16),
                     preferred_element_type=jnp.float32) + b)
        return g.astype(jnp.bfloat16).astype(jnp.float32)   # mirror bf16 storage

    h_fwd = _lstm_dir_ref(gx(params["wih_f_t"], params["b_f"]), lens,
                          params["whh_f_t"], False)
    h_bwd = _lstm_dir_ref(gx(params["wih_b_t"], params["b_b"]), lens,
                          params["whh_b_t"], True)
    feats = jnp.concatenate([h_fwd, h_bwd], -1).astype(jnp.bfloat16)
    feats = jnp.transpose(feats, (1, 0, 2))
    scores = (jnp.dot(feats, params["lin_w_t"].astype(jnp.bfloat16),
                      preferred_element_type=jnp.float32) + params["lin_b"])
    return scores


# ----------------------------------------------------------------------------
# Deterministic parameters (mirrors the PyTorch module shapes, gate order ifgo)
# ----------------------------------------------------------------------------
def make_params(key, vocab_size, emb_size, hidden_size, num_tags):
    ks = jax.random.split(key, 12)
    H = hidden_size
    bound = 1.0 / np.sqrt(H)
    u = lambda k, shp, b: jax.random.uniform(k, shp, jnp.float32, -b, b)

    emb = jax.random.normal(ks[0], (vocab_size, emb_size), jnp.float32)

    wih_f_t = u(ks[1], (emb_size, 4 * H), bound)
    whh_f_t = u(ks[2], (H, 4 * H), bound)
    b_f = (u(ks[3], (4 * H,), bound) + u(ks[4], (4 * H,), bound)).reshape(1, -1)

    wih_b_t = u(ks[5], (emb_size, 4 * H), bound)
    whh_b_t = u(ks[6], (H, 4 * H), bound)
    b_b = (u(ks[7], (4 * H,), bound) + u(ks[8], (4 * H,), bound)).reshape(1, -1)

    lb = 1.0 / np.sqrt(2 * H)
    lin_w_t = u(ks[9], (2 * H, num_tags), lb)
    lin_b = u(ks[10], (num_tags,), lb).reshape(1, -1)

    return dict(emb=emb, wih_f_t=wih_f_t, whh_f_t=whh_f_t, b_f=b_f,
                wih_b_t=wih_b_t, whh_b_t=whh_b_t, b_b=b_b,
                lin_w_t=lin_w_t, lin_b=lin_b)


if __name__ == "__main__":
    vocab_size, emb_size, hidden_size, num_tags = 50, 16, 32, 8
    B, T = 2, 8

    key = jax.random.PRNGKey(0)
    k_param, k_data = jax.random.split(key)
    params = make_params(k_param, vocab_size, emb_size, hidden_size, num_tags)

    sents = jax.random.randint(k_data, (B, T), 0, vocab_size, dtype=jnp.int32)
    lengths = jnp.array([T, 5], dtype=jnp.int32)

    scores = jax.block_until_ready(bilstm_fc_forward(sents, lengths, params))
    ref = jax.block_until_ready(bilstm_fc_ref(sents, lengths, params))

    np.testing.assert_allclose(np.asarray(scores), np.asarray(ref),
                               rtol=2e-2, atol=2e-2)
    assert scores.shape == (B, T, num_tags)
    print("KERNEL_OK")
</pallas_src>

<mosaic_0001>
module attributes {stable_mosaic.version = 11 : i64} {
  func.func @_inproj_kernel(%arg0: i32, %arg1: memref<128x16xbf16, #tpu.memory_space<vmem>>, %arg2: memref<16x1024xbf16, #tpu.memory_space<vmem>>, %arg3: memref<1x1024xf32, #tpu.memory_space<vmem>>, %arg4: memref<128x1024xbf16, #tpu.memory_space<vmem>>) attributes {dimension_semantics = [#tpu.dimension_semantics<parallel>], iteration_bounds = array<i64: 1>, scalar_prefetch = 0 : i64, scratch_operands = 0 : i64, tpu.core_type = #tpu.core_type<tc>, window_params = [{transform_indices = @transform_0, window_bounds = array<i64: 128, 16>}, {pipeline_mode = #tpu.pipeline_mode<synchronous>, transform_indices = @transform_1, window_bounds = array<i64: 16, 1024>}, {pipeline_mode = #tpu.pipeline_mode<synchronous>, transform_indices = @transform_2, window_bounds = array<i64: 1, 1024>}, {transform_indices = @transform_3, window_bounds = array<i64: 128, 1024>}]} {
    %c0 = arith.constant 0 : index
    %c0_0 = arith.constant 0 : index
    %0 = vector.load %arg1[%c0, %c0_0] : memref<128x16xbf16, #tpu.memory_space<vmem>>, vector<128x16xbf16>
    %c0_1 = arith.constant 0 : index
    %c0_2 = arith.constant 0 : index
    %1 = vector.load %arg2[%c0_1, %c0_2] : memref<16x1024xbf16, #tpu.memory_space<vmem>>, vector<16x1024xbf16>
    %cst = arith.constant dense<0.000000e+00> : vector<128x1024xf32>
    %2 = tpu.matmul %0, %1, %cst {dimension_numbers = #tpu.dot_dimension_numbers<[1], [0], [0], [1], [0, 0, 1, 1], [], []>} : vector<128x16xbf16>, vector<16x1024xbf16>, vector<128x1024xf32> -> vector<128x1024xf32>
    %c0_3 = arith.constant 0 : index
    %c0_4 = arith.constant 0 : index
    %3 = vector.load %arg3[%c0_3, %c0_4] : memref<1x1024xf32, #tpu.memory_space<vmem>>, vector<1x1024xf32>
    %4 = vector.broadcast %3 : vector<1x1024xf32> to vector<128x1024xf32>
    %5 = arith.addf %2, %4 : vector<128x1024xf32>
    %6 = arith.truncf %5 : vector<128x1024xf32> to vector<128x1024xbf16>
    %c0_5 = arith.constant 0 : index
    %c0_6 = arith.constant 0 : index
    %7 = vector.load %arg4[%c0_5, %c0_6] : memref<128x1024xbf16, #tpu.memory_space<vmem>>, vector<128x1024xbf16>
    tpu.vector_store %arg4[%c0_5, %c0_6], %6 {strides = array<i32>} : memref<128x1024xbf16, #tpu.memory_space<vmem>>, vector<128x1024xbf16>,
    return
  }
  func.func @transform_0(%arg0: i32) -> (i32, i32) {
    %c0_i32 = arith.constant 0 : i32
    %c0_i32_0 = arith.constant 0 : i32
    return %arg0, %c0_i32 : i32, i32
  }
  func.func @transform_1(%arg0: i32) -> (i32, i32) {
    %c0_i32 = arith.constant 0 : i32
    %c0_i32_0 = arith.constant 0 : i32
    %c0_i32_1 = arith.constant 0 : i32
    return %c0_i32, %c0_i32_0 : i32, i32
  }
  func.func @transform_2(%arg0: i32) -> (i32, i32) {
    %c0_i32 = arith.constant 0 : i32
    %c0_i32_0 = arith.constant 0 : i32
    %c0_i32_1 = arith.constant 0 : i32
    return %c0_i32, %c0_i32_0 : i32, i32
  }
  func.func @transform_3(%arg0: i32) -> (i32, i32) {
    %c0_i32 = arith.constant 0 : i32
    %c0_i32_0 = arith.constant 0 : i32
    return %arg0, %c0_i32 : i32, i32
  }
}

module attributes {stable_mosaic.version = 11 : i64} {
  func.func @_linear_kernel(%arg0: i32, %arg1: memref<128x128xbf16, #tpu.memory_space<vmem>>, %arg2: memref<128x128xbf16, #tpu.memory_space<vmem>>, %arg3: memref<128x128xbf16, #tpu.memory_space<vmem>>, %arg4: memref<128x128xbf16, #tpu.memory_space<vmem>>, %arg5: memref<1x128xf32, #tpu.memory_space<vmem>>, %arg6: memref<128x128xf32, #tpu.memory_space<vmem>>) attributes {dimension_semantics = [#tpu.dimension_semantics<parallel>], iteration_bounds = array<i64: 1>, scalar_prefetch = 0 : i64, scratch_operands = 0 : i64, tpu.core_type = #tpu.core_type<tc>, window_params = [{transform_indices = @transform_0, window_bounds = array<i64: 128, 128>}, {transform_indices = @transform_1, window_bounds = array<i64: 128, 128>}, {pipeline_mode = #tpu.pipeline_mode<synchronous>, transform_indices = @transform_2, window_bounds = array<i64: 128, 128>}, {pipeline_mode = #tpu.pipeline_mode<synchronous>, transform_indices = @transform_3, window_bounds = array<i64: 128, 128>}, {pipeline_mode = #tpu.pipeline_mode<synchronous>, transform_indices = @transform_4, window_bounds = array<i64: 1, 128>}, {transform_indices = @transform_5, window_bounds = array<i64: 128, 128>}]} {
    %c0 = arith.constant 0 : index
    %c0_0 = arith.constant 0 : index
    %0 = vector.load %arg1[%c0, %c0_0] : memref<128x128xbf16, #tpu.memory_space<vmem>>, vector<128x128xbf16>
    %c0_1 = arith.constant 0 : index
    %c0_2 = arith.constant 0 : index
    %1 = vector.load %arg3[%c0_1, %c0_2] : memref<128x128xbf16, #tpu.memory_space<vmem>>, vector<128x128xbf16>
    %cst = arith.constant dense<0.000000e+00> : vector<128x128xf32>
    %2 = tpu.matmul %0, %1, %cst {dimension_numbers = #tpu.dot_dimension_numbers<[1], [0], [0], [1], [0, 0, 1, 1], [], []>} : vector<128x128xbf16>, vector<128x128xbf16>, vector<128x128xf32> -> vector<128x128xf32>
    %c0_3 = arith.constant 0 : index
    %c0_4 = arith.constant 0 : index
    %3 = vector.load %arg2[%c0_3, %c0_4] : memref<128x128xbf16, #tpu.memory_space<vmem>>, vector<128x128xbf16>
    %c0_5 = arith.constant 0 : index
    %c0_6 = arith.constant 0 : index
    %4 = vector.load %arg4[%c0_5, %c0_6] : memref<128x128xbf16, #tpu.memory_space<vmem>>, vector<128x128xbf16>
    %cst_7 = arith.constant dense<0.000000e+00> : vector<128x128xf32>
    %5 = tpu.matmul %3, %4, %cst_7 {dimension_numbers = #tpu.dot_dimension_numbers<[1], [0], [0], [1], [0, 0, 1, 1], [], []>} : vector<128x128xbf16>, vector<128x128xbf16>, vector<128x128xf32> -> vector<128x128xf32>
    %6 = arith.addf %2, %5 : vector<128x128xf32>
    %c0_8 = arith.constant 0 : index
    %c0_9 = arith.constant 0 : index
    %7 = vector.load %arg5[%c0_8, %c0_9] : memref<1x128xf32, #tpu.memory_space<vmem>>, vector<1x128xf32>
    %8 = vector.broadcast %7 : vector<1x128xf32> to vector<128x128xf32>
    %9 = arith.addf %6, %8 : vector<128x128xf32>
    %c0_10 = arith.constant 0 : index
    %c0_11 = arith.constant 0 : index
    %10 = vector.load %arg6[%c0_10, %c0_11] : memref<128x128xf32, #tpu.memory_space<vmem>>, vector<128x128xf32>
    tpu.vector_store %arg6[%c0_10, %c0_11], %9 {strides = array<i32>} : memref<128x128xf32, #tpu.memory_space<vmem>>, vector<128x128xf32>,
    return
  }
  func.func @transform_0(%arg0: i32) -> (i32, i32) {
    %c0_i32 = arith.constant 0 : i32
    %c0_i32_0 = arith.constant 0 : i32
    return %arg0, %c0_i32 : i32, i32
  }
  func.func @transform_1(%arg0: i32) -> (i32, i32) {
    %c0_i32 = arith.constant 0 : i32
    %c0_i32_0 = arith.constant 0 : i32
    return %arg0, %c0_i32 : i32, i32
  }
  func.func @transform_2(%arg0: i32) -> (i32, i32) {
    %c0_i32 = arith.constant 0 : i32
    %c0_i32_0 = arith.constant 0 : i32
    %c0_i32_1 = arith.constant 0 : i32
    return %c0_i32, %c0_i32_0 : i32, i32
  }
  func.func @transform_3(%arg0: i32) -> (i32, i32) {
    %c0_i32 = arith.constant 0 : i32
    %c0_i32_0 = arith.constant 0 : i32
    %c0_i32_1 = arith.constant 0 : i32
    return %c0_i32, %c0_i32_0 : i32, i32
  }
  func.func @transform_4(%arg0: i32) -> (i32, i32) {
    %c0_i32 = arith.constant 0 : i32
    %c0_i32_0 = arith.constant 0 : i32
    %c0_i32_1 = arith.constant 0 : i32
    return %c0_i32, %c0_i32_0 : i32, i32
  }
  func.func @transform_5(%arg0: i32) -> (i32, i32) {
    %c0_i32 = arith.constant 0 : i32
    %c0_i32_0 = arith.constant 0 : i32
    return %arg0, %c0_i32 : i32, i32
  }
}

module attributes {stable_mosaic.version = 11 : i64} {
  func.func @_bilstm_kernel(%arg0: i32, %arg1: memref<16x1xi32, #tpu.memory_space<vmem>>, %arg2: memref<4x16x512xbf16, #tpu.memory_space<vmem>>, %arg3: memref<4x16x512xbf16, #tpu.memory_space<vmem>>, %arg4: memref<256x1024xbf16, #tpu.memory_space<vmem>>, %arg5: memref<4x16x128xbf16, #tpu.memory_space<vmem>>, %arg6: memref<4x16x128xbf16, #tpu.memory_space<vmem>>, %arg7: memref<16x256xf32, #tpu.memory_space<vmem>>, %arg8: memref<16x256xf32, #tpu.memory_space<vmem>>) attributes {dimension_semantics = [#tpu.dimension_semantics<arbitrary>], iteration_bounds = array<i64: 2>, scalar_prefetch = 0 : i64, scratch_operands = 2 : i64, tpu.core_type = #tpu.core_type<tc>, window_params = [{pipeline_mode = #tpu.pipeline_mode<synchronous>, transform_indices = @transform_0, window_bounds = array<i64: 16, 1>}, {transform_indices = @transform_1, window_bounds = array<i64: 4, 16, 512>}, {transform_indices = @transform_2, window_bounds = array<i64: 4, 16, 512>}, {pipeline_mode = #tpu.pipeline_mode<synchronous>, transform_indices = @transform_3, window_bounds = array<i64: 256, 1024>}, {transform_indices = @transform_4, window_bounds = array<i64: 4, 16, 128>}, {transform_indices = @transform_5, window_bounds = array<i64: 4, 16, 128>}]} {
    %c0_i32 = arith.constant 0 : i32
    %0 = arith.cmpi eq, %arg0, %c0_i32 : i32
    %1 = arith.extui %0 : i1 to i32
    %c0_i32_0 = arith.constant 0 : i32
    %2 = arith.cmpi ne, %1, %c0_i32_0 : i32
    scf.if %2 {
      %cst_162 = arith.constant 0.000000e+00 : f32
      %365 = vector.broadcast %cst_162 : f32 to vector<16x256xf32>
      %c0_163 = arith.constant 0 : index
      %c0_164 = arith.constant 0 : index
      %366 = vector.load %arg7[%c0_163, %c0_164] : memref<16x256xf32, #tpu.memory_space<vmem>>, vector<16x256xf32>
      tpu.vector_store %arg7[%c0_163, %c0_164], %365 {strides = array<i32>} : memref<16x256xf32, #tpu.memory_space<vmem>>, vector<16x256xf32>,
      %cst_165 = arith.constant 0.000000e+00 : f32
      %367 = vector.broadcast %cst_165 : f32 to vector<16x256xf32>
      %c0_166 = arith.constant 0 : index
      %c0_167 = arith.constant 0 : index
      %368 = vector.load %arg8[%c0_166, %c0_167] : memref<16x256xf32, #tpu.memory_space<vmem>>, vector<16x256xf32>
      tpu.vector_store %arg8[%c0_166, %c0_167], %367 {strides = array<i32>} : memref<16x256xf32, #tpu.memory_space<vmem>>, vector<16x256xf32>,
    } else {
    }
    %c0 = arith.constant 0 : index
    %c0_1 = arith.constant 0 : index
    %3 = vector.load %arg1[%c0, %c0_1] : memref<16x1xi32, #tpu.memory_space<vmem>>, vector<16x1xi32>
    %c0_2 = arith.constant 0 : index
    %c0_3 = arith.constant 0 : index
    %4 = vector.load %arg4[%c0_2, %c0_3] : memref<256x1024xbf16, #tpu.memory_space<vmem>>, vector<256x1024xbf16>
    %c4_i32 = arith.constant 4 : i32
    %5 = arith.muli %arg0, %c4_i32 : i32
    %c0_i32_4 = arith.constant 0 : i32
    %6 = arith.addi %5, %c0_i32_4 : i32
    %c7_i32 = arith.constant 7 : i32
    %7 = arith.subi %c7_i32, %6 : i32
    %c0_5 = arith.constant 0 : index
    %c0_6 = arith.constant 0 : index
    %8 = vector.load %arg7[%c0_5, %c0_6] : memref<16x256xf32, #tpu.memory_space<vmem>>, vector<16x256xf32>
    %9 = arith.truncf %8 : vector<16x256xf32> to vector<16x256xbf16>
    %cst = arith.constant dense<0.000000e+00> : vector<16x1024xf32>
    %10 = tpu.matmul %9, %4, %cst {dimension_numbers = #tpu.dot_dimension_numbers<[1], [0], [0], [1], [0, 0, 1, 1], [], []>} : vector<16x256xbf16>, vector<256x1024xbf16>, vector<16x1024xf32> -> vector<16x1024xf32>
    %c0_7 = arith.constant 0 : index
    %c0_8 = arith.constant 0 : index
    %c0_9 = arith.constant 0 : index
    %11 = vector.load %arg2[%c0_7, %c0_8, %c0_9] : memref<4x16x512xbf16, #tpu.memory_space<vmem>>, vector<1x16x512xbf16>
    %12 = vector.shape_cast %11 : vector<1x16x512xbf16> to vector<16x512xbf16>
    %13 = arith.extf %12 : vector<16x512xbf16> to vector<16x512xf32>
    %14 = vector.extract_strided_slice %10 {offsets = [0, 0], sizes = [16, 512], strides = [1, 1]} : vector<16x1024xf32> to vector<16x512xf32>
    %15 = arith.addf %13, %14 : vector<16x512xf32>
    %c3 = arith.constant 3 : index
    %c0_10 = arith.constant 0 : index
    %c0_11 = arith.constant 0 : index
    %16 = vector.load %arg3[%c3, %c0_10, %c0_11] : memref<4x16x512xbf16, #tpu.memory_space<vmem>>, vector<1x16x512xbf16>
    %17 = vector.shape_cast %16 : vector<1x16x512xbf16> to vector<16x512xbf16>
    %18 = arith.extf %17 : vector<16x512xbf16> to vector<16x512xf32>
    %19 = vector.extract_strided_slice %10 {offsets = [0, 512], sizes = [16, 512], strides = [1, 1]} : vector<16x1024xf32> to vector<16x512xf32>
    %20 = arith.addf %18, %19 : vector<16x512xf32>
    %21 = vector.extract_strided_slice %15 {offsets = [0, 0], sizes = [16, 384], strides = [1, 1]} : vector<16x512xf32> to vector<16x384xf32>
    %22 = arith.negf %21 : vector<16x384xf32>
    %23 = math.exp %22 : vector<16x384xf32>
    %cst_12 = arith.constant 1.000000e+00 : f32
    %24 = vector.broadcast %cst_12 : f32 to vector<16x384xf32>
    %25 = arith.addf %24, %23 : vector<16x384xf32>
    %26 = arith.divf %24, %25 : vector<16x384xf32>
    %27 = vector.extract_strided_slice %20 {offsets = [0, 0], sizes = [16, 384], strides = [1, 1]} : vector<16x512xf32> to vector<16x384xf32>
    %28 = arith.negf %27 : vector<16x384xf32>
    %29 = math.exp %28 : vector<16x384xf32>
    %cst_13 = arith.constant 1.000000e+00 : f32
    %30 = vector.broadcast %cst_13 : f32 to vector<16x384xf32>
    %31 = arith.addf %30, %29 : vector<16x384xf32>
    %32 = arith.divf %30, %31 : vector<16x384xf32>
    %33 = vector.extract_strided_slice %15 {offsets = [0, 384], sizes = [16, 128], strides = [1, 1]} : vector<16x512xf32> to vector<16x128xf32>
    %34 = math.tanh %33 : vector<16x128xf32>
    %35 = vector.extract_strided_slice %20 {offsets = [0, 384], sizes = [16, 128], strides = [1, 1]} : vector<16x512xf32> to vector<16x128xf32>
    %36 = math.tanh %35 : vector<16x128xf32>
    %37 = vector.extract_strided_slice %26 {offsets = [0, 128], sizes = [16, 128], strides = [1, 1]} : vector<16x384xf32> to vector<16x128xf32>
    %c0_14 = arith.constant 0 : index
    %c0_15 = arith.constant 0 : index
    %38 = vector.load %arg8[%c0_14, %c0_15] : memref<16x256xf32, #tpu.memory_space<vmem>>, vector<16x128xf32>
    %39 = arith.mulf %37, %38 : vector<16x128xf32>
    %40 = vector.extract_strided_slice %26 {offsets = [0, 0], sizes = [16, 128], strides = [1, 1]} : vector<16x384xf32> to vector<16x128xf32>
    %41 = arith.mulf %40, %34 : vector<16x128xf32>
    %42 = arith.addf %39, %41 : vector<16x128xf32>
    %43 = vector.extract_strided_slice %32 {offsets = [0, 128], sizes = [16, 128], strides = [1, 1]} : vector<16x384xf32> to vector<16x128xf32>
    %c0_16 = arith.constant 0 : index
    %c128 = arith.constant 128 : index
    %44 = vector.load %arg8[%c0_16, %c128] : memref<16x256xf32, #tpu.memory_space<vmem>>, vector<16x128xf32>
    %45 = arith.mulf %43, %44 : vector<16x128xf32>
    %46 = vector.extract_strided_slice %32 {offsets = [0, 0], sizes = [16, 128], strides = [1, 1]} : vector<16x384xf32> to vector<16x128xf32>
    %47 = arith.mulf %46, %36 : vector<16x128xf32>
    %48 = arith.addf %45, %47 : vector<16x128xf32>
    %49 = vector.extract_strided_slice %26 {offsets = [0, 256], sizes = [16, 128], strides = [1, 1]} : vector<16x384xf32> to vector<16x128xf32>
    %50 = math.tanh %42 : vector<16x128xf32>
    %51 = arith.mulf %49, %50 : vector<16x128xf32>
    %52 = vector.extract_strided_slice %32 {offsets = [0, 256], sizes = [16, 128], strides = [1, 1]} : vector<16x384xf32> to vector<16x128xf32>
    %53 = math.tanh %48 : vector<16x128xf32>
    %54 = arith.mulf %52, %53 : vector<16x128xf32>
    %55 = vector.broadcast %6 : i32 to vector<16x1xi32>
    %56 = arith.cmpi slt, %55, %3 : vector<16x1xi32>
    %57 = vector.broadcast %7 : i32 to vector<16x1xi32>
    %58 = arith.cmpi slt, %57, %3 : vector<16x1xi32>
    %c0_17 = arith.constant 0 : index
    %c0_18 = arith.constant 0 : index
    %59 = vector.load %arg8[%c0_17, %c0_18] : memref<16x256xf32, #tpu.memory_space<vmem>>, vector<16x128xf32>
    %60 = vector.shape_cast %56 : vector<16x1xi1> to vector<16x1xi1>
    %61 = vector.broadcast %60 : vector<16x1xi1> to vector<16x128xi1>
    %62 = arith.select %61, %42, %59 : vector<16x128xi1>, vector<16x128xf32>
    %c0_19 = arith.constant 0 : index
    %c0_20 = arith.constant 0 : index
    %63 = vector.load %arg8[%c0_19, %c0_20] : memref<16x256xf32, #tpu.memory_space<vmem>>, vector<16x128xf32>
    tpu.vector_store %arg8[%c0_19, %c0_20], %62 {strides = array<i32>} : memref<16x256xf32, #tpu.memory_space<vmem>>, vector<16x128xf32>,
    %c0_21 = arith.constant 0 : index
    %c0_22 = arith.constant 0 : index
    %64 = vector.load %arg7[%c0_21, %c0_22] : memref<16x256xf32, #tpu.memory_space<vmem>>, vector<16x128xf32>
    %65 = vector.shape_cast %56 : vector<16x1xi1> to vector<16x1xi1>
    %66 = vector.broadcast %65 : vector<16x1xi1> to vector<16x128xi1>
    %67 = arith.select %66, %51, %64 : vector<16x128xi1>, vector<16x128xf32>
    %c0_23 = arith.constant 0 : index
    %c0_24 = arith.constant 0 : index
    %68 = vector.load %arg7[%c0_23, %c0_24] : memref<16x256xf32, #tpu.memory_space<vmem>>, vector<16x128xf32>
    tpu.vector_store %arg7[%c0_23, %c0_24], %67 {strides = array<i32>} : memref<16x256xf32, #tpu.memory_space<vmem>>, vector<16x128xf32>,
    %c0_25 = arith.constant 0 : index
    %c128_26 = arith.constant 128 : index
    %69 = vector.load %arg8[%c0_25, %c128_26] : memref<16x256xf32, #tpu.memory_space<vmem>>, vector<16x128xf32>
    %70 = vector.shape_cast %58 : vector<16x1xi1> to vector<16x1xi1>
    %71 = vector.broadcast %70 : vector<16x1xi1> to vector<16x128xi1>
    %72 = arith.select %71, %48, %69 : vector<16x128xi1>, vector<16x128xf32>
    %c0_27 = arith.constant 0 : index
    %c128_28 = arith.constant 128 : index
    %73 = vector.load %arg8[%c0_27, %c128_28] : memref<16x256xf32, #tpu.memory_space<vmem>>, vector<16x128xf32>
    tpu.vector_store %arg8[%c0_27, %c128_28], %72 {strides = array<i32>} : memref<16x256xf32, #tpu.memory_space<vmem>>, vector<16x128xf32>,
    %c0_29 = arith.constant 0 : index
    %c128_30 = arith.constant 128 : index
    %74 = vector.load %arg7[%c0_29, %c128_30] : memref<16x256xf32, #tpu.memory_space<vmem>>, vector<16x128xf32>
    %75 = vector.shape_cast %58 : vector<16x1xi1> to vector<16x1xi1>
    %76 = vector.broadcast %75 : vector<16x1xi1> to vector<16x128xi1>
    %77 = arith.select %76, %54, %74 : vector<16x128xi1>, vector<16x128xf32>
    %c0_31 = arith.constant 0 : index
    %c128_32 = arith.constant 128 : index
    %78 = vector.load %arg7[%c0_31, %c128_32] : memref<16x256xf32, #tpu.memory_space<vmem>>, vector<16x128xf32>
    tpu.vector_store %arg7[%c0_31, %c128_32], %77 {strides = array<i32>} : memref<16x256xf32, #tpu.memory_space<vmem>>, vector<16x128xf32>,
    %cst_33 = arith.constant 0.000000e+00 : f32
    %79 = vector.shape_cast %56 : vector<16x1xi1> to vector<16x1xi1>
    %80 = vector.broadcast %79 : vector<16x1xi1> to vector<16x128xi1>
    %81 = vector.broadcast %cst_33 : f32 to vector<16x128xf32>
    %82 = arith.select %80, %51, %81 : vector<16x128xi1>, vector<16x128xf32>
    %83 = arith.truncf %82 : vector<16x128xf32> to vector<16x128xbf16>
    %c0_34 = arith.constant 0 : index
    %c0_35 = arith.constant 0 : index
    %c0_36 = arith.constant 0 : index
    %84 = vector.load %arg5[%c0_34, %c0_35, %c0_36] : memref<4x16x128xbf16, #tpu.memory_space<vmem>>, vector<1x16x128xbf16>
    %85 = vector.shape_cast %84 : vector<1x16x128xbf16> to vector<16x128xbf16>
    %86 = vector.shape_cast %83 : vector<16x128xbf16> to vector<1x16x128xbf16>
    tpu.vector_store %arg5[%c0_34, %c0_35, %c0_36], %86 {strides = array<i32>} : memref<4x16x128xbf16, #tpu.memory_space<vmem>>, vector<1x16x128xbf16>,
    %cst_37 = arith.constant 0.000000e+00 : f32
    %87 = vector.shape_cast %58 : vector<16x1xi1> to vector<16x1xi1>
    %88 = vector.broadcast %87 : vector<16x1xi1> to vector<16x128xi1>
    %89 = vector.broadcast %cst_37 : f32 to vector<16x128xf32>
    %90 = arith.select %88, %54, %89 : vector<16x128xi1>, vector<16x128xf32>
    %91 = arith.truncf %90 : vector<16x128xf32> to vector<16x128xbf16>
    %c3_38 = arith.constant 3 : index
    %c0_39 = arith.constant 0 : index
    %c0_40 = arith.constant 0 : index
    %92 = vector.load %arg6[%c3_38, %c0_39, %c0_40] : memref<4x16x128xbf16, #tpu.memory_space<vmem>>, vector<1x16x128xbf16>
    %93 = vector.shape_cast %92 : vector<1x16x128xbf16> to vector<16x128xbf16>
    %94 = vector.shape_cast %91 : vector<16x128xbf16> to vector<1x16x128xbf16>
    tpu.vector_store %arg6[%c3_38, %c0_39, %c0_40], %94 {strides = array<i32>} : memref<4x16x128xbf16, #tpu.memory_space<vmem>>, vector<1x16x128xbf16>,
    %c4_i32_41 = arith.constant 4 : i32
    %95 = arith.muli %arg0, %c4_i32_41 : i32
    %c1_i32 = arith.constant 1 : i32
    %96 = arith.addi %95, %c1_i32 : i32
    %c7_i32_42 = arith.constant 7 : i32
    %97 = arith.subi %c7_i32_42, %96 : i32
    %c0_43 = arith.constant 0 : index
    %c0_44 = arith.constant 0 : index
    %98 = vector.load %arg7[%c0_43, %c0_44] : memref<16x256xf32, #tpu.memory_space<vmem>>, vector<16x256xf32>
    %99 = arith.truncf %98 : vector<16x256xf32> to vector<16x256xbf16>
    %cst_45 = arith.constant dense<0.000000e+00> : vector<16x1024xf32>
    %100 = tpu.matmul %99, %4, %cst_45 {dimension_numbers = #tpu.dot_dimension_numbers<[1], [0], [0], [1], [0, 0, 1, 1], [], []>} : vector<16x256xbf16>, vector<256x1024xbf16>, vector<16x1024xf32> -> vector<16x1024xf32>
    %c1 = arith.constant 1 : index
    %c0_46 = arith.constant 0 : index
    %c0_47 = arith.constant 0 : index
    %101 = vector.load %arg2[%c1, %c0_46, %c0_47] : memref<4x16x512xbf16, #tpu.memory_space<vmem>>, vector<1x16x512xbf16>
    %102 = vector.shape_cast %101 : vector<1x16x512xbf16> to vector<16x512xbf16>
    %103 = arith.extf %102 : vector<16x512xbf16> to vector<16x512xf32>
    %104 = vector.extract_strided_slice %100 {offsets = [0, 0], sizes = [16, 512], strides = [1, 1]} : vector<16x1024xf32> to vector<16x512xf32>
    %105 = arith.addf %103, %104 : vector<16x512xf32>
    %c2 = arith.constant 2 : index
    %c0_48 = arith.constant 0 : index
    %c0_49 = arith.constant 0 : index
    %106 = vector.load %arg3[%c2, %c0_48, %c0_49] : memref<4x16x512xbf16, #tpu.memory_space<vmem>>, vector<1x16x512xbf16>
    %107 = vector.shape_cast %106 : vector<1x16x512xbf16> to vector<16x512xbf16>
    %108 = arith.extf %107 : vector<16x512xbf16> to vector<16x512xf32>
    %109 = vector.extract_strided_slice %100 {offsets = [0, 512], sizes = [16, 512], strides = [1, 1]} : vector<16x1024xf32> to vector<16x512xf32>
    %110 = arith.addf %108, %109 : vector<16x512xf32>
    %111 = vector.extract_strided_slice %105 {offsets = [0, 0], sizes = [16, 384], strides = [1, 1]} : vector<16x512xf32> to vector<16x384xf32>
    %112 = arith.negf %111 : vector<16x384xf32>
    %113 = math.exp %112 : vector<16x384xf32>
    %cst_50 = arith.constant 1.000000e+00 : f32
    %114 = vector.broadcast %cst_50 : f32 to vector<16x384xf32>
    %115 = arith.addf %114, %113 : vector<16x384xf32>
    %116 = arith.divf %114, %115 : vector<16x384xf32>
    %117 = vector.extract_strided_slice %110 {offsets = [0, 0], sizes = [16, 384], strides = [1, 1]} : vector<16x512xf32> to vector<16x384xf32>
    %118 = arith.negf %117 : vector<16x384xf32>
    %119 = math.exp %118 : vector<16x384xf32>
    %cst_51 = arith.constant 1.000000e+00 : f32
    %120 = vector.broadcast %cst_51 : f32 to vector<16x384xf32>
    %121 = arith.addf %120, %119 : vector<16x384xf32>
    %122 = arith.divf %120, %121 : vector<16x384xf32>
    %123 = vector.extract_strided_slice %105 {offsets = [0, 384], sizes = [16, 128], strides = [1, 1]} : vector<16x512xf32> to vector<16x128xf32>
    %124 = math.tanh %123 : vector<16x128xf32>
    %125 = vector.extract_strided_slice %110 {offsets = [0, 384], sizes = [16, 128], strides = [1, 1]} : vector<16x512xf32> to vector<16x128xf32>
    %126 = math.tanh %125 : vector<16x128xf32>
    %127 = vector.extract_strided_slice %116 {offsets = [0, 128], sizes = [16, 128], strides = [1, 1]} : vector<16x384xf32> to vector<16x128xf32>
    %c0_52 = arith.constant 0 : index
    %c0_53 = arith.constant 0 : index
    %128 = vector.load %arg8[%c0_52, %c0_53] : memref<16x256xf32, #tpu.memory_space<vmem>>, vector<16x128xf32>
    %129 = arith.mulf %127, %128 : vector<16x128xf32>
    %130 = vector.extract_strided_slice %116 {offsets = [0, 0], sizes = [16, 128], strides = [1, 1]} : vector<16x384xf32> to vector<16x128xf32>
    %131 = arith.mulf %130, %124 : vector<16x128xf32>
    %132 = arith.addf %129, %131 : vector<16x128xf32>
    %133 = vector.extract_strided_slice %122 {offsets = [0, 128], sizes = [16, 128], strides = [1, 1]} : vector<16x384xf32> to vector<16x128xf32>
    %c0_54 = arith.constant 0 : index
    %c128_55 = arith.constant 128 : index
    %134 = vector.load %arg8[%c0_54, %c128_55] : memref<16x256xf32, #tpu.memory_space<vmem>>, vector<16x128xf32>
    %135 = arith.mulf %133, %134 : vector<16x128xf32>
    %136 = vector.extract_strided_slice %122 {offsets = [0, 0], sizes = [16, 128], strides = [1, 1]} : vector<16x384xf32> to vector<16x128xf32>
    %137 = arith.mulf %136, %126 : vector<16x128xf32>
    %138 = arith.addf %135, %137 : vector<16x128xf32>
    %139 = vector.extract_strided_slice %116 {offsets = [0, 256], sizes = [16, 128], strides = [1, 1]} : vector<16x384xf32> to vector<16x128xf32>
    %140 = math.tanh %132 : vector<16x128xf32>
    %141 = arith.mulf %139, %140 : vector<16x128xf32>
    %142 = vector.extract_strided_slice %122 {offsets = [0, 256], sizes = [16, 128], strides = [1, 1]} : vector<16x384xf32> to vector<16x128xf32>
    %143 = math.tanh %138 : vector<16x128xf32>
    %144 = arith.mulf %142, %143 : vector<16x128xf32>
    %145 = vector.broadcast %96 : i32 to vector<16x1xi32>
    %146 = arith.cmpi slt, %145, %3 : vector<16x1xi32>
    %147 = vector.broadcast %97 : i32 to vector<16x1xi32>
    %148 = arith.cmpi slt, %147, %3 : vector<16x1xi32>
    %c0_56 = arith.constant 0 : index
    %c0_57 = arith.constant 0 : index
    %149 = vector.load %arg8[%c0_56, %c0_57] : memref<16x256xf32, #tpu.memory_space<vmem>>, vector<16x128xf32>
    %150 = vector.shape_cast %146 : vector<16x1xi1> to vector<16x1xi1>
    %151 = vector.broadcast %150 : vector<16x1xi1> to vector<16x128xi1>
    %152 = arith.select %151, %132, %149 : vector<16x128xi1>, vector<16x128xf32>
    %c0_58 = arith.constant 0 : index
    %c0_59 = arith.constant 0 : index
    %153 = vector.load %arg8[%c0_58, %c0_59] : memref<16x256xf32, #tpu.memory_space<vmem>>, vector<16x128xf32>
    tpu.vector_store %arg8[%c0_58, %c0_59], %152 {strides = array<i32>} : memref<16x256xf32, #tpu.memory_space<vmem>>, vector<16x128xf32>,
    %c0_60 = arith.constant 0 : index
    %c0_61 = arith.constant 0 : index
    %154 = vector.load %arg7[%c0_60, %c0_61] : memref<16x256xf32, #tpu.memory_space<vmem>>, vector<16x128xf32>
    %155 = vector.shape_cast %146 : vector<16x1xi1> to vector<16x1xi1>
    %156 = vector.broadcast %155 : vector<16x1xi1> to vector<16x128xi1>
    %157 = arith.select %156, %141, %154 : vector<16x128xi1>, vector<16x128xf32>
    %c0_62 = arith.constant 0 : index
    %c0_63 = arith.constant 0 : index
    %158 = vector.load %arg7[%c0_62, %c0_63] : memref<16x256xf32, #tpu.memory_space<vmem>>, vector<16x128xf32>
    tpu.vector_store %arg7[%c0_62, %c0_63], %157 {strides = array<i32>} : memref<16x256xf32, #tpu.memory_space<vmem>>, vector<16x128xf32>,
    %c0_64 = arith.constant 0 : index
    %c128_65 = arith.constant 128 : index
    %159 = vector.load %arg8[%c0_64, %c128_65] : memref<16x256xf32, #tpu.memory_space<vmem>>, vector<16x128xf32>
    %160 = vector.shape_cast %148 : vector<16x1xi1> to vector<16x1xi1>
    %161 = vector.broadcast %160 : vector<16x1xi1> to vector<16x128xi1>
    %162 = arith.select %161, %138, %159 : vector<16x128xi1>, vector<16x128xf32>
    %c0_66 = arith.constant 0 : index
    %c128_67 = arith.constant 128 : index
    %163 = vector.load %arg8[%c0_66, %c128_67] : memref<16x256xf32, #tpu.memory_space<vmem>>, vector<16x128xf32>
    tpu.vector_store %arg8[%c0_66, %c128_67], %162 {strides = array<i32>} : memref<16x256xf32, #tpu.memory_space<vmem>>, vector<16x128xf32>,
    %c0_68 = arith.constant 0 : index
    %c128_69 = arith.constant 128 : index
    %164 = vector.load %arg7[%c0_68, %c128_69] : memref<16x256xf32, #tpu.memory_space<vmem>>, vector<16x128xf32>
    %165 = vector.shape_cast %148 : vector<16x1xi1> to vector<16x1xi1>
    %166 = vector.broadcast %165 : vector<16x1xi1> to vector<16x128xi1>
    %167 = arith.select %166, %144, %164 : vector<16x128xi1>, vector<16x128xf32>
    %c0_70 = arith.constant 0 : index
    %c128_71 = arith.constant 128 : index
    %168 = vector.load %arg7[%c0_70, %c128_71] : memref<16x256xf32, #tpu.memory_space<vmem>>, vector<16x128xf32>
    tpu.vector_store %arg7[%c0_70, %c128_71], %167 {strides = array<i32>} : memref<16x256xf32, #tpu.memory_space<vmem>>, vector<16x128xf32>,
    %cst_72 = arith.constant 0.000000e+00 : f32
    %169 = vector.shape_cast %146 : vector<16x1xi1> to vector<16x1xi1>
    %170 = vector.broadcast %169 : vector<16x1xi1> to vector<16x128xi1>
    %171 = vector.broadcast %cst_72 : f32 to vector<16x128xf32>
    %172 = arith.select %170, %141, %171 : vector<16x128xi1>, vector<16x128xf32>
    %173 = arith.truncf %172 : vector<16x128xf32> to vector<16x128xbf16>
    %c1_73 = arith.constant 1 : index
    %c0_74 = arith.constant 0 : index
    %c0_75 = arith.constant 0 : index
    %174 = vector.load %arg5[%c1_73, %c0_74, %c0_75] : memref<4x16x128xbf16, #tpu.memory_space<vmem>>, vector<1x16x128xbf16>
    %175 = vector.shape_cast %174 : vector<1x16x128xbf16> to vector<16x128xbf16>
    %176 = vector.shape_cast %173 : vector<16x128xbf16> to vector<1x16x128xbf16>
    tpu.vector_store %arg5[%c1_73, %c0_74, %c0_75], %176 {strides = array<i32>} : memref<4x16x128xbf16, #tpu.memory_space<vmem>>, vector<1x16x128xbf16>,
    %cst_76 = arith.constant 0.000000e+00 : f32
    %177 = vector.shape_cast %148 : vector<16x1xi1> to vector<16x1xi1>
    %178 = vector.broadcast %177 : vector<16x1xi1> to vector<16x128xi1>
    %179 = vector.broadcast %cst_76 : f32 to vector<16x128xf32>
    %180 = arith.select %178, %144, %179 : vector<16x128xi1>, vector<16x128xf32>
    %181 = arith.truncf %180 : vector<16x128xf32> to vector<16x128xbf16>
    %c2_77 = arith.constant 2 : index
    %c0_78 = arith.constant 0 : index
    %c0_79 = arith.constant 0 : index
    %182 = vector.load %arg6[%c2_77, %c0_78, %c0_79] : memref<4x16x128xbf16, #tpu.memory_space<vmem>>, vector<1x16x128xbf16>
    %183 = vector.shape_cast %182 : vector<1x16x128xbf16> to vector<16x128xbf16>
    %184 = vector.shape_cast %181 : vector<16x128xbf16> to vector<1x16x128xbf16>
    tpu.vector_store %arg6[%c2_77, %c0_78, %c0_79], %184 {strides = array<i32>} : memref<4x16x128xbf16, #tpu.memory_space<vmem>>, vector<1x16x128xbf16>,
    %c4_i32_80 = arith.constant 4 : i32
    %185 = arith.muli %arg0, %c4_i32_80 : i32
    %c2_i32 = arith.constant 2 : i32
    %186 = arith.addi %185, %c2_i32 : i32
    %c7_i32_81 = arith.constant 7 : i32
    %187 = arith.subi %c7_i32_81, %186 : i32
    %c0_82 = arith.constant 0 : index
    %c0_83 = arith.constant 0 : index
    %188 = vector.load %arg7[%c0_82, %c0_83] : memref<16x256xf32, #tpu.memory_space<vmem>>, vector<16x256xf32>
    %189 = arith.truncf %188 : vector<16x256xf32> to vector<16x256xbf16>
    %cst_84 = arith.constant dense<0.000000e+00> : vector<16x1024xf32>
    %190 = tpu.matmul %189, %4, %cst_84 {dimension_numbers = #tpu.dot_dimension_numbers<[1], [0], [0], [1], [0, 0, 1, 1], [], []>} : vector<16x256xbf16>, vector<256x1024xbf16>, vector<16x1024xf32> -> vector<16x1024xf32>
    %c2_85 = arith.constant 2 : index
    %c0_86 = arith.constant 0 : index
    %c0_87 = arith.constant 0 : index
    %191 = vector.load %arg2[%c2_85, %c0_86, %c0_87] : memref<4x16x512xbf16, #tpu.memory_space<vmem>>, vector<1x16x512xbf16>
    %192 = vector.shape_cast %191 : vector<1x16x512xbf16> to vector<16x512xbf16>
    %193 = arith.extf %192 : vector<16x512xbf16> to vector<16x512xf32>
    %194 = vector.extract_strided_slice %190 {offsets = [0, 0], sizes = [16, 512], strides = [1, 1]} : vector<16x1024xf32> to vector<16x512xf32>
    %195 = arith.addf %193, %194 : vector<16x512xf32>
    %c1_88 = arith.constant 1 : index
    %c0_89 = arith.constant 0 : index
    %c0_90 = arith.constant 0 : index
    %196 = vector.load %arg3[%c1_88, %c0_89, %c0_90] : memref<4x16x512xbf16, #tpu.memory_space<vmem>>, vector<1x16x512xbf16>
    %197 = vector.shape_cast %196 : vector<1x16x512xbf16> to vector<16x512xbf16>
    %198 = arith.extf %197 : vector<16x512xbf16> to vector<16x512xf32>
    %199 = vector.extract_strided_slice %190 {offsets = [0, 512], sizes = [16, 512], strides = [1, 1]} : vector<16x1024xf32> to vector<16x512xf32>
    %200 = arith.addf %198, %199 : vector<16x512xf32>
    %201 = vector.extract_strided_slice %195 {offsets = [0, 0], sizes = [16, 384], strides = [1, 1]} : vector<16x512xf32> to vector<16x384xf32>
    %202 = arith.negf %201 : vector<16x384xf32>
    %203 = math.exp %202 : vector<16x384xf32>
    %cst_91 = arith.constant 1.000000e+00 : f32
    %204 = vector.broadcast %cst_91 : f32 to vector<16x384xf32>
    %205 = arith.addf %204, %203 : vector<16x384xf32>
    %206 = arith.divf %204, %205 : vector<16x384xf32>
    %207 = vector.extract_strided_slice %200 {offsets = [0, 0], sizes = [16, 384], strides = [1, 1]} : vector<16x512xf32> to vector<16x384xf32>
    %208 = arith.negf %207 : vector<16x384xf32>
    %209 = math.exp %208 : vector<16x384xf32>
    %cst_92 = arith.constant 1.000000e+00 : f32
    %210 = vector.broadcast %cst_92 : f32 to vector<16x384xf32>
    %211 = arith.addf %210, %209 : vector<16x384xf32>
    %212 = arith.divf %210, %211 : vector<16x384xf32>
    %213 = vector.extract_strided_slice %195 {offsets = [0, 384], sizes = [16, 128], strides = [1, 1]} : vector<16x512xf32> to vector<16x128xf32>
    %214 = math.tanh %213 : vector<16x128xf32>
    %215 = vector.extract_strided_slice %200 {offsets = [0, 384], sizes = [16, 128], strides = [1, 1]} : vector<16x512xf32> to vector<16x128xf32>
    %216 = math.tanh %215 : vector<16x128xf32>
    %217 = vector.extract_strided_slice %206 {offsets = [0, 128], sizes = [16, 128], strides = [1, 1]} : vector<16x384xf32> to vector<16x128xf32>
    %c0_93 = arith.constant 0 : index
    %c0_94 = arith.constant 0 : index
    %218 = vector.load %arg8[%c0_93, %c0_94] : memref<16x256xf32, #tpu.memory_space<vmem>>, vector<16x128xf32>
    %219 = arith.mulf %217, %218 : vector<16x128xf32>
    %220 = vector.extract_strided_slice %206 {offsets = [0, 0], sizes = [16, 128], strides = [1, 1]} : vector<16x384xf32> to vector<16x128xf32>
    %221 = arith.mulf %220, %214 : vector<16x128xf32>
    %222 = arith.addf %219, %221 : vector<16x128xf32>
    %223 = vector.extract_strided_slice %212 {offsets = [0, 128], sizes = [16, 128], strides = [1, 1]} : vector<16x384xf32> to vector<16x128xf32>
    %c0_95 = arith.constant 0 : index
    %c128_96 = arith.constant 128 : index
    %224 = vector.load %arg8[%c0_95, %c128_96] : memref<16x256xf32, #tpu.memory_space<vmem>>, vector<16x128xf32>
    %225 = arith.mulf %223, %224 : vector<16x128xf32>
    %226 = vector.extract_strided_slice %212 {offsets = [0, 0], sizes = [16, 128], strides = [1, 1]} : vector<16x384xf32> to vector<16x128xf32>
    %227 = arith.mulf %226, %216 : vector<16x128xf32>
    %228 = arith.addf %225, %227 : vector<16x128xf32>
    %229 = vector.extract_strided_slice %206 {offsets = [0, 256], sizes = [16, 128], strides = [1, 1]} : vector<16x384xf32> to vector<16x128xf32>
    %230 = math.tanh %222 : vector<16x128xf32>
    %231 = arith.mulf %229, %230 : vector<16x128xf32>
    %232 = vector.extract_strided_slice %212 {offsets = [0, 256], sizes = [16, 128], strides = [1, 1]} : vector<16x384xf32> to vector<16x128xf32>
    %233 = math.tanh %228 : vector<16x128xf32>
    %234 = arith.mulf %232, %233 : vector<16x128xf32>
    %235 = vector.broadcast %186 : i32 to vector<16x1xi32>
    %236 = arith.cmpi slt, %235, %3 : vector<16x1xi32>
    %237 = vector.broadcast %187 : i32 to vector<16x1xi32>
    %238 = arith.cmpi slt, %237, %3 : vector<16x1xi32>
    %c0_97 = arith.constant 0 : index
    %c0_98 = arith.constant 0 : index
    %239 = vector.load %arg8[%c0_97, %c0_98] : memref<16x256xf32, #tpu.memory_space<vmem>>, vector<16x128xf32>
    %240 = vector.shape_cast %236 : vector<16x1xi1> to vector<16x1xi1>
    %241 = vector.broadcast %240 : vector<16x1xi1> to vector<16x128xi1>
    %242 = arith.select %241, %222, %239 : vector<16x128xi1>, vector<16x128xf32>
    %c0_99 = arith.constant 0 : index
    %c0_100 = arith.constant 0 : index
    %243 = vector.load %arg8[%c0_99, %c0_100] : memref<16x256xf32, #tpu.memory_space<vmem>>, vector<16x128xf32>
    tpu.vector_store %arg8[%c0_99, %c0_100], %242 {strides = array<i32>} : memref<16x256xf32, #tpu.memory_space<vmem>>, vector<16x128xf32>,
    %c0_101 = arith.constant 0 : index
    %c0_102 = arith.constant 0 : index
    %244 = vector.load %arg7[%c0_101, %c0_102] : memref<16x256xf32, #tpu.memory_space<vmem>>, vector<16x128xf32>
    %245 = vector.shape_cast %236 : vector<16x1xi1> to vector<16x1xi1>
    %246 = vector.broadcast %245 : vector<16x1xi1> to vector<16x128xi1>
    %247 = arith.select %246, %231, %244 : vector<16x128xi1>, vector<16x128xf32>
    %c0_103 = arith.constant 0 : index
    %c0_104 = arith.constant 0 : index
    %248 = vector.load %arg7[%c0_103, %c0_104] : memref<16x256xf32, #tpu.memory_space<vmem>>, vector<16x128xf32>
    tpu.vector_store %arg7[%c0_103, %c0_104], %247 {strides = array<i32>} : memref<16x256xf32, #tpu.memory_space<vmem>>, vector<16x128xf32>,
    %c0_105 = arith.constant 0 : index
    %c128_106 = arith.constant 128 : index
    %249 = vector.load %arg8[%c0_105, %c128_106] : memref<16x256xf32, #tpu.memory_space<vmem>>, vector<16x128xf32>
    %250 = vector.shape_cast %238 : vector<16x1xi1> to vector<16x1xi1>
    %251 = vector.broadcast %250 : vector<16x1xi1> to vector<16x128xi1>
    %252 = arith.select %251, %228, %249 : vector<16x128xi1>, vector<16x128xf32>
    %c0_107 = arith.constant 0 : index
    %c128_108 = arith.constant 128 : index
    %253 = vector.load %arg8[%c0_107, %c128_108] : memref<16x256xf32, #tpu.memory_space<vmem>>, vector<16x128xf32>
    tpu.vector_store %arg8[%c0_107, %c128_108], %252 {strides = array<i32>} : memref<16x256xf32, #tpu.memory_space<vmem>>, vector<16x128xf32>,
    %c0_109 = arith.constant 0 : index
    %c128_110 = arith.constant 128 : index
    %254 = vector.load %arg7[%c0_109, %c128_110] : memref<16x256xf32, #tpu.memory_space<vmem>>, vector<16x128xf32>
    %255 = vector.shape_cast %238 : vector<16x1xi1> to vector<16x1xi1>
    %256 = vector.broadcast %255 : vector<16x1xi1> to vector<16x128xi1>
    %257 = arith.select %256, %234, %254 : vector<16x128xi1>, vector<16x128xf32>
    %c0_111 = arith.constant 0 : index
    %c128_112 = arith.constant 128 : index
    %258 = vector.load %arg7[%c0_111, %c128_112] : memref<16x256xf32, #tpu.memory_space<vmem>>, vector<16x128xf32>
    tpu.vector_store %arg7[%c0_111, %c128_112], %257 {strides = array<i32>} : memref<16x256xf32, #tpu.memory_space<vmem>>, vector<16x128xf32>,
    %cst_113 = arith.constant 0.000000e+00 : f32
    %259 = vector.shape_cast %236 : vector<16x1xi1> to vector<16x1xi1>
    %260 = vector.broadcast %259 : vector<16x1xi1> to vector<16x128xi1>
    %261 = vector.broadcast %cst_113 : f32 to vector<16x128xf32>
    %262 = arith.select %260, %231, %261 : vector<16x128xi1>, vector<16x128xf32>
    %263 = arith.truncf %262 : vector<16x128xf32> to vector<16x128xbf16>
    %c2_114 = arith.constant 2 : index
    %c0_115 = arith.constant 0 : index
    %c0_116 = arith.constant 0 : index
    %264 = vector.load %arg5[%c2_114, %c0_115, %c0_116] : memref<4x16x128xbf16, #tpu.memory_space<vmem>>, vector<1x16x128xbf16>
    %265 = vector.shape_cast %264 : vector<1x16x128xbf16> to vector<16x128xbf16>
    %266 = vector.shape_cast %263 : vector<16x128xbf16> to vector<1x16x128xbf16>
    tpu.vector_store %arg5[%c2_114, %c0_115, %c0_116], %266 {strides = array<i32>} : memref<4x16x128xbf16, #tpu.memory_space<vmem>>, vector<1x16x128xbf16>,
    %cst_117 = arith.constant 0.000000e+00 : f32
    %267 = vector.shape_cast %238 : vector<16x1xi1> to vector<16x1xi1>
    %268 = vector.broadcast %267 : vector<16x1xi1> to vector<16x128xi1>
    %269 = vector.broadcast %cst_117 : f32 to vector<16x128xf32>
    %270 = arith.select %268, %234, %269 : vector<16x128xi1>, vector<16x128xf32>
    %271 = arith.truncf %270 : vector<16x128xf32> to vector<16x128xbf16>
    %c1_118 = arith.constant 1 : index
    %c0_119 = arith.constant 0 : index
    %c0_120 = arith.constant 0 : index
    %272 = vector.load %arg6[%c1_118, %c0_119, %c0_120] : memref<4x16x128xbf16, #tpu.memory_space<vmem>>, vector<1x16x128xbf16>
    %273 = vector.shape_cast %272 : vector<1x16x128xbf16> to vector<16x128xbf16>
    %274 = vector.shape_cast %271 : vector<16x128xbf16> to vector<1x16x128xbf16>
    tpu.vector_store %arg6[%c1_118, %c0_119, %c0_120], %274 {strides = array<i32>} : memref<4x16x128xbf16, #tpu.memory_space<vmem>>, vector<1x16x128xbf16>,
    %c4_i32_121 = arith.constant 4 : i32
    %275 = arith.muli %arg0, %c4_i32_121 : i32
    %c3_i32 = arith.constant 3 : i32
    %276 = arith.addi %275, %c3_i32 : i32
    %c7_i32_122 = arith.constant 7 : i32
    %277 = arith.subi %c7_i32_122, %276 : i32
    %c0_123 = arith.constant 0 : index
    %c0_124 = arith.constant 0 : index
    %278 = vector.load %arg7[%c0_123, %c0_124] : memref<16x256xf32, #tpu.memory_space<vmem>>, vector<16x256xf32>
    %279 = arith.truncf %278 : vector<16x256xf32> to vector<16x256xbf16>
    %cst_125 = arith.constant dense<0.000000e+00> : vector<16x1024xf32>
    %280 = tpu.matmul %279, %4, %cst_125 {dimension_numbers = #tpu.dot_dimension_numbers<[1], [0], [0], [1], [0, 0, 1, 1], [], []>} : vector<16x256xbf16>, vector<256x1024xbf16>, vector<16x1024xf32> -> vector<16x1024xf32>
    %c3_126 = arith.constant 3 : index
    %c0_127 = arith.constant 0 : index
    %c0_128 = arith.constant 0 : index
    %281 = vector.load %arg2[%c3_126, %c0_127, %c0_128] : memref<4x16x512xbf16, #tpu.memory_space<vmem>>, vector<1x16x512xbf16>
    %282 = vector.shape_cast %281 : vector<1x16x512xbf16> to vector<16x512xbf16>
    %283 = arith.extf %282 : vector<16x512xbf16> to vector<16x512xf32>
    %284 = vector.extract_strided_slice %280 {offsets = [0, 0], sizes = [16, 512], strides = [1, 1]} : vector<16x1024xf32> to vector<16x512xf32>
    %285 = arith.addf %283, %284 : vector<16x512xf32>
    %c0_129 = arith.constant 0 : index
    %c0_130 = arith.constant 0 : index
    %c0_131 = arith.constant 0 : index
    %286 = vector.load %arg3[%c0_129, %c0_130, %c0_131] : memref<4x16x512xbf16, #tpu.memory_space<vmem>>, vector<1x16x512xbf16>
    %287 = vector.shape_cast %286 : vector<1x16x512xbf16> to vector<16x512xbf16>
    %288 = arith.extf %287 : vector<16x512xbf16> to vector<16x512xf32>
    %289 = vector.extract_strided_slice %280 {offsets = [0, 512], sizes = [16, 512], strides = [1, 1]} : vector<16x1024xf32> to vector<16x512xf32>
    %290 = arith.addf %288, %289 : vector<16x512xf32>
    %291 = vector.extract_strided_slice %285 {offsets = [0, 0], sizes = [16, 384], strides = [1, 1]} : vector<16x512xf32> to vector<16x384xf32>
    %292 = arith.negf %291 : vector<16x384xf32>
    %293 = math.exp %292 : vector<16x384xf32>
    %cst_132 = arith.constant 1.000000e+00 : f32
    %294 = vector.broadcast %cst_132 : f32 to vector<16x384xf32>
    %295 = arith.addf %294, %293 : vector<16x384xf32>
    %296 = arith.divf %294, %295 : vector<16x384xf32>
    %297 = vector.extract_strided_slice %290 {offsets = [0, 0], sizes = [16, 384], strides = [1, 1]} : vector<16x512xf32> to vector<16x384xf32>
    %298 = arith.negf %297 : vector<16x384xf32>
    %299 = math.exp %298 : vector<16x384xf32>
    %cst_133 = arith.constant 1.000000e+00 : f32
    %300 = vector.broadcast %cst_133 : f32 to vector<16x384xf32>
    %301 = arith.addf %300, %299 : vector<16x384xf32>
    %302 = arith.divf %300, %301 : vector<16x384xf32>
    %303 = vector.extract_strided_slice %285 {offsets = [0, 384], sizes = [16, 128], strides = [1, 1]} : vector<16x512xf32> to vector<16x128xf32>
    %304 = math.tanh %303 : vector<16x128xf32>
    %305 = vector.extract_strided_slice %290 {offsets = [0, 384], sizes = [16, 128], strides = [1, 1]} : vector<16x512xf32> to vector<16x128xf32>
    %306 = math.tanh %305 : vector<16x128xf32>
    %307 = vector.extract_strided_slice %296 {offsets = [0, 128], sizes = [16, 128], strides = [1, 1]} : vector<16x384xf32> to vector<16x128xf32>
    %c0_134 = arith.constant 0 : index
    %c0_135 = arith.constant 0 : index
    %308 = vector.load %arg8[%c0_134, %c0_135] : memref<16x256xf32, #tpu.memory_space<vmem>>, vector<16x128xf32>
    %309 = arith.mulf %307, %308 : vector<16x128xf32>
    %310 = vector.extract_strided_slice %296 {offsets = [0, 0], sizes = [16, 128], strides = [1, 1]} : vector<16x384xf32> to vector<16x128xf32>
    %311 = arith.mulf %310, %304 : vector<16x128xf32>
    %312 = arith.addf %309, %311 : vector<16x128xf32>
    %313 = vector.extract_strided_slice %302 {offsets = [0, 128], sizes = [16, 128], strides = [1, 1]} : vector<16x384xf32> to vector<16x128xf32>
    %c0_136 = arith.constant 0 : index
    %c128_137 = arith.constant 128 : index
    %314 = vector.load %arg8[%c0_136, %c128_137] : memref<16x256xf32, #tpu.memory_space<vmem>>, vector<16x128xf32>
    %315 = arith.mulf %313, %314 : vector<16x128xf32>
    %316 = vector.extract_strided_slice %302 {offsets = [0, 0], sizes = [16, 128], strides = [1, 1]} : vector<16x384xf32> to vector<16x128xf32>
    %317 = arith.mulf %316, %306 : vector<16x128xf32>
    %318 = arith.addf %315, %317 : vector<16x128xf32>
    %319 = vector.extract_strided_slice %296 {offsets = [0, 256], sizes = [16, 128], strides = [1, 1]} : vector<16x384xf32> to vector<16x128xf32>
    %320 = math.tanh %312 : vector<16x128xf32>
    %321 = arith.mulf %319, %320 : vector<16x128xf32>
    %322 = vector.extract_strided_slice %302 {offsets = [0, 256], sizes = [16, 128], strides = [1, 1]} : vector<16x384xf32> to vector<16x128xf32>
    %323 = math.tanh %318 : vector<16x128xf32>
    %324 = arith.mulf %322, %323 : vector<16x128xf32>
    %325 = vector.broadcast %276 : i32 to vector<16x1xi32>
    %326 = arith.cmpi slt, %325, %3 : vector<16x1xi32>
    %327 = vector.broadcast %277 : i32 to vector<16x1xi32>
    %328 = arith.cmpi slt, %327, %3 : vector<16x1xi32>
    %c0_138 = arith.constant 0 : index
    %c0_139 = arith.constant 0 : index
    %329 = vector.load %arg8[%c0_138, %c0_139] : memref<16x256xf32, #tpu.memory_space<vmem>>, vector<16x128xf32>
    %330 = vector.shape_cast %326 : vector<16x1xi1> to vector<16x1xi1>
    %331 = vector.broadcast %330 : vector<16x1xi1> to vector<16x128xi1>
    %332 = arith.select %331, %312, %329 : vector<16x128xi1>, vector<16x128xf32>
    %c0_140 = arith.constant 0 : index
    %c0_141 = arith.constant 0 : index
    %333 = vector.load %arg8[%c0_140, %c0_141] : memref<16x256xf32, #tpu.memory_space<vmem>>, vector<16x128xf32>
    tpu.vector_store %arg8[%c0_140, %c0_141], %332 {strides = array<i32>} : memref<16x256xf32, #tpu.memory_space<vmem>>, vector<16x128xf32>,
    %c0_142 = arith.constant 0 : index
    %c0_143 = arith.constant 0 : index
    %334 = vector.load %arg7[%c0_142, %c0_143] : memref<16x256xf32, #tpu.memory_space<vmem>>, vector<16x128xf32>
    %335 = vector.shape_cast %326 : vector<16x1xi1> to vector<16x1xi1>
    %336 = vector.broadcast %335 : vector<16x1xi1> to vector<16x128xi1>
    %337 = arith.select %336, %321, %334 : vector<16x128xi1>, vector<16x128xf32>
    %c0_144 = arith.constant 0 : index
    %c0_145 = arith.constant 0 : index
    %338 = vector.load %arg7[%c0_144, %c0_145] : memref<16x256xf32, #tpu.memory_space<vmem>>, vector<16x128xf32>
    tpu.vector_store %arg7[%c0_144, %c0_145], %337 {strides = array<i32>} : memref<16x256xf32, #tpu.memory_space<vmem>>, vector<16x128xf32>,
    %c0_146 = arith.constant 0 : index
    %c128_147 = arith.constant 128 : index
    %339 = vector.load %arg8[%c0_146, %c128_147] : memref<16x256xf32, #tpu.memory_space<vmem>>, vector<16x128xf32>
    %340 = vector.shape_cast %328 : vector<16x1xi1> to vector<16x1xi1>
    %341 = vector.broadcast %340 : vector<16x1xi1> to vector<16x128xi1>
    %342 = arith.select %341, %318, %339 : vector<16x128xi1>, vector<16x128xf32>
    %c0_148 = arith.constant 0 : index
    %c128_149 = arith.constant 128 : index
    %343 = vector.load %arg8[%c0_148, %c128_149] : memref<16x256xf32, #tpu.memory_space<vmem>>, vector<16x128xf32>
    tpu.vector_store %arg8[%c0_148, %c128_149], %342 {strides = array<i32>} : memref<16x256xf32, #tpu.memory_space<vmem>>, vector<16x128xf32>,
    %c0_150 = arith.constant 0 : index
    %c128_151 = arith.constant 128 : index
    %344 = vector.load %arg7[%c0_150, %c128_151] : memref<16x256xf32, #tpu.memory_space<vmem>>, vector<16x128xf32>
    %345 = vector.shape_cast %328 : vector<16x1xi1> to vector<16x1xi1>
    %346 = vector.broadcast %345 : vector<16x1xi1> to vector<16x128xi1>
    %347 = arith.select %346, %324, %344 : vector<16x128xi1>, vector<16x128xf32>
    %c0_152 = arith.constant 0 : index
    %c128_153 = arith.constant 128 : index
    %348 = vector.load %arg7[%c0_152, %c128_153] : memref<16x256xf32, #tpu.memory_space<vmem>>, vector<16x128xf32>
    tpu.vector_store %arg7[%c0_152, %c128_153], %347 {strides = array<i32>} : memref<16x256xf32, #tpu.memory_space<vmem>>, vector<16x128xf32>,
    %cst_154 = arith.constant 0.000000e+00 : f32
    %349 = vector.shape_cast %326 : vector<16x1xi1> to vector<16x1xi1>
    %350 = vector.broadcast %349 : vector<16x1xi1> to vector<16x128xi1>
    %351 = vector.broadcast %cst_154 : f32 to vector<16x128xf32>
    %352 = arith.select %350, %321, %351 : vector<16x128xi1>, vector<16x128xf32>
    %353 = arith.truncf %352 : vector<16x128xf32> to vector<16x128xbf16>
    %c3_155 = arith.constant 3 : index
    %c0_156 = arith.constant 0 : index
    %c0_157 = arith.constant 0 : index
    %354 = vector.load %arg5[%c3_155, %c0_156, %c0_157] : memref<4x16x128xbf16, #tpu.memory_space<vmem>>, vector<1x16x128xbf16>
    %355 = vector.shape_cast %354 : vector<1x16x128xbf16> to vector<16x128xbf16>
    %356 = vector.shape_cast %353 : vector<16x128xbf16> to vector<1x16x128xbf16>
    tpu.vector_store %arg5[%c3_155, %c0_156, %c0_157], %356 {strides = array<i32>} : memref<4x16x128xbf16, #tpu.memory_space<vmem>>, vector<1x16x128xbf16>,
    %cst_158 = arith.constant 0.000000e+00 : f32
    %357 = vector.shape_cast %328 : vector<16x1xi1> to vector<16x1xi1>
    %358 = vector.broadcast %357 : vector<16x1xi1> to vector<16x128xi1>
    %359 = vector.broadcast %cst_158 : f32 to vector<16x128xf32>
    %360 = arith.select %358, %324, %359 : vector<16x128xi1>, vector<16x128xf32>
    %361 = arith.truncf %360 : vector<16x128xf32> to vector<16x128xbf16>
    %c0_159 = arith.constant 0 : index
    %c0_160 = arith.constant 0 : index
    %c0_161 = arith.constant 0 : index
    %362 = vector.load %arg6[%c0_159, %c0_160, %c0_161] : memref<4x16x128xbf16, #tpu.memory_space<vmem>>, vector<1x16x128xbf16>
    %363 = vector.shape_cast %362 : vector<1x16x128xbf16> to vector<16x128xbf16>
    %364 = vector.shape_cast %361 : vector<16x128xbf16> to vector<1x16x128xbf16>
    tpu.vector_store %arg6[%c0_159, %c0_160, %c0_161], %364 {strides = array<i32>} : memref<4x16x128xbf16, #tpu.memory_space<vmem>>, vector<1x16x128xbf16>,
    return
  }
  func.func @transform_0(%arg0: i32) -> (i32, i32) {
    %c0_i32 = arith.constant 0 : i32
    %c0_i32_0 = arith.constant 0 : i32
    %c0_i32_1 = arith.constant 0 : i32
    return %c0_i32, %c0_i32_0 : i32, i32
  }
  func.func @transform_1(%arg0: i32) -> (i32, i32, i32) {
    %c0_i32 = arith.constant 0 : i32
    %c0_i32_0 = arith.constant 0 : i32
    %c0_i32_1 = arith.constant 0 : i32
    return %arg0, %c0_i32, %c0_i32_0 : i32, i32, i32
  }
  func.func @transform_2(%arg0: i32) -> (i32, i32, i32) {
    %c1_i32 = arith.constant 1 : i32
    %0 = arith.subi %c1_i32, %arg0 : i32
    %c0_i32 = arith.constant 0 : i32
    %c1_i32_0 = arith.constant 1 : i32
    %c0_i32_1 = arith.constant 0 : i32
    return %0, %c0_i32, %c1_i32_0 : i32, i32, i32
  }
  func.func @transform_3(%arg0: i32) -> (i32, i32) {
    %c0_i32 = arith.constant 0 : i32
    %c0_i32_0 = arith.constant 0 : i32
    %c0_i32_1 = arith.constant 0 : i32
    return %c0_i32, %c0_i32_0 : i32, i32
  }
  func.func @transform_4(%arg0: i32) -> (i32, i32, i32) {
    %c0_i32 = arith.constant 0 : i32
    %c0_i32_0 = arith.constant 0 : i32
    %c0_i32_1 = arith.constant 0 : i32
    return %arg0, %c0_i32, %c0_i32_0 : i32, i32, i32
  }
  func.func @transform_5(%arg0: i32) -> (i32, i32, i32) {
    %c1_i32 = arith.constant 1 : i32
    %0 = arith.subi %c1_i32, %arg0 : i32
    %c0_i32 = arith.constant 0 : i32
    %c0_i32_0 = arith.constant 0 : i32
    %c0_i32_1 = arith.constant 0 : i32
    return %0, %c0_i32, %c0_i32_0 : i32, i32, i32
  }
}

</mosaic_0001>

<llo_original>
// kernel: bilstm_fc_forward.5
$region0: #{bilstm_fc_forward.5}
  #allocation0 [shape = 'u32[]', space=smem, size = 0x4, offset = 0x4, fixed_abs, tag = 'smem constant byte address 0x4 - core index']
  #allocation1 [shape = 'u32[144,128]{1,0:T(1,128)}', space=vmem, size = 0x12000, scoped, tag = 'internal scratch']
  %s0 = inlined_call_operand.vmem [shape: bf16[128,128], index: 0, kind: input, shape index: {}]
  %s1 = inlined_call_operand.vmem [shape: bf16[128,128], index: 1, kind: input, shape index: {}]
  %s2 = inlined_call_operand.vmem [shape: bf16[128,128], index: 2, kind: input, shape index: {}]
  %s3 = inlined_call_operand.vmem [shape: bf16[128,128], index: 3, kind: input, shape index: {}]
  %s4 = inlined_call_operand.vmem [shape: f32[1,128], index: 4, kind: input, shape index: {}]
  %s5 = inlined_call_operand.vmem [shape: f32[128,128], index: 5, kind: output, shape index: {}]
  %s6 = sld [smem:[#allocation0]]
  $region30: #{bilstm_fc_forward.5} parent=0
    _
  %s8 = ssub.s32 1, %s6
  %s9 = scalar_select 0, %s8, %s6
  // Predicated region
  $region2: #{bilstm_fc_forward.5} parent=0 // pred_check
    _
  $region3: #{bilstm_fc_forward.5} parent=0 // pred_check_branch
    %11 = sbr.rel (0) target = $region5
  $region4: #{bilstm_fc_forward.5} parent=0 // pred_region
    _
  $region5: #{bilstm_fc_forward.5} parent=0 // pred_fallthru
    _
  // Predicated region
  $region6: #{bilstm_fc_forward.5} parent=0 // pred_check
    _
  $region7: #{bilstm_fc_forward.5} parent=0 // pred_check_branch
    %13 = sbr.rel (0) target = $region9
  $region8: #{bilstm_fc_forward.5} parent=0 // pred_region
    _
  $region9: #{bilstm_fc_forward.5} parent=0 // pred_fallthru
    _
  // Predicated region
  $region10: #{bilstm_fc_forward.5} parent=0 // pred_check
    _
  $region11: #{bilstm_fc_forward.5} parent=0 // pred_check_branch
    %15 = sbr.rel (0) target = $region13
  $region12: #{bilstm_fc_forward.5} parent=0 // pred_region
    _
  $region13: #{bilstm_fc_forward.5} parent=0 // pred_fallthru
    _
  // Predicated region
  $region14: #{bilstm_fc_forward.5} parent=0 // pred_check
    _
  $region15: #{bilstm_fc_forward.5} parent=0 // pred_check_branch
    %17 = sbr.rel (0) target = $region17
  $region16: #{bilstm_fc_forward.5} parent=0 // pred_region
    _
  $region17: #{bilstm_fc_forward.5} parent=0 // pred_fallthru
    _
  // Predicated region
  $region18: #{bilstm_fc_forward.5} parent=0 // pred_check
    _
  $region19: #{bilstm_fc_forward.5} parent=0 // pred_check_branch
    %19 = sbr.rel (0) target = $region21
  $region20: #{bilstm_fc_forward.5} parent=0 // pred_region
    _
  $region21: #{bilstm_fc_forward.5} parent=0 // pred_fallthru
    _
  %v21 = vld [vmem:[%s0] sm:$0xf]
  %v22 = vld [vmem:[%s0 + $0x4] sm:$0xf]
  %v23 = vld [vmem:[%s0 + $0x8] sm:$0xf]
  %v24 = vld [vmem:[%s0 + $0xc] sm:$0xf]
  %v25 = vld [vmem:[%s0 + $0x10] sm:$0xf]
  %v26 = vld [vmem:[%s0 + $0x14] sm:$0xf]
  %v27 = vld [vmem:[%s0 + $0x18] sm:$0xf]
  %v28 = vld [vmem:[%s0 + $0x1c] sm:$0xf]
  %v29 = vld [vmem:[%s0 + $0x20] sm:$0xf]
  %v30 = vld [vmem:[%s0 + $0x24] sm:$0xf]
  %v31 = vld [vmem:[%s0 + $0x28] sm:$0xf]
  %v32 = vld [vmem:[%s0 + $0x2c] sm:$0xf]
  %v33 = vld [vmem:[%s0 + $0x30] sm:$0xf]
  %v34 = vld [vmem:[%s0 + $0x34] sm:$0xf]
  %v35 = vld [vmem:[%s0 + $0x38] sm:$0xf]
  %v36 = vld [vmem:[%s0 + $0x3c] sm:$0xf]
  %v37 = vld [vmem:[%s2] sm:$0xf]
  %v38 = vld [vmem:[%s2 + $0x4] sm:$0xf]
  %v39 = vld [vmem:[%s2 + $0x8] sm:$0xf]
  %v40 = vld [vmem:[%s2 + $0xc] sm:$0xf]
  %v41 = vld [vmem:[%s2 + $0x10] sm:$0xf]
  %v42 = vld [vmem:[%s2 + $0x14] sm:$0xf]
  %v43 = vld [vmem:[%s2 + $0x18] sm:$0xf]
  %v44 = vld [vmem:[%s2 + $0x1c] sm:$0xf]
  %v45 = vld [vmem:[%s2 + $0x20] sm:$0xf]
  %v46 = vld [vmem:[%s2 + $0x24] sm:$0xf]
  %v47 = vld [vmem:[%s2 + $0x28] sm:$0xf]
  %v48 = vld [vmem:[%s2 + $0x2c] sm:$0xf]
  %v49 = vld [vmem:[%s2 + $0x30] sm:$0xf]
  %v50 = vld [vmem:[%s2 + $0x34] sm:$0xf]
  %v51 = vld [vmem:[%s2 + $0x38] sm:$0xf]
  %v52 = vld [vmem:[%s2 + $0x3c] sm:$0xf]
  %v53 = vld [vmem:[%s1] sm:$0xf]
  %v54 = vld [vmem:[%s1 + $0x4] sm:$0xf]
  %v55 = vld [vmem:[%s1 + $0x8] sm:$0xf]
  %v56 = vld [vmem:[%s1 + $0xc] sm:$0xf]
  %v57 = vld [vmem:[%s1 + $0x10] sm:$0xf]
  %v58 = vld [vmem:[%s1 + $0x14] sm:$0xf]
  %v59 = vld [vmem:[%s1 + $0x18] sm:$0xf]
  %v60 = vld [vmem:[%s1 + $0x1c] sm:$0xf]
  %v61 = vld [vmem:[%s1 + $0x20] sm:$0xf]
  %v62 = vld [vmem:[%s1 + $0x24] sm:$0xf]
  %v63 = vld [vmem:[%s1 + $0x28] sm:$0xf]
  %v64 = vld [vmem:[%s1 + $0x2c] sm:$0xf]
  %v65 = vld [vmem:[%s1 + $0x30] sm:$0xf]
  %v66 = vld [vmem:[%s1 + $0x34] sm:$0xf]
  %v67 = vld [vmem:[%s1 + $0x38] sm:$0xf]
  %v68 = vld [vmem:[%s1 + $0x3c] sm:$0xf]
  %v69 = vld [vmem:[%s3] sm:$0xf]
  %v70 = vld [vmem:[%s3 + $0x4] sm:$0xf]
  %v71 = vld [vmem:[%s3 + $0x8] sm:$0xf]
  %v72 = vld [vmem:[%s3 + $0xc] sm:$0xf]
  %v73 = vld [vmem:[%s3 + $0x10] sm:$0xf]
  %v74 = vld [vmem:[%s3 + $0x14] sm:$0xf]
  %v75 = vld [vmem:[%s3 + $0x18] sm:$0xf]
  %v76 = vld [vmem:[%s3 + $0x1c] sm:$0xf]
  %v77 = vld [vmem:[%s3 + $0x20] sm:$0xf]
  %v78 = vld [vmem:[%s3 + $0x24] sm:$0xf]
  %v79 = vld [vmem:[%s3 + $0x28] sm:$0xf]
  %v80 = vld [vmem:[%s3 + $0x2c] sm:$0xf]
  %v81 = vld [vmem:[%s3 + $0x30] sm:$0xf]
  %v82 = vld [vmem:[%s3 + $0x34] sm:$0xf]
  %v83 = vld [vmem:[%s3 + $0x38] sm:$0xf]
  %v84 = vld [vmem:[%s3 + $0x3c] sm:$0xf]
  %v101 = vunpack.c.l.b16 %v53
  %v102 = vunpack.c.l.b16 %v54
  %v103 = vunpack.c.l.b16 %v55
  %v104 = vunpack.c.l.b16 %v56
  %v105 = vunpack.c.l.b16 %v57
  %v106 = vunpack.c.l.b16 %v58
  %v107 = vunpack.c.l.b16 %v59
  %v108 = vunpack.c.l.b16 %v60
  %v109 = vunpack.c.l.b16 %v61
  %v110 = vunpack.c.l.b16 %v62
  %v111 = vunpack.c.l.b16 %v63
  %v112 = vunpack.c.l.b16 %v64
  %v113 = vunpack.c.l.b16 %v65
  %v114 = vunpack.c.l.b16 %v66
  %v115 = vunpack.c.l.b16 %v67
  %v116 = vunpack.c.l.b16 %v68
  %v117 = vpack.c.b16 %v102, %v101
  %v118 = vpack.c.b16 %v104, %v103
  %v119 = vpack.c.b16 %v106, %v105
  %v120 = vpack.c.b16 %v108, %v107
  %v121 = vpack.c.b16 %v110, %v109
  %v122 = vpack.c.b16 %v112, %v111
  %v123 = vpack.c.b16 %v114, %v113
  %v124 = vpack.c.b16 %v116, %v115
  %v149 = vunpack.c.l.b16 %v69
  %v150 = vunpack.c.l.b16 %v70
  %v151 = vunpack.c.l.b16 %v71
  %v152 = vunpack.c.l.b16 %v72
  %v153 = vunpack.c.l.b16 %v73
  %v154 = vunpack.c.l.b16 %v74
  %v155 = vunpack.c.l.b16 %v75
  %v156 = vunpack.c.l.b16 %v76
  %v157 = vunpack.c.l.b16 %v77
  %v158 = vunpack.c.l.b16 %v78
  %v159 = vunpack.c.l.b16 %v79
  %v160 = vunpack.c.l.b16 %v80
  %v161 = vunpack.c.l.b16 %v81
  %v162 = vunpack.c.l.b16 %v82
  %v163 = vunpack.c.l.b16 %v83
  %v164 = vunpack.c.l.b16 %v84
  %v165 = vpack.c.b16 %v150, %v149
  %v166 = vpack.c.b16 %v152, %v151
  %v167 = vpack.c.b16 %v154, %v153
  %v168 = vpack.c.b16 %v156, %v155
  %v169 = vpack.c.b16 %v158, %v157
  %v170 = vpack.c.b16 %v160, %v159
  %v171 = vpack.c.b16 %v162, %v161
  %v172 = vpack.c.b16 %v164, %v163
  %181 = vmatprep.subr.bf16.mxu0 0
  %182 = vmatpush1.bf16.msra.mxu0 %v172
  %183 = vmatprep.subr.bf16.mxu0 0
  %184 = vmatpush1.bf16.msra.mxu0 %v171
  %185 = vmatprep.subr.bf16.mxu0 0
  %186 = vmatpush1.bf16.msra.mxu0 %v170
  %187 = vmatprep.subr.bf16.mxu0 0
  %188 = vmatpush1.bf16.msra.mxu0 %v169
  %189 = vmatprep.subr.bf16.mxu0 0
  %190 = vmatpush1.bf16.msra.mxu0 %v168
  %191 = vmatprep.subr.bf16.mxu0 0
  %192 = vmatpush1.bf16.msra.mxu0 %v167
  %193 = vmatprep.subr.bf16.mxu0 0
  %194 = vmatpush1.bf16.msra.mxu0 %v166
  %195 = vmatprep.subr.bf16.mxu0 0
  %196 = vmatpush1.bf16.msra.mxu0 %v165
  %197 = vmatprep.subr.bf16.mxu0 0
  %198 = vmatpush2.bf16.msra.mxu0 0
  %199 = vmatprep.subr.bf16.mxu0 0
  %200 = vmatpush2.bf16.msra.mxu0 0
  %201 = vmatprep.subr.bf16.mxu0 0
  %202 = vmatpush2.bf16.msra.mxu0 0
  %203 = vmatprep.subr.bf16.mxu0 0
  %204 = vmatpush2.bf16.msra.mxu0 0
  %205 = vmatprep.subr.bf16.mxu0 0
  %206 = vmatpush2.bf16.msra.mxu0 0
  %207 = vmatprep.subr.bf16.mxu0 0
  %208 = vmatpush2.bf16.msra.mxu0 0
  %209 = vmatprep.subr.bf16.mxu0 0
  %210 = vmatpush2.bf16.msra.mxu0 0
  %211 = vmatprep.subr.bf16.mxu0 0
  %212 = vmatpush2.bf16.msra.mxu0 0
  %213 = vmatprep.mubr.bf16.mxu0 0
  %214 = vmatmul.mubr.bf16.gmra.mxu0 %v117
  %v215 = vpop.f32.mrf.mxu0
  %v216 = vadd.f32 0.0, %v215
  %v217 = vpop.f32.mrf.mxu0
  %v218 = vpop.f32.mrf.mxu0
  %v219 = vadd.f32 0.0, %v218
  %v220 = vpop.f32.mrf.mxu0
  %221 = vmatprep.mubr.bf16.mxu0 0
  %222 = vmatmul.mubr.bf16.gmra.mxu0 %v118
  %v223 = vpop.f32.mrf.mxu0
  %v224 = vadd.f32 0.0, %v223
  %v225 = vpop.f32.mrf.mxu0
  %v226 = vpop.f32.mrf.mxu0
  %v227 = vadd.f32 0.0, %v226
  %v228 = vpop.f32.mrf.mxu0
  %229 = vmatprep.mubr.bf16.mxu0 0
  %230 = vmatmul.mubr.bf16.gmra.mxu0 %v119
  %v231 = vpop.f32.mrf.mxu0
  %v232 = vadd.f32 0.0, %v231
  %v233 = vpop.f32.mrf.mxu0
  %v234 = vpop.f32.mrf.mxu0
  %v235 = vadd.f32 0.0, %v234
  %v236 = vpop.f32.mrf.mxu0
  %237 = vmatprep.mubr.bf16.mxu0 0
  %238 = vmatmul.mubr.bf16.gmra.mxu0 %v120
  %v239 = vpop.f32.mrf.mxu0
  %v240 = vadd.f32 0.0, %v239
  %v241 = vpop.f32.mrf.mxu0
  %v242 = vpop.f32.mrf.mxu0
  %v243 = vadd.f32 0.0, %v242
  %v244 = vpop.f32.mrf.mxu0
  %245 = vmatprep.mubr.bf16.mxu0 0
  %246 = vmatmul.mubr.bf16.gmra.mxu0 %v121
  %v247 = vpop.f32.mrf.mxu0
  %v248 = vadd.f32 0.0, %v247
  %v249 = vpop.f32.mrf.mxu0
  %v250 = vpop.f32.mrf.mxu0
  %v251 = vadd.f32 0.0, %v250
  %v252 = vpop.f32.mrf.mxu0
  %253 = vmatprep.mubr.bf16.mxu0 0
  %254 = vmatmul.mubr.bf16.gmra.mxu0 %v122
  %v255 = vpop.f32.mrf.mxu0
  %v256 = vadd.f32 0.0, %v255
  %v257 = vpop.f32.mrf.mxu0
  %v258 = vpop.f32.mrf.mxu0
  %v259 = vadd.f32 0.0, %v258
  %v260 = vpop.f32.mrf.mxu0
  %261 = vmatprep.mubr.bf16.mxu0 0
  %262 = vmatmul.mubr.bf16.gmra.mxu0 %v123
  %v263 = vpop.f32.mrf.mxu0
  %v264 = vadd.f32 0.0, %v263
  %v265 = vpop.f32.mrf.mxu0
  %v266 = vpop.f32.mrf.mxu0
  %v267 = vadd.f32 0.0, %v266
  %v268 = vpop.f32.mrf.mxu0
  %269 = vmatprep.mubr.bf16.mxu0 0
  %270 = vmatmul.mubr.bf16.gmra.mxu0 %v124
  %v271 = vpop.f32.mrf.mxu0
  %v272 = vadd.f32 0.0, %v271
  %v273 = vpop.f32.mrf.mxu0
  %v274 = vpop.f32.mrf.mxu0
  %v275 = vadd.f32 0.0, %v274
  %v276 = vpop.f32.mrf.mxu0
  %277 = vdwg.mxu0
  %v294 = vunpack.c.l.b16 %v21
  %v295 = vunpack.c.l.b16 %v22
  %v296 = vunpack.c.l.b16 %v23
  %v297 = vunpack.c.l.b16 %v24
  %v298 = vunpack.c.l.b16 %v25
  %v299 = vunpack.c.l.b16 %v26
  %v300 = vunpack.c.l.b16 %v27
  %v301 = vunpack.c.l.b16 %v28
  %v302 = vunpack.c.l.b16 %v29
  %v303 = vunpack.c.l.b16 %v30
  %v304 = vunpack.c.l.b16 %v31
  %v305 = vunpack.c.l.b16 %v32
  %v306 = vunpack.c.l.b16 %v33
  %v307 = vunpack.c.l.b16 %v34
  %v308 = vunpack.c.l.b16 %v35
  %v309 = vunpack.c.l.b16 %v36
  %v310 = vpack.c.b16 %v295, %v294
  %v311 = vpack.c.b16 %v297, %v296
  %v312 = vpack.c.b16 %v299, %v298
  %v313 = vpack.c.b16 %v301, %v300
  %v314 = vpack.c.b16 %v303, %v302
  %v315 = vpack.c.b16 %v305, %v304
  %v316 = vpack.c.b16 %v307, %v306
  %v317 = vpack.c.b16 %v309, %v308
  %v342 = vunpack.c.l.b16 %v37
  %v343 = vunpack.c.l.b16 %v38
  %v344 = vunpack.c.l.b16 %v39
  %v345 = vunpack.c.l.b16 %v40
  %v346 = vunpack.c.l.b16 %v41
  %v347 = vunpack.c.l.b16 %v42
  %v348 = vunpack.c.l.b16 %v43
  %v349 = vunpack.c.l.b16 %v44
  %v350 = vunpack.c.l.b16 %v45
  %v351 = vunpack.c.l.b16 %v46
  %v352 = vunpack.c.l.b16 %v47
  %v353 = vunpack.c.l.b16 %v48
  %v354 = vunpack.c.l.b16 %v49
  %v355 = vunpack.c.l.b16 %v50
  %v356 = vunpack.c.l.b16 %v51
  %v357 = vunpack.c.l.b16 %v52
  %v358 = vpack.c.b16 %v343, %v342
  %v359 = vpack.c.b16 %v345, %v344
  %v360 = vpack.c.b16 %v347, %v346
  %v361 = vpack.c.b16 %v349, %v348
  %v362 = vpack.c.b16 %v351, %v350
  %v363 = vpack.c.b16 %v353, %v352
  %v364 = vpack.c.b16 %v355, %v354
  %v365 = vpack.c.b16 %v357, %v356
  %374 = vmatprep.subr.bf16.mxu0 0
  %375 = vmatpush1.bf16.msra.mxu0 %v365
  %376 = vmatprep.subr.bf16.mxu0 0
  %377 = vmatpush1.bf16.msra.mxu0 %v364
  %378 = vmatprep.subr.bf16.mxu0 0
  %379 = vmatpush1.bf16.msra.mxu0 %v363
  %380 = vmatprep.subr.bf16.mxu0 0
  %381 = vmatpush1.bf16.msra.mxu0 %v362
  %382 = vmatprep.subr.bf16.mxu0 0
  %383 = vmatpush1.bf16.msra.mxu0 %v361
  %384 = vmatprep.subr.bf16.mxu0 0
  %385 = vmatpush1.bf16.msra.mxu0 %v360
  %386 = vmatprep.subr.bf16.mxu0 0
  %387 = vmatpush1.bf16.msra.mxu0 %v359
  %388 = vmatprep.subr.bf16.mxu0 0
  %389 = vmatpush1.bf16.msra.mxu0 %v358
  %390 = vmatprep.subr.bf16.mxu0 0
  %391 = vmatpush2.bf16.msra.mxu0 0
  %392 = vmatprep.subr.bf16.mxu0 0
  %393 = vmatpush2.bf16.msra.mxu0 0
  %394 = vmatprep.subr.bf16.mxu0 0
  %395 = vmatpush2.bf16.msra.mxu0 0
  %396 = vmatprep.subr.bf16.mxu0 0
  %397 = vmatpush2.bf16.msra.mxu0 0
  %398 = vmatprep.subr.bf16.mxu0 0
  %399 = vmatpush2.bf16.msra.mxu0 0
  %400 = vmatprep.subr.bf16.mxu0 0
  %401 = vmatpush2.bf16.msra.mxu0 0
  %402 = vmatprep.subr.bf16.mxu0 0
  %403 = vmatpush2.bf16.msra.mxu0 0
  %404 = vmatprep.subr.bf16.mxu0 0
  %405 = vmatpush2.bf16.msra.mxu0 0
  %406 = vmatprep.mubr.bf16.mxu0 0
  %407 = vmatmul.mubr.bf16.gmra.mxu0 %v310
  %v408 = vpop.f32.mrf.mxu0
  %v409 = vadd.f32 %v216, %v408
  %v410 = vpop.f32.mrf.mxu0
  %v411 = vpop.f32.mrf.mxu0
  %v412 = vadd.f32 %v219, %v411
  %v413 = vpop.f32.mrf.mxu0
  %414 = vmatprep.mubr.bf16.mxu0 0
  %415 = vmatmul.mubr.bf16.gmra.mxu0 %v311
  %v416 = vpop.f32.mrf.mxu0
  %v417 = vadd.f32 %v224, %v416
  %v418 = vpop.f32.mrf.mxu0
  %v419 = vpop.f32.mrf.mxu0
  %v420 = vadd.f32 %v227, %v419
  %v421 = vpop.f32.mrf.mxu0
  %422 = vmatprep.mubr.bf16.mxu0 0
  %423 = vmatmul.mubr.bf16.gmra.mxu0 %v312
  %v424 = vpop.f32.mrf.mxu0
  %v425 = vadd.f32 %v232, %v424
  %v426 = vpop.f32.mrf.mxu0
  %v427 = vpop.f32.mrf.mxu0
  %v428 = vadd.f32 %v235, %v427
  %v429 = vpop.f32.mrf.mxu0
  %430 = vmatprep.mubr.bf16.mxu0 0
  %431 = vmatmul.mubr.bf16.gmra.mxu0 %v313
  %v432 = vpop.f32.mrf.mxu0
  %v433 = vadd.f32 %v240, %v432
  %v434 = vpop.f32.mrf.mxu0
  %v435 = vpop.f32.mrf.mxu0
  %v436 = vadd.f32 %v243, %v435
  %v437 = vpop.f32.mrf.mxu0
  %438 = vmatprep.mubr.bf16.mxu0 0
  %439 = vmatmul.mubr.bf16.gmra.mxu0 %v314
  %v440 = vpop.f32.mrf.mxu0
  %v441 = vadd.f32 %v248, %v440
  %v442 = vpop.f32.mrf.mxu0
  %v443 = vpop.f32.mrf.mxu0
  %v444 = vadd.f32 %v251, %v443
  %v445 = vpop.f32.mrf.mxu0
  %446 = vmatprep.mubr.bf16.mxu0 0
  %447 = vmatmul.mubr.bf16.gmra.mxu0 %v315
  %v448 = vpop.f32.mrf.mxu0
  %v449 = vadd.f32 %v256, %v448
  %v450 = vpop.f32.mrf.mxu0
  %v451 = vpop.f32.mrf.mxu0
  %v452 = vadd.f32 %v259, %v451
  %v453 = vpop.f32.mrf.mxu0
  %454 = vmatprep.mubr.bf16.mxu0 0
  %455 = vmatmul.mubr.bf16.gmra.mxu0 %v316
  %v456 = vpop.f32.mrf.mxu0
  %v457 = vadd.f32 %v264, %v456
  %v458 = vpop.f32.mrf.mxu0
  %v459 = vpop.f32.mrf.mxu0
  %v460 = vadd.f32 %v267, %v459
  %v461 = vpop.f32.mrf.mxu0
  %462 = vmatprep.mubr.bf16.mxu0 0
  %463 = vmatmul.mubr.bf16.gmra.mxu0 %v317
  %v464 = vpop.f32.mrf.mxu0
  %v465 = vadd.f32 %v272, %v464
  %v466 = vpop.f32.mrf.mxu0
  %v467 = vpop.f32.mrf.mxu0
  %v468 = vadd.f32 %v275, %v467
  %v469 = vpop.f32.mrf.mxu0
  %470 = vdwg.mxu0
  %v471 = vld [vmem:[%s4] sm:$0x1]
  %v473 = vlaneseq
  %v474 = vshrl.u32 %v473, 7
  %v475 = vsub.s32 0, %v474
  %v476 = vrot.slane %v471, %v475
  %v478 = vadd.f32 %v409, %v476
  %v479 = vadd.f32 %v412, %v476
  %v480 = vadd.f32 %v417, %v476
  %v481 = vadd.f32 %v420, %v476
  %v482 = vadd.f32 %v425, %v476
  %v483 = vadd.f32 %v428, %v476
  %v484 = vadd.f32 %v433, %v476
  %v485 = vadd.f32 %v436, %v476
  %v486 = vadd.f32 %v441, %v476
  %v487 = vadd.f32 %v444, %v476
  %v488 = vadd.f32 %v449, %v476
  %v489 = vadd.f32 %v452, %v476
  %v490 = vadd.f32 %v457, %v476
  %v491 = vadd.f32 %v460, %v476
  %v492 = vadd.f32 %v465, %v476
  %v493 = vadd.f32 %v468, %v476
  %494 = vst [vmem:[%s5] sm:$0xff] %v478
  %495 = vst [vmem:[%s5 + $0x8] sm:$0xff] %v479
  %496 = vst [vmem:[%s5 + $0x10] sm:$0xff] %v480
  %497 = vst [vmem:[%s5 + $0x18] sm:$0xff] %v481
  %498 = vst [vmem:[%s5 + $0x20] sm:$0xff] %v482
  %499 = vst [vmem:[%s5 + $0x28] sm:$0xff] %v483
  %500 = vst [vmem:[%s5 + $0x30] sm:$0xff] %v484
  %501 = vst [vmem:[%s5 + $0x38] sm:$0xff] %v485
  %502 = vst [vmem:[%s5 + $0x40] sm:$0xff] %v486
  %503 = vst [vmem:[%s5 + $0x48] sm:$0xff] %v487
  %504 = vst [vmem:[%s5 + $0x50] sm:$0xff] %v488
  %505 = vst [vmem:[%s5 + $0x58] sm:$0xff] %v489
  %506 = vst [vmem:[%s5 + $0x60] sm:$0xff] %v490
  %507 = vst [vmem:[%s5 + $0x68] sm:$0xff] %v491
  %508 = vst [vmem:[%s5 + $0x70] sm:$0xff] %v492
  %509 = vst [vmem:[%s5 + $0x78] sm:$0xff] %v493
  // Predicated region
  $region22: #{bilstm_fc_forward.5} parent=0 // pred_check
    _
  $region23: #{bilstm_fc_forward.5} parent=0 // pred_check_branch
    %511 = sbr.rel (0) target = $region25
  $region24: #{bilstm_fc_forward.5} parent=0 // pred_region
    _
  $region25: #{bilstm_fc_forward.5} parent=0 // pred_fallthru
    _
  // Predicated region
  $region26: #{bilstm_fc_forward.5} parent=0 // pred_check
    _
  $region27: #{bilstm_fc_forward.5} parent=0 // pred_check_branch
    %513 = sbr.rel (0) target = $region29
  $region28: #{bilstm_fc_forward.5} parent=0 // pred_region
    _
  $region29: #{bilstm_fc_forward.5} parent=0 // pred_fallthru
    _

// kernel: bilstm_fc_forward.3
$region0: #{bilstm_fc_forward.3}
  #allocation0 [shape = 'u32[]', space=smem, size = 0x4, offset = 0x4, fixed_abs, tag = 'smem constant byte address 0x4 - core index']
  #allocation1 [shape = 'u32[144,128]{1,0:T(1,128)}', space=vmem, size = 0x12000, scoped, tag = 'internal scratch']
  %s0 = inlined_call_operand.vmem [shape: bf16[128,16], index: 0, kind: input, shape index: {}]
  %s1 = inlined_call_operand.vmem [shape: bf16[16,1024], index: 1, kind: input, shape index: {}]
  %s2 = inlined_call_operand.vmem [shape: f32[1,1024], index: 2, kind: input, shape index: {}]
  %s3 = inlined_call_operand.vmem [shape: bf16[128,1024], index: 3, kind: output, shape index: {}]
  %s4 = sld [smem:[#allocation0]]
  $region22: #{bilstm_fc_forward.3} parent=0
    _
  %s6 = ssub.s32 1, %s4
  %s7 = scalar_select 0, %s6, %s4
  // Predicated region
  $region2: #{bilstm_fc_forward.3} parent=0 // pred_check
    _
  $region3: #{bilstm_fc_forward.3} parent=0 // pred_check_branch
    %9 = sbr.rel (0) target = $region5
  $region4: #{bilstm_fc_forward.3} parent=0 // pred_region
    _
  $region5: #{bilstm_fc_forward.3} parent=0 // pred_fallthru
    _
  // Predicated region
  $region6: #{bilstm_fc_forward.3} parent=0 // pred_check
    _
  $region7: #{bilstm_fc_forward.3} parent=0 // pred_check_branch
    %11 = sbr.rel (0) target = $region9
  $region8: #{bilstm_fc_forward.3} parent=0 // pred_region
    _
  $region9: #{bilstm_fc_forward.3} parent=0 // pred_fallthru
    _
  // Predicated region
  $region10: #{bilstm_fc_forward.3} parent=0 // pred_check
    _
  $region11: #{bilstm_fc_forward.3} parent=0 // pred_check_branch
    %13 = sbr.rel (0) target = $region13
  $region12: #{bilstm_fc_forward.3} parent=0 // pred_region
    _
  $region13: #{bilstm_fc_forward.3} parent=0 // pred_fallthru
    _
  %v15 = vld [vmem:[%s0] sm:$0xf]
  %v16 = vld [vmem:[%s0 + $0x4] sm:$0xf]
  %v17 = vld [vmem:[%s0 + $0x8] sm:$0xf]
  %v18 = vld [vmem:[%s0 + $0xc] sm:$0xf]
  %v19 = vld [vmem:[%s0 + $0x10] sm:$0xf]
  %v20 = vld [vmem:[%s0 + $0x14] sm:$0xf]
  %v21 = vld [vmem:[%s0 + $0x18] sm:$0xf]
  %v22 = vld [vmem:[%s0 + $0x1c] sm:$0xf]
  %v23 = vld [vmem:[%s0 + $0x20] sm:$0xf]
  %v24 = vld [vmem:[%s0 + $0x24] sm:$0xf]
  %v25 = vld [vmem:[%s0 + $0x28] sm:$0xf]
  %v26 = vld [vmem:[%s0 + $0x2c] sm:$0xf]
  %v27 = vld [vmem:[%s0 + $0x30] sm:$0xf]
  %v28 = vld [vmem:[%s0 + $0x34] sm:$0xf]
  %v29 = vld [vmem:[%s0 + $0x38] sm:$0xf]
  %v30 = vld [vmem:[%s0 + $0x3c] sm:$0xf]
  %v31 = vld [vmem:[%s1] sm:$0xff]
  %v32 = vld [vmem:[%s1 + $0x8] sm:$0xff]
  %v33 = vld [vmem:[%s1 + $0x10] sm:$0xff]
  %v34 = vld [vmem:[%s1 + $0x18] sm:$0xff]
  %v35 = vld [vmem:[%s1 + $0x20] sm:$0xff]
  %v36 = vld [vmem:[%s1 + $0x28] sm:$0xff]
  %v37 = vld [vmem:[%s1 + $0x30] sm:$0xff]
  %v38 = vld [vmem:[%s1 + $0x38] sm:$0xff]
  %v39 = vld [vmem:[%s2] sm:$0xff]
  %v41 = vlaneseq
  %v42 = vshrl.u32 %v41, 7
  %v43 = vsub.s32 0, %v42
  %v44 = vrot.slane %v39, %v43
  %v45 = vlaneseq
  %v46 = vshrl.u32 %v45, 7
  %v47 = vsub.s32 1, %v46
  %v48 = vrot.slane %v39, %v47
  %v49 = vlaneseq
  %v50 = vshrl.u32 %v49, 7
  %v51 = vsub.s32 2, %v50
  %v52 = vrot.slane %v39, %v51
  %v53 = vlaneseq
  %v54 = vshrl.u32 %v53, 7
  %v55 = vsub.s32 3, %v54
  %v56 = vrot.slane %v39, %v55
  %v57 = vlaneseq
  %v58 = vshrl.u32 %v57, 7
  %v59 = vsub.s32 4, %v58
  %v60 = vrot.slane %v39, %v59
  %v61 = vlaneseq
  %v62 = vshrl.u32 %v61, 7
  %v63 = vsub.s32 5, %v62
  %v64 = vrot.slane %v39, %v63
  %v65 = vlaneseq
  %v66 = vshrl.u32 %v65, 7
  %v67 = vsub.s32 6, %v66
  %v68 = vrot.slane %v39, %v67
  %v69 = vlaneseq
  %v70 = vshrl.u32 %v69, 7
  %v71 = vsub.s32 7, %v70
  %v72 = vrot.slane %v39, %v71
  %v97 = vunpack.c.l.b16 %v15
  %v98 = vunpack.c.l.b16 %v16
  %v99 = vunpack.c.l.b16 %v17
  %v100 = vunpack.c.l.b16 %v18
  %v101 = vunpack.c.l.b16 %v19
  %v102 = vunpack.c.l.b16 %v20
  %v103 = vunpack.c.l.b16 %v21
  %v104 = vunpack.c.l.b16 %v22
  %v105 = vunpack.c.l.b16 %v23
  %v106 = vunpack.c.l.b16 %v24
  %v107 = vunpack.c.l.b16 %v25
  %v108 = vunpack.c.l.b16 %v26
  %v109 = vunpack.c.l.b16 %v27
  %v110 = vunpack.c.l.b16 %v28
  %v111 = vunpack.c.l.b16 %v29
  %v112 = vunpack.c.l.b16 %v30
  %v113 = vpack.c.b16 %v98, %v97
  %v114 = vpack.c.b16 %v100, %v99
  %v115 = vpack.c.b16 %v102, %v101
  %v116 = vpack.c.b16 %v104, %v103
  %v117 = vpack.c.b16 %v106, %v105
  %v118 = vpack.c.b16 %v108, %v107
  %v119 = vpack.c.b16 %v110, %v109
  %v120 = vpack.c.b16 %v112, %v111
  %v129 = vunpack.c.l.b16 %v31
  %v130 = vunpack.c.h.b16 %v31
  %v131 = vunpack.c.l.b16 %v32
  %v132 = vunpack.c.h.b16 %v32
  %v133 = vunpack.c.l.b16 %v33
  %v134 = vunpack.c.h.b16 %v33
  %v135 = vunpack.c.l.b16 %v34
  %v136 = vunpack.c.h.b16 %v34
  %v137 = vunpack.c.l.b16 %v35
  %v138 = vunpack.c.h.b16 %v35
  %v139 = vunpack.c.l.b16 %v36
  %v140 = vunpack.c.h.b16 %v36
  %v141 = vunpack.c.l.b16 %v37
  %v142 = vunpack.c.h.b16 %v37
  %v143 = vunpack.c.l.b16 %v38
  %v144 = vunpack.c.h.b16 %v38
  %v145 = vpack.c.b16 %v137, %v129
  %v146 = vpack.c.b16 %v138, %v130
  %v147 = vpack.c.b16 %v139, %v131
  %v148 = vpack.c.b16 %v140, %v132
  %v149 = vpack.c.b16 %v141, %v133
  %v150 = vpack.c.b16 %v142, %v134
  %v151 = vpack.c.b16 %v143, %v135
  %v152 = vpack.c.b16 %v144, %v136
  %vm161 = vcmask 130048
  %v163 = vsel %vm161, %v113, 0
  %v166 = vsel %vm161, %v114, 0
  %v169 = vsel %vm161, %v115, 0
  %v172 = vsel %vm161, %v116, 0
  %v175 = vsel %vm161, %v117, 0
  %v178 = vsel %vm161, %v118, 0
  %v181 = vsel %vm161, %v119, 0
  %v184 = vsel %vm161, %v120, 0
  %186 = vmatprep.subr.bf16.mxu0 0
  %187 = vmatpush1.bf16.msra.mxu0 0
  %188 = vmatprep.subr.bf16.mxu0 0
  %189 = vmatpush1.bf16.msra.mxu0 0
  %190 = vmatprep.subr.bf16.mxu0 0
  %191 = vmatpush1.bf16.msra.mxu0 0
  %192 = vmatprep.subr.bf16.mxu0 0
  %193 = vmatpush1.bf16.msra.mxu0 0
  %194 = vmatprep.subr.bf16.mxu0 0
  %195 = vmatpush1.bf16.msra.mxu0 0
  %196 = vmatprep.subr.bf16.mxu0 0
  %197 = vmatpush1.bf16.msra.mxu0 0
  %198 = vmatprep.subr.bf16.mxu0 0
  %199 = vmatpush1.bf16.msra.mxu0 0
  %200 = vmatprep.subr.bf16.mxu0 %v146
  %201 = vmatpush1.bf16.msra.mxu0 %v145
  %202 = vmatprep.subr.bf16.mxu0 0
  %203 = vmatpush2.bf16.msra.mxu0 0
  %204 = vmatprep.subr.bf16.mxu0 0
  %205 = vmatpush2.bf16.msra.mxu0 0
  %206 = vmatprep.subr.bf16.mxu0 0
  %207 = vmatpush2.bf16.msra.mxu0 0
  %208 = vmatprep.subr.bf16.mxu0 0
  %209 = vmatpush2.bf16.msra.mxu0 0
  %210 = vmatprep.subr.bf16.mxu0 0
  %211 = vmatpush2.bf16.msra.mxu0 0
  %212 = vmatprep.subr.bf16.mxu0 0
  %213 = vmatpush2.bf16.msra.mxu0 0
  %214 = vmatprep.subr.bf16.mxu0 0
  %215 = vmatpush2.bf16.msra.mxu0 0
  %216 = vmatprep.subr.bf16.mxu0 0
  %217 = vmatpush2.bf16.msra.mxu0 0
  %218 = vmatprep.mubr.bf16.mxu0 0
  %219 = vmatmul.mubr.bf16.gmra.mxu0 %v163
  %v220 = vpop.f32.mrf.mxu0
  %v221 = vadd.f32 %v44, %v220
  %v222 = vpop.f32.mrf.mxu0
  %v223 = vadd.f32 %v48, %v222
  %v224 = vpop.f32.mrf.mxu0
  %v225 = vadd.f32 %v44, %v224
  %v226 = vpop.f32.mrf.mxu0
  %v227 = vadd.f32 %v48, %v226
  %228 = vmatprep.mubr.bf16.mxu0 0
  %229 = vmatmul.mubr.bf16.gmra.mxu0 %v166
  %v230 = vpop.f32.mrf.mxu0
  %v231 = vadd.f32 %v44, %v230
  %v232 = vpop.f32.mrf.mxu0
  %v233 = vadd.f32 %v48, %v232
  %v234 = vpop.f32.mrf.mxu0
  %v235 = vadd.f32 %v44, %v234
  %v236 = vpop.f32.mrf.mxu0
  %v237 = vadd.f32 %v48, %v236
  %238 = vmatprep.mubr.bf16.mxu0 0
  %239 = vmatmul.mubr.bf16.gmra.mxu0 %v169
  %v240 = vpop.f32.mrf.mxu0
  %v241 = vadd.f32 %v44, %v240
  %v242 = vpop.f32.mrf.mxu0
  %v243 = vadd.f32 %v48, %v242
  %v244 = vpop.f32.mrf.mxu0
  %v245 = vadd.f32 %v44, %v244
  %v246 = vpop.f32.mrf.mxu0
  %v247 = vadd.f32 %v48, %v246
  %248 = vmatprep.mubr.bf16.mxu0 0
  %249 = vmatmul.mubr.bf16.gmra.mxu0 %v172
  %v250 = vpop.f32.mrf.mxu0
  %v251 = vadd.f32 %v44, %v250
  %v252 = vpop.f32.mrf.mxu0
  %v253 = vadd.f32 %v48, %v252
  %v254 = vpop.f32.mrf.mxu0
  %v255 = vadd.f32 %v44, %v254
  %v256 = vpop.f32.mrf.mxu0
  %v257 = vadd.f32 %v48, %v256
  %258 = vmatprep.mubr.bf16.mxu0 0
  %259 = vmatmul.mubr.bf16.gmra.mxu0 %v175
  %v260 = vpop.f32.mrf.mxu0
  %v261 = vadd.f32 %v44, %v260
  %v262 = vpop.f32.mrf.mxu0
  %v263 = vadd.f32 %v48, %v262
  %v264 = vpop.f32.mrf.mxu0
  %v265 = vadd.f32 %v44, %v264
  %v266 = vpop.f32.mrf.mxu0
  %v267 = vadd.f32 %v48, %v266
  %268 = vmatprep.mubr.bf16.mxu0 0
  %269 = vmatmul.mubr.bf16.gmra.mxu0 %v178
  %v270 = vpop.f32.mrf.mxu0
  %v271 = vadd.f32 %v44, %v270
  %v272 = vpop.f32.mrf.mxu0
  %v273 = vadd.f32 %v48, %v272
  %v274 = vpop.f32.mrf.mxu0
  %v275 = vadd.f32 %v44, %v274
  %v276 = vpop.f32.mrf.mxu0
  %v277 = vadd.f32 %v48, %v276
  %278 = vmatprep.mubr.bf16.mxu0 0
  %279 = vmatmul.mubr.bf16.gmra.mxu0 %v181
  %v280 = vpop.f32.mrf.mxu0
  %v281 = vadd.f32 %v44, %v280
  %v282 = vpop.f32.mrf.mxu0
  %v283 = vadd.f32 %v48, %v282
  %v284 = vpop.f32.mrf.mxu0
  %v285 = vadd.f32 %v44, %v284
  %v286 = vpop.f32.mrf.mxu0
  %v287 = vadd.f32 %v48, %v286
  %288 = vmatprep.mubr.bf16.mxu0 0
  %289 = vmatmul.mubr.bf16.gmra.mxu0 %v184
  %v290 = vpop.f32.mrf.mxu0
  %v291 = vadd.f32 %v44, %v290
  %v292 = vpop.f32.mrf.mxu0
  %v293 = vadd.f32 %v48, %v292
  %v294 = vpop.f32.mrf.mxu0
  %v295 = vadd.f32 %v44, %v294
  %v296 = vpop.f32.mrf.mxu0
  %v297 = vadd.f32 %v48, %v296
  %298 = vdwg.mxu0
  %299 = vmatprep.subr.bf16.mxu0 0
  %300 = vmatpush1.bf16.msra.mxu0 0
  %301 = vmatprep.subr.bf16.mxu0 0
  %302 = vmatpush1.bf16.msra.mxu0 0
  %303 = vmatprep.subr.bf16.mxu0 0
  %304 = vmatpush1.bf16.msra.mxu0 0
  %305 = vmatprep.subr.bf16.mxu0 0
  %306 = vmatpush1.bf16.msra.mxu0 0
  %307 = vmatprep.subr.bf16.mxu0 0
  %308 = vmatpush1.bf16.msra.mxu0 0
  %309 = vmatprep.subr.bf16.mxu0 0
  %310 = vmatpush1.bf16.msra.mxu0 0
  %311 = vmatprep.subr.bf16.mxu0 0
  %312 = vmatpush1.bf16.msra.mxu0 0
  %313 = vmatprep.subr.bf16.mxu0 %v148
  %314 = vmatpush1.bf16.msra.mxu0 %v147
  %315 = vmatprep.subr.bf16.mxu0 0
  %316 = vmatpush2.bf16.msra.mxu0 0
  %317 = vmatprep.subr.bf16.mxu0 0
  %318 = vmatpush2.bf16.msra.mxu0 0
  %319 = vmatprep.subr.bf16.mxu0 0
  %320 = vmatpush2.bf16.msra.mxu0 0
  %321 = vmatprep.subr.bf16.mxu0 0
  %322 = vmatpush2.bf16.msra.mxu0 0
  %323 = vmatprep.subr.bf16.mxu0 0
  %324 = vmatpush2.bf16.msra.mxu0 0
  %325 = vmatprep.subr.bf16.mxu0 0
  %326 = vmatpush2.bf16.msra.mxu0 0
  %327 = vmatprep.subr.bf16.mxu0 0
  %328 = vmatpush2.bf16.msra.mxu0 0
  %329 = vmatprep.subr.bf16.mxu0 0
  %330 = vmatpush2.bf16.msra.mxu0 0
  %331 = vmatprep.mubr.bf16.mxu0 0
  %332 = vmatmul.mubr.bf16.gmra.mxu0 %v163
  %v333 = vpop.f32.mrf.mxu0
  %v334 = vadd.f32 %v52, %v333
  %v335 = vpop.f32.mrf.mxu0
  %v336 = vadd.f32 %v56, %v335
  %v337 = vpop.f32.mrf.mxu0
  %v338 = vadd.f32 %v52, %v337
  %v339 = vpop.f32.mrf.mxu0
  %v340 = vadd.f32 %v56, %v339
  %341 = vmatprep.mubr.bf16.mxu0 0
  %342 = vmatmul.mubr.bf16.gmra.mxu0 %v166
  %v343 = vpop.f32.mrf.mxu0
  %v344 = vadd.f32 %v52, %v343
  %v345 = vpop.f32.mrf.mxu0
  %v346 = vadd.f32 %v56, %v345
  %v347 = vpop.f32.mrf.mxu0
  %v348 = vadd.f32 %v52, %v347
  %v349 = vpop.f32.mrf.mxu0
  %v350 = vadd.f32 %v56, %v349
  %351 = vmatprep.mubr.bf16.mxu0 0
  %352 = vmatmul.mubr.bf16.gmra.mxu0 %v169
  %v353 = vpop.f32.mrf.mxu0
  %v354 = vadd.f32 %v52, %v353
  %v355 = vpop.f32.mrf.mxu0
  %v356 = vadd.f32 %v56, %v355
  %v357 = vpop.f32.mrf.mxu0
  %v358 = vadd.f32 %v52, %v357
  %v359 = vpop.f32.mrf.mxu0
  %v360 = vadd.f32 %v56, %v359
  %361 = vmatprep.mubr.bf16.mxu0 0
  %362 = vmatmul.mubr.bf16.gmra.mxu0 %v172
  %v363 = vpop.f32.mrf.mxu0
  %v364 = vadd.f32 %v52, %v363
  %v365 = vpop.f32.mrf.mxu0
  %v366 = vadd.f32 %v56, %v365
  %v367 = vpop.f32.mrf.mxu0
  %v368 = vadd.f32 %v52, %v367
  %v369 = vpop.f32.mrf.mxu0
  %v370 = vadd.f32 %v56, %v369
  %371 = vmatprep.mubr.bf16.mxu0 0
  %372 = vmatmul.mubr.bf16.gmra.mxu0 %v175
  %v373 = vpop.f32.mrf.mxu0
  %v374 = vadd.f32 %v52, %v373
  %v375 = vpop.f32.mrf.mxu0
  %v376 = vadd.f32 %v56, %v375
  %v377 = vpop.f32.mrf.mxu0
  %v378 = vadd.f32 %v52, %v377
  %v379 = vpop.f32.mrf.mxu0
  %v380 = vadd.f32 %v56, %v379
  %381 = vmatprep.mubr.bf16.mxu0 0
  %382 = vmatmul.mubr.bf16.gmra.mxu0 %v178
  %v383 = vpop.f32.mrf.mxu0
  %v384 = vadd.f32 %v52, %v383
  %v385 = vpop.f32.mrf.mxu0
  %v386 = vadd.f32 %v56, %v385
  %v387 = vpop.f32.mrf.mxu0
  %v388 = vadd.f32 %v52, %v387
  %v389 = vpop.f32.mrf.mxu0
  %v390 = vadd.f32 %v56, %v389
  %391 = vmatprep.mubr.bf16.mxu0 0
  %392 = vmatmul.mubr.bf16.gmra.mxu0 %v181
  %v393 = vpop.f32.mrf.mxu0
  %v394 = vadd.f32 %v52, %v393
  %v395 = vpop.f32.mrf.mxu0
  %v396 = vadd.f32 %v56, %v395
  %v397 = vpop.f32.mrf.mxu0
  %v398 = vadd.f32 %v52, %v397
  %v399 = vpop.f32.mrf.mxu0
  %v400 = vadd.f32 %v56, %v399
  %401 = vmatprep.mubr.bf16.mxu0 0
  %402 = vmatmul.mubr.bf16.gmra.mxu0 %v184
  %v403 = vpop.f32.mrf.mxu0
  %v404 = vadd.f32 %v52, %v403
  %v405 = vpop.f32.mrf.mxu0
  %v406 = vadd.f32 %v56, %v405
  %v407 = vpop.f32.mrf.mxu0
  %v408 = vadd.f32 %v52, %v407
  %v409 = vpop.f32.mrf.mxu0
  %v410 = vadd.f32 %v56, %v409
  %411 = vdwg.mxu0
  %412 = vmatprep.subr.bf16.mxu0 0
  %413 = vmatpush1.bf16.msra.mxu0 0
  %414 = vmatprep.subr.bf16.mxu0 0
  %415 = vmatpush1.bf16.msra.mxu0 0
  %416 = vmatprep.subr.bf16.mxu0 0
  %417 = vmatpush1.bf16.msra.mxu0 0
  %418 = vmatprep.subr.bf16.mxu0 0
  %419 = vmatpush1.bf16.msra.mxu0 0
  %420 = vmatprep.subr.bf16.mxu0 0
  %421 = vmatpush1.bf16.msra.mxu0 0
  %422 = vmatprep.subr.bf16.mxu0 0
  %423 = vmatpush1.bf16.msra.mxu0 0
  %424 = vmatprep.subr.bf16.mxu0 0
  %425 = vmatpush1.bf16.msra.mxu0 0
  %426 = vmatprep.subr.bf16.mxu0 %v150
  %427 = vmatpush1.bf16.msra.mxu0 %v149
  %428 = vmatprep.subr.bf16.mxu0 0
  %429 = vmatpush2.bf16.msra.mxu0 0
  %430 = vmatprep.subr.bf16.mxu0 0
  %431 = vmatpush2.bf16.msra.mxu0 0
  %432 = vmatprep.subr.bf16.mxu0 0
  %433 = vmatpush2.bf16.msra.mxu0 0
  %434 = vmatprep.subr.bf16.mxu0 0
  %435 = vmatpush2.bf16.msra.mxu0 0
  %436 = vmatprep.subr.bf16.mxu0 0
  %437 = vmatpush2.bf16.msra.mxu0 0
  %438 = vmatprep.subr.bf16.mxu0 0
  %439 = vmatpush2.bf16.msra.mxu0 0
  %440 = vmatprep.subr.bf16.mxu0 0
  %441 = vmatpush2.bf16.msra.mxu0 0
  %442 = vmatprep.subr.bf16.mxu0 0
  %443 = vmatpush2.bf16.msra.mxu0 0
  %444 = vmatprep.mubr.bf16.mxu0 0
  %445 = vmatmul.mubr.bf16.gmra.mxu0 %v163
  %v446 = vpop.f32.mrf.mxu0
  %v447 = vadd.f32 %v60, %v446
  %v448 = vpop.f32.mrf.mxu0
  %v449 = vadd.f32 %v64, %v448
  %v450 = vpop.f32.mrf.mxu0
  %v451 = vadd.f32 %v60, %v450
  %v452 = vpop.f32.mrf.mxu0
  %v453 = vadd.f32 %v64, %v452
  %454 = vmatprep.mubr.bf16.mxu0 0
  %455 = vmatmul.mubr.bf16.gmra.mxu0 %v166
  %v456 = vpop.f32.mrf.mxu0
  %v457 = vadd.f32 %v60, %v456
  %v458 = vpop.f32.mrf.mxu0
  %v459 = vadd.f32 %v64, %v458
  %v460 = vpop.f32.mrf.mxu0
  %v461 = vadd.f32 %v60, %v460
  %v462 = vpop.f32.mrf.mxu0
  %v463 = vadd.f32 %v64, %v462
  %464 = vmatprep.mubr.bf16.mxu0 0
  %465 = vmatmul.mubr.bf16.gmra.mxu0 %v169
  %v466 = vpop.f32.mrf.mxu0
  %v467 = vadd.f32 %v60, %v466
  %v468 = vpop.f32.mrf.mxu0
  %v469 = vadd.f32 %v64, %v468
  %v470 = vpop.f32.mrf.mxu0
  %v471 = vadd.f32 %v60, %v470
  %v472 = vpop.f32.mrf.mxu0
  %v473 = vadd.f32 %v64, %v472
  %474 = vmatprep.mubr.bf16.mxu0 0
  %475 = vmatmul.mubr.bf16.gmra.mxu0 %v172
  %v476 = vpop.f32.mrf.mxu0
  %v477 = vadd.f32 %v60, %v476
  %v478 = vpop.f32.mrf.mxu0
  %v479 = vadd.f32 %v64, %v478
  %v480 = vpop.f32.mrf.mxu0
  %v481 = vadd.f32 %v60, %v480
  %v482 = vpop.f32.mrf.mxu0
  %v483 = vadd.f32 %v64, %v482
  %484 = vmatprep.mubr.bf16.mxu0 0
  %485 = vmatmul.mubr.bf16.gmra.mxu0 %v175
  %v486 = vpop.f32.mrf.mxu0
  %v487 = vadd.f32 %v60, %v486
  %v488 = vpop.f32.mrf.mxu0
  %v489 = vadd.f32 %v64, %v488
  %v490 = vpop.f32.mrf.mxu0
  %v491 = vadd.f32 %v60, %v490
  %v492 = vpop.f32.mrf.mxu0
  %v493 = vadd.f32 %v64, %v492
  %494 = vmatprep.mubr.bf16.mxu0 0
  %495 = vmatmul.mubr.bf16.gmra.mxu0 %v178
  %v496 = vpop.f32.mrf.mxu0
  %v497 = vadd.f32 %v60, %v496
  %v498 = vpop.f32.mrf.mxu0
  %v499 = vadd.f32 %v64, %v498
  %v500 = vpop.f32.mrf.mxu0
  %v501 = vadd.f32 %v60, %v500
  %v502 = vpop.f32.mrf.mxu0
  %v503 = vadd.f32 %v64, %v502
  %504 = vmatprep.mubr.bf16.mxu0 0
  %505 = vmatmul.mubr.bf16.gmra.mxu0 %v181
  %v506 = vpop.f32.mrf.mxu0
  %v507 = vadd.f32 %v60, %v506
  %v508 = vpop.f32.mrf.mxu0
  %v509 = vadd.f32 %v64, %v508
  %v510 = vpop.f32.mrf.mxu0
  %v511 = vadd.f32 %v60, %v510
  %v512 = vpop.f32.mrf.mxu0
  %v513 = vadd.f32 %v64, %v512
  %514 = vmatprep.mubr.bf16.mxu0 0
  %515 = vmatmul.mubr.bf16.gmra.mxu0 %v184
  %v516 = vpop.f32.mrf.mxu0
  %v517 = vadd.f32 %v60, %v516
  %v518 = vpop.f32.mrf.mxu0
  %v519 = vadd.f32 %v64, %v518
  %v520 = vpop.f32.mrf.mxu0
  %v521 = vadd.f32 %v60, %v520
  %v522 = vpop.f32.mrf.mxu0
  %v523 = vadd.f32 %v64, %v522
  %524 = vdwg.mxu0
  %525 = vmatprep.subr.bf16.mxu0 0
  %526 = vmatpush1.bf16.msra.mxu0 0
  %527 = vmatprep.subr.bf16.mxu0 0
  %528 = vmatpush1.bf16.msra.mxu0 0
  %529 = vmatprep.subr.bf16.mxu0 0
  %530 = vmatpush1.bf16.msra.mxu0 0
  %531 = vmatprep.subr.bf16.mxu0 0
  %532 = vmatpush1.bf16.msra.mxu0 0
  %533 = vmatprep.subr.bf16.mxu0 0
  %534 = vmatpush1.bf16.msra.mxu0 0
  %535 = vmatprep.subr.bf16.mxu0 0
  %536 = vmatpush1.bf16.msra.mxu0 0
  %537 = vmatprep.subr.bf16.mxu0 0
  %538 = vmatpush1.bf16.msra.mxu0 0
  %539 = vmatprep.subr.bf16.mxu0 %v152
  %540 = vmatpush1.bf16.msra.mxu0 %v151
  %541 = vmatprep.subr.bf16.mxu0 0
  %542 = vmatpush2.bf16.msra.mxu0 0
  %543 = vmatprep.subr.bf16.mxu0 0
  %544 = vmatpush2.bf16.msra.mxu0 0
  %545 = vmatprep.subr.bf16.mxu0 0
  %546 = vmatpush2.bf16.msra.mxu0 0
  %547 = vmatprep.subr.bf16.mxu0 0
  %548 = vmatpush2.bf16.msra.mxu0 0
  %549 = vmatprep.subr.bf16.mxu0 0
  %550 = vmatpush2.bf16.msra.mxu0 0
  %551 = vmatprep.subr.bf16.mxu0 0
  %552 = vmatpush2.bf16.msra.mxu0 0
  %553 = vmatprep.subr.bf16.mxu0 0
  %554 = vmatpush2.bf16.msra.mxu0 0
  %555 = vmatprep.subr.bf16.mxu0 0
  %556 = vmatpush2.bf16.msra.mxu0 0
  %557 = vmatprep.mubr.bf16.mxu0 0
  %558 = vmatmul.mubr.bf16.gmra.mxu0 %v163
  %v559 = vpop.f32.mrf.mxu0
  %v560 = vadd.f32 %v68, %v559
  %v561 = vpop.f32.mrf.mxu0
  %v562 = vadd.f32 %v72, %v561
  %v563 = vpop.f32.mrf.mxu0
  %v564 = vadd.f32 %v68, %v563
  %v565 = vpop.f32.mrf.mxu0
  %v566 = vadd.f32 %v72, %v565
  %567 = vmatprep.mubr.bf16.mxu0 0
  %568 = vmatmul.mubr.bf16.gmra.mxu0 %v166
  %v569 = vpop.f32.mrf.mxu0
  %v570 = vadd.f32 %v68, %v569
  %v571 = vpop.f32.mrf.mxu0
  %v572 = vadd.f32 %v72, %v571
  %v573 = vpop.f32.mrf.mxu0
  %v574 = vadd.f32 %v68, %v573
  %v575 = vpop.f32.mrf.mxu0
  %v576 = vadd.f32 %v72, %v575
  %577 = vmatprep.mubr.bf16.mxu0 0
  %578 = vmatmul.mubr.bf16.gmra.mxu0 %v169
  %v579 = vpop.f32.mrf.mxu0
  %v580 = vadd.f32 %v68, %v579
  %v581 = vpop.f32.mrf.mxu0
  %v582 = vadd.f32 %v72, %v581
  %v583 = vpop.f32.mrf.mxu0
  %v584 = vadd.f32 %v68, %v583
  %v585 = vpop.f32.mrf.mxu0
  %v586 = vadd.f32 %v72, %v585
  %587 = vmatprep.mubr.bf16.mxu0 0
  %588 = vmatmul.mubr.bf16.gmra.mxu0 %v172
  %v589 = vpop.f32.mrf.mxu0
  %v590 = vadd.f32 %v68, %v589
  %v591 = vpop.f32.mrf.mxu0
  %v592 = vadd.f32 %v72, %v591
  %v593 = vpop.f32.mrf.mxu0
  %v594 = vadd.f32 %v68, %v593
  %v595 = vpop.f32.mrf.mxu0
  %v596 = vadd.f32 %v72, %v595
  %597 = vmatprep.mubr.bf16.mxu0 0
  %598 = vmatmul.mubr.bf16.gmra.mxu0 %v175
  %v599 = vpop.f32.mrf.mxu0
  %v600 = vadd.f32 %v68, %v599
  %v601 = vpop.f32.mrf.mxu0
  %v602 = vadd.f32 %v72, %v601
  %v603 = vpop.f32.mrf.mxu0
  %v604 = vadd.f32 %v68, %v603
  %v605 = vpop.f32.mrf.mxu0
  %v606 = vadd.f32 %v72, %v605
  %607 = vmatprep.mubr.bf16.mxu0 0
  %608 = vmatmul.mubr.bf16.gmra.mxu0 %v178
  %v609 = vpop.f32.mrf.mxu0
  %v610 = vadd.f32 %v68, %v609
  %v611 = vpop.f32.mrf.mxu0
  %v612 = vadd.f32 %v72, %v611
  %v613 = vpop.f32.mrf.mxu0
  %v614 = vadd.f32 %v68, %v613
  %v615 = vpop.f32.mrf.mxu0
  %v616 = vadd.f32 %v72, %v615
  %617 = vmatprep.mubr.bf16.mxu0 0
  %618 = vmatmul.mubr.bf16.gmra.mxu0 %v181
  %v619 = vpop.f32.mrf.mxu0
  %v620 = vadd.f32 %v68, %v619
  %v621 = vpop.f32.mrf.mxu0
  %v622 = vadd.f32 %v72, %v621
  %v623 = vpop.f32.mrf.mxu0
  %v624 = vadd.f32 %v68, %v623
  %v625 = vpop.f32.mrf.mxu0
  %v626 = vadd.f32 %v72, %v625
  %627 = vmatprep.mubr.bf16.mxu0 0
  %628 = vmatmul.mubr.bf16.gmra.mxu0 %v184
  %v629 = vpop.f32.mrf.mxu0
  %v630 = vadd.f32 %v68, %v629
  %v631 = vpop.f32.mrf.mxu0
  %v632 = vadd.f32 %v72, %v631
  %v633 = vpop.f32.mrf.mxu0
  %v634 = vadd.f32 %v68, %v633
  %v635 = vpop.f32.mrf.mxu0
  %v636 = vadd.f32 %v72, %v635
  %637 = vdwg.mxu0
  %v638 = vpack.c.bf16 %v225, %v221
  %v639 = vpack.c.bf16 %v227, %v223
  %v640 = vpack.c.bf16 %v338, %v334
  %v641 = vpack.c.bf16 %v340, %v336
  %v642 = vpack.c.bf16 %v451, %v447
  %v643 = vpack.c.bf16 %v453, %v449
  %v644 = vpack.c.bf16 %v564, %v560
  %v645 = vpack.c.bf16 %v566, %v562
  %v646 = vpack.c.bf16 %v235, %v231
  %v647 = vpack.c.bf16 %v237, %v233
  %v648 = vpack.c.bf16 %v348, %v344
  %v649 = vpack.c.bf16 %v350, %v346
  %v650 = vpack.c.bf16 %v461, %v457
  %v651 = vpack.c.bf16 %v463, %v459
  %v652 = vpack.c.bf16 %v574, %v570
  %v653 = vpack.c.bf16 %v576, %v572
  %v654 = vpack.c.bf16 %v245, %v241
  %v655 = vpack.c.bf16 %v247, %v243
  %v656 = vpack.c.bf16 %v358, %v354
  %v657 = vpack.c.bf16 %v360, %v356
  %v658 = vpack.c.bf16 %v471, %v467
  %v659 = vpack.c.bf16 %v473, %v469
  %v660 = vpack.c.bf16 %v584, %v580
  %v661 = vpack.c.bf16 %v586, %v582
  %v662 = vpack.c.bf16 %v255, %v251
  %v663 = vpack.c.bf16 %v257, %v253
  %v664 = vpack.c.bf16 %v368, %v364
  %v665 = vpack.c.bf16 %v370, %v366
  %v666 = vpack.c.bf16 %v481, %v477
  %v667 = vpack.c.bf16 %v483, %v479
  %v668 = vpack.c.bf16 %v594, %v590
  %v669 = vpack.c.bf16 %v596, %v592
  %v670 = vpack.c.bf16 %v265, %v261
  %v671 = vpack.c.bf16 %v267, %v263
  %v672 = vpack.c.bf16 %v378, %v374
  %v673 = vpack.c.bf16 %v380, %v376
  %v674 = vpack.c.bf16 %v491, %v487
  %v675 = vpack.c.bf16 %v493, %v489
  %v676 = vpack.c.bf16 %v604, %v600
  %v677 = vpack.c.bf16 %v606, %v602
  %v678 = vpack.c.bf16 %v275, %v271
  %v679 = vpack.c.bf16 %v277, %v273
  %v680 = vpack.c.bf16 %v388, %v384
  %v681 = vpack.c.bf16 %v390, %v386
  %v682 = vpack.c.bf16 %v501, %v497
  %v683 = vpack.c.bf16 %v503, %v499
  %v684 = vpack.c.bf16 %v614, %v610
  %v685 = vpack.c.bf16 %v616, %v612
  %v686 = vpack.c.bf16 %v285, %v281
  %v687 = vpack.c.bf16 %v287, %v283
  %v688 = vpack.c.bf16 %v398, %v394
  %v689 = vpack.c.bf16 %v400, %v396
  %v690 = vpack.c.bf16 %v511, %v507
  %v691 = vpack.c.bf16 %v513, %v509
  %v692 = vpack.c.bf16 %v624, %v620
  %v693 = vpack.c.bf16 %v626, %v622
  %v694 = vpack.c.bf16 %v295, %v291
  %v695 = vpack.c.bf16 %v297, %v293
  %v696 = vpack.c.bf16 %v408, %v404
  %v697 = vpack.c.bf16 %v410, %v406
  %v698 = vpack.c.bf16 %v521, %v517
  %v699 = vpack.c.bf16 %v523, %v519
  %v700 = vpack.c.bf16 %v634, %v630
  %v701 = vpack.c.bf16 %v636, %v632
  %v766 = vunpack.c.l.b16 %v638
  %v767 = vunpack.c.l.b16 %v639
  %v768 = vunpack.c.l.b16 %v640
  %v769 = vunpack.c.l.b16 %v641
  %v770 = vunpack.c.l.b16 %v642
  %v771 = vunpack.c.l.b16 %v643
  %v772 = vunpack.c.l.b16 %v644
  %v773 = vunpack.c.l.b16 %v645
  %v774 = vunpack.c.h.b16 %v638
  %v775 = vunpack.c.h.b16 %v639
  %v776 = vunpack.c.h.b16 %v640
  %v777 = vunpack.c.h.b16 %v641
  %v778 = vunpack.c.h.b16 %v642
  %v779 = vunpack.c.h.b16 %v643
  %v780 = vunpack.c.h.b16 %v644
  %v781 = vunpack.c.h.b16 %v645
  %v782 = vunpack.c.l.b16 %v646
  %v783 = vunpack.c.l.b16 %v647
  %v784 = vunpack.c.l.b16 %v648
  %v785 = vunpack.c.l.b16 %v649
  %v786 = vunpack.c.l.b16 %v650
  %v787 = vunpack.c.l.b16 %v651
  %v788 = vunpack.c.l.b16 %v652
  %v789 = vunpack.c.l.b16 %v653
  %v790 = vunpack.c.h.b16 %v646
  %v791 = vunpack.c.h.b16 %v647
  %v792 = vunpack.c.h.b16 %v648
  %v793 = vunpack.c.h.b16 %v649
  %v794 = vunpack.c.h.b16 %v650
  %v795 = vunpack.c.h.b16 %v651
  %v796 = vunpack.c.h.b16 %v652
  %v797 = vunpack.c.h.b16 %v653
  %v798 = vunpack.c.l.b16 %v654
  %v799 = vunpack.c.l.b16 %v655
  %v800 = vunpack.c.l.b16 %v656
  %v801 = vunpack.c.l.b16 %v657
  %v802 = vunpack.c.l.b16 %v658
  %v803 = vunpack.c.l.b16 %v659
  %v804 = vunpack.c.l.b16 %v660
  %v805 = vunpack.c.l.b16 %v661
  %v806 = vunpack.c.h.b16 %v654
  %v807 = vunpack.c.h.b16 %v655
  %v808 = vunpack.c.h.b16 %v656
  %v809 = vunpack.c.h.b16 %v657
  %v810 = vunpack.c.h.b16 %v658
  %v811 = vunpack.c.h.b16 %v659
  %v812 = vunpack.c.h.b16 %v660
  %v813 = vunpack.c.h.b16 %v661
  %v814 = vunpack.c.l.b16 %v662
  %v815 = vunpack.c.l.b16 %v663
  %v816 = vunpack.c.l.b16 %v664
  %v817 = vunpack.c.l.b16 %v665
  %v818 = vunpack.c.l.b16 %v666
  %v819 = vunpack.c.l.b16 %v667
  %v820 = vunpack.c.l.b16 %v668
  %v821 = vunpack.c.l.b16 %v669
  %v822 = vunpack.c.h.b16 %v662
  %v823 = vunpack.c.h.b16 %v663
  %v824 = vunpack.c.h.b16 %v664
  %v825 = vunpack.c.h.b16 %v665
  %v826 = vunpack.c.h.b16 %v666
  %v827 = vunpack.c.h.b16 %v667
  %v828 = vunpack.c.h.b16 %v668
  %v829 = vunpack.c.h.b16 %v669
  %v830 = vunpack.c.l.b16 %v670
  %v831 = vunpack.c.l.b16 %v671
  %v832 = vunpack.c.l.b16 %v672
  %v833 = vunpack.c.l.b16 %v673
  %v834 = vunpack.c.l.b16 %v674
  %v835 = vunpack.c.l.b16 %v675
  %v836 = vunpack.c.l.b16 %v676
  %v837 = vunpack.c.l.b16 %v677
  %v838 = vunpack.c.h.b16 %v670
  %v839 = vunpack.c.h.b16 %v671
  %v840 = vunpack.c.h.b16 %v672
  %v841 = vunpack.c.h.b16 %v673
  %v842 = vunpack.c.h.b16 %v674
  %v843 = vunpack.c.h.b16 %v675
  %v844 = vunpack.c.h.b16 %v676
  %v845 = vunpack.c.h.b16 %v677
  %v846 = vunpack.c.l.b16 %v678
  %v847 = vunpack.c.l.b16 %v679
  %v848 = vunpack.c.l.b16 %v680
  %v849 = vunpack.c.l.b16 %v681
  %v850 = vunpack.c.l.b16 %v682
  %v851 = vunpack.c.l.b16 %v683
  %v852 = vunpack.c.l.b16 %v684
  %v853 = vunpack.c.l.b16 %v685
  %v854 = vunpack.c.h.b16 %v678
  %v855 = vunpack.c.h.b16 %v679
  %v856 = vunpack.c.h.b16 %v680
  %v857 = vunpack.c.h.b16 %v681
  %v858 = vunpack.c.h.b16 %v682
  %v859 = vunpack.c.h.b16 %v683
  %v860 = vunpack.c.h.b16 %v684
  %v861 = vunpack.c.h.b16 %v685
  %v862 = vunpack.c.l.b16 %v686
  %v863 = vunpack.c.l.b16 %v687
  %v864 = vunpack.c.l.b16 %v688
  %v865 = vunpack.c.l.b16 %v689
  %v866 = vunpack.c.l.b16 %v690
  %v867 = vunpack.c.l.b16 %v691
  %v868 = vunpack.c.l.b16 %v692
  %v869 = vunpack.c.l.b16 %v693
  %v870 = vunpack.c.h.b16 %v686
  %v871 = vunpack.c.h.b16 %v687
  %v872 = vunpack.c.h.b16 %v688
  %v873 = vunpack.c.h.b16 %v689
  %v874 = vunpack.c.h.b16 %v690
  %v875 = vunpack.c.h.b16 %v691
  %v876 = vunpack.c.h.b16 %v692
  %v877 = vunpack.c.h.b16 %v693
  %v878 = vunpack.c.l.b16 %v694
  %v879 = vunpack.c.l.b16 %v695
  %v880 = vunpack.c.l.b16 %v696
  %v881 = vunpack.c.l.b16 %v697
  %v882 = vunpack.c.l.b16 %v698
  %v883 = vunpack.c.l.b16 %v699
  %v884 = vunpack.c.l.b16 %v700
  %v885 = vunpack.c.l.b16 %v701
  %v886 = vunpack.c.h.b16 %v694
  %v887 = vunpack.c.h.b16 %v695
  %v888 = vunpack.c.h.b16 %v696
  %v889 = vunpack.c.h.b16 %v697
  %v890 = vunpack.c.h.b16 %v698
  %v891 = vunpack.c.h.b16 %v699
  %v892 = vunpack.c.h.b16 %v700
  %v893 = vunpack.c.h.b16 %v701
  %v894 = vpack.c.b16 %v767, %v766
  %v895 = vpack.c.b16 %v769, %v768
  %v896 = vpack.c.b16 %v771, %v770
  %v897 = vpack.c.b16 %v773, %v772
  %v898 = vpack.c.b16 %v775, %v774
  %v899 = vpack.c.b16 %v777, %v776
  %v900 = vpack.c.b16 %v779, %v778
  %v901 = vpack.c.b16 %v781, %v780
  %v902 = vpack.c.b16 %v783, %v782
  %v903 = vpack.c.b16 %v785, %v784
  %v904 = vpack.c.b16 %v787, %v786
  %v905 = vpack.c.b16 %v789, %v788
  %v906 = vpack.c.b16 %v791, %v790
  %v907 = vpack.c.b16 %v793, %v792
  %v908 = vpack.c.b16 %v795, %v794
  %v909 = vpack.c.b16 %v797, %v796
  %v910 = vpack.c.b16 %v799, %v798
  %v911 = vpack.c.b16 %v801, %v800
  %v912 = vpack.c.b16 %v803, %v802
  %v913 = vpack.c.b16 %v805, %v804
  %v914 = vpack.c.b16 %v807, %v806
  %v915 = vpack.c.b16 %v809, %v808
  %v916 = vpack.c.b16 %v811, %v810
  %v917 = vpack.c.b16 %v813, %v812
  %v918 = vpack.c.b16 %v815, %v814
  %v919 = vpack.c.b16 %v817, %v816
  %v920 = vpack.c.b16 %v819, %v818
  %v921 = vpack.c.b16 %v821, %v820
  %v922 = vpack.c.b16 %v823, %v822
  %v923 = vpack.c.b16 %v825, %v824
  %v924 = vpack.c.b16 %v827, %v826
  %v925 = vpack.c.b16 %v829, %v828
  %v926 = vpack.c.b16 %v831, %v830
  %v927 = vpack.c.b16 %v833, %v832
  %v928 = vpack.c.b16 %v835, %v834
  %v929 = vpack.c.b16 %v837, %v836
  %v930 = vpack.c.b16 %v839, %v838
  %v931 = vpack.c.b16 %v841, %v840
  %v932 = vpack.c.b16 %v843, %v842
  %v933 = vpack.c.b16 %v845, %v844
  %v934 = vpack.c.b16 %v847, %v846
  %v935 = vpack.c.b16 %v849, %v848
  %v936 = vpack.c.b16 %v851, %v850
  %v937 = vpack.c.b16 %v853, %v852
  %v938 = vpack.c.b16 %v855, %v854
  %v939 = vpack.c.b16 %v857, %v856
  %v940 = vpack.c.b16 %v859, %v858
  %v941 = vpack.c.b16 %v861, %v860
  %v942 = vpack.c.b16 %v863, %v862
  %v943 = vpack.c.b16 %v865, %v864
  %v944 = vpack.c.b16 %v867, %v866
  %v945 = vpack.c.b16 %v869, %v868
  %v946 = vpack.c.b16 %v871, %v870
  %v947 = vpack.c.b16 %v873, %v872
  %v948 = vpack.c.b16 %v875, %v874
  %v949 = vpack.c.b16 %v877, %v876
  %v950 = vpack.c.b16 %v879, %v878
  %v951 = vpack.c.b16 %v881, %v880
  %v952 = vpack.c.b16 %v883, %v882
  %v953 = vpack.c.b16 %v885, %v884
  %v954 = vpack.c.b16 %v887, %v886
  %v955 = vpack.c.b16 %v889, %v888
  %v956 = vpack.c.b16 %v891, %v890
  %v957 = vpack.c.b16 %v893, %v892
  %1022 = vst [vmem:[%s3] sm:$0xff] %v894
  %1023 = vst [vmem:[%s3 + $0x8] sm:$0xff] %v895
  %1024 = vst [vmem:[%s3 + $0x10] sm:$0xff] %v896
  %1025 = vst [vmem:[%s3 + $0x18] sm:$0xff] %v897
  %1026 = vst [vmem:[%s3 + $0x20] sm:$0xff] %v898
  %1027 = vst [vmem:[%s3 + $0x28] sm:$0xff] %v899
  %1028 = vst [vmem:[%s3 + $0x30] sm:$0xff] %v900
  %1029 = vst [vmem:[%s3 + $0x38] sm:$0xff] %v901
  %1030 = vst [vmem:[%s3 + $0x40] sm:$0xff] %v902
  %1031 = vst [vmem:[%s3 + $0x48] sm:$0xff] %v903
  %1032 = vst [vmem:[%s3 + $0x50] sm:$0xff] %v904
  %1033 = vst [vmem:[%s3 + $0x58] sm:$0xff] %v905
  %1034 = vst [vmem:[%s3 + $0x60] sm:$0xff] %v906
  %1035 = vst [vmem:[%s3 + $0x68] sm:$0xff] %v907
  %1036 = vst [vmem:[%s3 + $0x70] sm:$0xff] %v908
  %1037 = vst [vmem:[%s3 + $0x78] sm:$0xff] %v909
  %1038 = vst [vmem:[%s3 + $0x80] sm:$0xff] %v910
  %1039 = vst [vmem:[%s3 + $0x88] sm:$0xff] %v911
  %1040 = vst [vmem:[%s3 + $0x90] sm:$0xff] %v912
  %1041 = vst [vmem:[%s3 + $0x98] sm:$0xff] %v913
  %1042 = vst [vmem:[%s3 + $0xa0] sm:$0xff] %v914
  %1043 = vst [vmem:[%s3 + $0xa8] sm:$0xff] %v915
  %1044 = vst [vmem:[%s3 + $0xb0] sm:$0xff] %v916
  %1045 = vst [vmem:[%s3 + $0xb8] sm:$0xff] %v917
  %1046 = vst [vmem:[%s3 + $0xc0] sm:$0xff] %v918
  %1047 = vst [vmem:[%s3 + $0xc8] sm:$0xff] %v919
  %1048 = vst [vmem:[%s3 + $0xd0] sm:$0xff] %v920
  %1049 = vst [vmem:[%s3 + $0xd8] sm:$0xff] %v921
  %1050 = vst [vmem:[%s3 + $0xe0] sm:$0xff] %v922
  %1051 = vst [vmem:[%s3 + $0xe8] sm:$0xff] %v923
  %1052 = vst [vmem:[%s3 + $0xf0] sm:$0xff] %v924
  %1053 = vst [vmem:[%s3 + $0xf8] sm:$0xff] %v925
  %1054 = vst [vmem:[%s3 + $0x100] sm:$0xff] %v926
  %1055 = vst [vmem:[%s3 + $0x108] sm:$0xff] %v927
  %1056 = vst [vmem:[%s3 + $0x110] sm:$0xff] %v928
  %1057 = vst [vmem:[%s3 + $0x118] sm:$0xff] %v929
  %1058 = vst [vmem:[%s3 + $0x120] sm:$0xff] %v930
  %1059 = vst [vmem:[%s3 + $0x128] sm:$0xff] %v931
  %1060 = vst [vmem:[%s3 + $0x130] sm:$0xff] %v932
  %1061 = vst [vmem:[%s3 + $0x138] sm:$0xff] %v933
  %1062 = vst [vmem:[%s3 + $0x140] sm:$0xff] %v934
  %1063 = vst [vmem:[%s3 + $0x148] sm:$0xff] %v935
  %1064 = vst [vmem:[%s3 + $0x150] sm:$0xff] %v936
  %1065 = vst [vmem:[%s3 + $0x158] sm:$0xff] %v937
  %1066 = vst [vmem:[%s3 + $0x160] sm:$0xff] %v938
  %1067 = vst [vmem:[%s3 + $0x168] sm:$0xff] %v939
  %1068 = vst [vmem:[%s3 + $0x170] sm:$0xff] %v940
  %1069 = vst [vmem:[%s3 + $0x178] sm:$0xff] %v941
  %1070 = vst [vmem:[%s3 + $0x180] sm:$0xff] %v942
  %1071 = vst [vmem:[%s3 + $0x188] sm:$0xff] %v943
  %1072 = vst [vmem:[%s3 + $0x190] sm:$0xff] %v944
  %1073 = vst [vmem:[%s3 + $0x198] sm:$0xff] %v945
  %1074 = vst [vmem:[%s3 + $0x1a0] sm:$0xff] %v946
  %1075 = vst [vmem:[%s3 + $0x1a8] sm:$0xff] %v947
  %1076 = vst [vmem:[%s3 + $0x1b0] sm:$0xff] %v948
  %1077 = vst [vmem:[%s3 + $0x1b8] sm:$0xff] %v949
  %1078 = vst [vmem:[%s3 + $0x1c0] sm:$0xff] %v950
  %1079 = vst [vmem:[%s3 + $0x1c8] sm:$0xff] %v951
  %1080 = vst [vmem:[%s3 + $0x1d0] sm:$0xff] %v952
  %1081 = vst [vmem:[%s3 + $0x1d8] sm:$0xff] %v953
  %1082 = vst [vmem:[%s3 + $0x1e0] sm:$0xff] %v954
  %1083 = vst [vmem:[%s3 + $0x1e8] sm:$0xff] %v955
  %1084 = vst [vmem:[%s3 + $0x1f0] sm:$0xff] %v956
  %1085 = vst [vmem:[%s3 + $0x1f8] sm:$0xff] %v957
  // Predicated region
  $region14: #{bilstm_fc_forward.3} parent=0 // pred_check
    _
  $region15: #{bilstm_fc_forward.3} parent=0 // pred_check_branch
    %1087 = sbr.rel (0) target = $region17
  $region16: #{bilstm_fc_forward.3} parent=0 // pred_region
    _
  $region17: #{bilstm_fc_forward.3} parent=0 // pred_fallthru
    _
  // Predicated region
  $region18: #{bilstm_fc_forward.3} parent=0 // pred_check
    _
  $region19: #{bilstm_fc_forward.3} parent=0 // pred_check_branch
    %1089 = sbr.rel (0) target = $region21
  $region20: #{bilstm_fc_forward.3} parent=0 // pred_region
    _
  $region21: #{bilstm_fc_forward.3} parent=0 // pred_fallthru
    _

// kernel: bilstm_fc_forward.4
$region0: #{bilstm_fc_forward.4}
  #allocation0 [shape = 'u32[]', space=smem, size = 0x4, offset = 0x4, fixed_abs, tag = 'smem constant byte address 0x4 - core index']
  #allocation1 [shape = 'u32[144,128]{1,0:T(1,128)}', space=vmem, size = 0x12000, scoped, tag = 'internal scratch']
  #allocation2 [shape = 'f32[16,256]{1,0:T(8,128)}', space=vmem, size = 0x4000, scoped, tag = 'scratch operand']
  #allocation3 [shape = 'f32[16,256]{1,0:T(8,128)}', space=vmem, size = 0x4000, scoped, tag = 'scratch operand']
  %s0 = inlined_call_operand.vmem [shape: s32[16,1], index: 0, kind: input, shape index: {}]
  %s1 = inlined_call_operand.vmem [shape: bf16[8,16,1024], index: 1, kind: input, shape index: {}, may-alias: {1,2}]
  %s2 = inlined_call_operand.vmem [shape: bf16[8,16,1024], index: 2, kind: input, shape index: {}, may-alias: {1,2}]
  %s3 = inlined_call_operand.vmem [shape: bf16[256,1024], index: 3, kind: input, shape index: {}]
  %s4 = inlined_call_operand.vmem [shape: bf16[8,16,128], index: 4, kind: output, shape index: {0}]
  %s5 = inlined_call_operand.vmem [shape: bf16[8,16,128], index: 5, kind: output, shape index: {1}]
  %6 = xla_tuple %s4, %s5
  %s7 = sld [smem:[#allocation0]]
  $region107: #{bilstm_fc_forward.4} parent=0
    _
  %s9 = ssub.s32 1, %s7
  %s10 = scalar_select 0, %s9, %s7
  $region1: #{bilstm_fc_forward.4} parent=0
    #allocation4 [shape = 'u8[131072]{0}', space=vmem, size = 0x20000, scoped, tag = 'input window, operand 1']
    #allocation5 [shape = 'u8[131072]{0}', space=vmem, size = 0x20000, scoped, tag = 'input window, operand 2']
    loop: start=0, step=1, limit=4
    $region2: #{bilstm_fc_forward.4} parent=1 // loop_pre_header
      _
    $region3: #{bilstm_fc_forward.4} parent=1 // loop_header
      %s12 = sphi 0, %s16
      %p13 = scmp.ge.s32.totalorder %s12, 4
      %s20 = sphi 0, %s20
      %s22 = sphi 0, %s20
      %s23 = sphi 0, %s22
      %s37 = sphi 0, %s23
      %s43 = sphi 0, %s45
      %s46 = sphi 0, %s43
      %s47 = sphi 0, %s46
      %s63 = sphi 0, %s47
      %s71 = sphi 0, %s73
      %s74 = sphi 0, %s71
      %s75 = sphi 0, %s74
      %s91 = sphi 0, %s75
      %s95 = sphi 0, %s95
      %s97 = sphi 0, %s95
      %s98 = sphi 0, %s97
      %s112 = sphi 0, %s98
      %s118 = sphi 0, %s120
      %s121 = sphi 0, %s118
      %s122 = sphi 0, %s121
      %s138 = sphi 0, %s122
      %s146 = sphi 0, %s148
      %s149 = sphi 0, %s146
      %s150 = sphi 0, %s149
      %s166 = sphi 0, %s150
    $region4: #{bilstm_fc_forward.4} parent=1 // loop_header_branch
      %15 = sbr.rel (%p13) target = $region8
    $region5: #{bilstm_fc_forward.4} parent=1 // loop_body
      %s17 = ssub.s32 %s12, 1
      %s18 = ssub.s32 %s12, 2
      %s19 = sadd.s32 %s12, 1
      %s21 = sadd.s32 %s20, 1
      %p24 = scmp.eq.s32.totalorder %s12, 1
      %p25 = scmp.ne.s32.totalorder %s20, %s22
      %p26 = scmp.eq.s32.totalorder %s12, 0
      %p27 = por %p25, %p26
      %p28 = scmp.ne.s32.totalorder %s20, %s22
      %p29 = scmp.eq.s32.totalorder %s17, 1
      %p30 = por %p28, %p29
      %p31 = scmp.ne.s32.totalorder %s22, %s23
      %p32 = scmp.eq.s32.totalorder %s17, 0
      %p33 = por %p31, %p32
      %p34 = scmp.ne.s32.totalorder %s22, %s23
      %p35 = scmp.eq.s32.totalorder %s18, 1
      %p36 = por %p34, %p35
      %p38 = scmp.ne.s32.totalorder %s23, %s37
      %p39 = scmp.eq.s32.totalorder %s18, 0
      %p40 = por %p38, %p39
      %s41 = ssub.s32 %s12, %s19
      %p42 = scmp.eq.s32.totalorder %s41, 0
      %s44 = sadd.s32 %s43, 1
      %s45 = scalar_select %p42, %s43, %s44
      %p48 = pneg %p42
      %p49 = scmp.eq.s32.totalorder %s12, 1
      %p50 = por %p48, %p49
      %p51 = scmp.ne.s32.totalorder %s43, %s46
      %p52 = scmp.eq.s32.totalorder %s12, 0
      %p53 = por %p51, %p52
      %p54 = scmp.ne.s32.totalorder %s43, %s46
      %p55 = scmp.eq.s32.totalorder %s17, 1
      %p56 = por %p54, %p55
      %p57 = scmp.ne.s32.totalorder %s46, %s47
      %p58 = scmp.eq.s32.totalorder %s17, 0
      %p59 = por %p57, %p58
      %p60 = scmp.ne.s32.totalorder %s46, %s47
      %p61 = scmp.eq.s32.totalorder %s18, 1
      %p62 = por %p60, %p61
      %p64 = scmp.ne.s32.totalorder %s47, %s63
      %p65 = scmp.eq.s32.totalorder %s18, 0
      %p66 = por %p64, %p65
      %s67 = ssub.s32 1, %s12
      %s68 = ssub.s32 1, %s19
      %s69 = ssub.s32 %s67, %s68
      %p70 = scmp.eq.s32.totalorder %s69, 0
      %s72 = sadd.s32 %s71, 1
      %s73 = scalar_select %p70, %s71, %s72
      %p76 = pneg %p70
      %p77 = scmp.eq.s32.totalorder %s12, 1
      %p78 = por %p76, %p77
      %p79 = scmp.ne.s32.totalorder %s71, %s74
      %p80 = scmp.eq.s32.totalorder %s12, 0
      %p81 = por %p79, %p80
      %p82 = scmp.ne.s32.totalorder %s71, %s74
      %p83 = scmp.eq.s32.totalorder %s17, 1
      %p84 = por %p82, %p83
      %p85 = scmp.ne.s32.totalorder %s74, %s75
      %p86 = scmp.eq.s32.totalorder %s17, 0
      %p87 = por %p85, %p86
      %p88 = scmp.ne.s32.totalorder %s74, %s75
      %p89 = scmp.eq.s32.totalorder %s18, 1
      %p90 = por %p88, %p89
      %p92 = scmp.ne.s32.totalorder %s75, %s91
      %p93 = scmp.eq.s32.totalorder %s18, 0
      %p94 = por %p92, %p93
      %s96 = sadd.s32 %s95, 1
      %p99 = scmp.eq.s32.totalorder %s12, 1
      %p100 = scmp.ne.s32.totalorder %s95, %s97
      %p101 = scmp.eq.s32.totalorder %s12, 0
      %p102 = por %p100, %p101
      %p103 = scmp.ne.s32.totalorder %s95, %s97
      %p104 = scmp.eq.s32.totalorder %s17, 1
      %p105 = por %p103, %p104
      %p106 = scmp.ne.s32.totalorder %s97, %s98
      %p107 = scmp.eq.s32.totalorder %s17, 0
      %p108 = por %p106, %p107
      %p109 = scmp.ne.s32.totalorder %s97, %s98
      %p110 = scmp.eq.s32.totalorder %s18, 1
      %p111 = por %p109, %p110
      %p113 = scmp.ne.s32.totalorder %s98, %s112
      %p114 = scmp.eq.s32.totalorder %s18, 0
      %p115 = por %p113, %p114
      %s116 = ssub.s32 %s12, %s19
      %p117 = scmp.eq.s32.totalorder %s116, 0
      %s119 = sadd.s32 %s118, 1
      %s120 = scalar_select %p117, %s118, %s119
      %p123 = pneg %p117
      %p124 = scmp.eq.s32.totalorder %s12, 1
      %p125 = por %p123, %p124
      %p126 = scmp.ne.s32.totalorder %s118, %s121
      %p127 = scmp.eq.s32.totalorder %s12, 0
      %p128 = por %p126, %p127
      %p129 = scmp.ne.s32.totalorder %s118, %s121
      %p130 = scmp.eq.s32.totalorder %s17, 1
      %p131 = por %p129, %p130
      %p132 = scmp.ne.s32.totalorder %s121, %s122
      %p133 = scmp.eq.s32.totalorder %s17, 0
      %p134 = por %p132, %p133
      %p135 = scmp.ne.s32.totalorder %s121, %s122
      %p136 = scmp.eq.s32.totalorder %s18, 1
      %p137 = por %p135, %p136
      %p139 = scmp.ne.s32.totalorder %s122, %s138
      %p140 = scmp.eq.s32.totalorder %s18, 0
      %p141 = por %p139, %p140
      %s142 = ssub.s32 1, %s12
      %s143 = ssub.s32 1, %s19
      %s144 = ssub.s32 %s142, %s143
      %p145 = scmp.eq.s32.totalorder %s144, 0
      %s147 = sadd.s32 %s146, 1
      %s148 = scalar_select %p145, %s146, %s147
      %p151 = pneg %p145
      %p152 = scmp.eq.s32.totalorder %s12, 1
      %p153 = por %p151, %p152
      %p154 = scmp.ne.s32.totalorder %s146, %s149
      %p155 = scmp.eq.s32.totalorder %s12, 0
      %p156 = por %p154, %p155
      %p157 = scmp.ne.s32.totalorder %s146, %s149
      %p158 = scmp.eq.s32.totalorder %s17, 1
      %p159 = por %p157, %p158
      %p160 = scmp.ne.s32.totalorder %s149, %s150
      %p161 = scmp.eq.s32.totalorder %s17, 0
      %p162 = por %p160, %p161
      %p163 = scmp.ne.s32.totalorder %s149, %s150
      %p164 = scmp.eq.s32.totalorder %s18, 1
      %p165 = por %p163, %p164
      %p167 = scmp.ne.s32.totalorder %s150, %s166
      %p168 = scmp.eq.s32.totalorder %s18, 0
      %p169 = por %p167, %p168
      %p170 = scmp.le.s32.totalorder 1, %s12
      %p171 = scmp.lt.s32.totalorder %s12, 3
      %p172 = pnand %p170, %p171
      %p173 = pneg %p172
      // Predicated region
      $region9: #{bilstm_fc_forward.4} parent=5 // pred_check
        _
      $region10: #{bilstm_fc_forward.4} parent=5 // pred_check_branch
        %175 = sbr.rel (%p172) target = $region12
      $region11: #{bilstm_fc_forward.4} parent=5 // pred_region
        %s176 = ssub.s32 %s12, 1
        // Predicated region
        $region13: #{bilstm_fc_forward.4} parent=11 // pred_check
          %p177 = pneg %p33
        $region14: #{bilstm_fc_forward.4} parent=11 // pred_check_branch
          %179 = sbr.rel (%p177) target = $region16
        $region15: #{bilstm_fc_forward.4} parent=11 // pred_region
          _
        $region16: #{bilstm_fc_forward.4} parent=11 // pred_fallthru
          _
        // Predicated region
        $region17: #{bilstm_fc_forward.4} parent=11 // pred_check
          %p180 = pneg %p108
        $region18: #{bilstm_fc_forward.4} parent=11 // pred_check_branch
          %182 = sbr.rel (%p180) target = $region20
        $region19: #{bilstm_fc_forward.4} parent=11 // pred_region
          _
        $region20: #{bilstm_fc_forward.4} parent=11 // pred_fallthru
          _
      $region12: #{bilstm_fc_forward.4} parent=5 // pred_fallthru
        _
      %p183 = scmp.lt.s32.totalorder %s12, 2
      // Predicated region
      $region21: #{bilstm_fc_forward.4} parent=5 // pred_check
        %p184 = pneg %p183
      $region22: #{bilstm_fc_forward.4} parent=5 // pred_check_branch
        %186 = sbr.rel (%p184) target = $region24
      $region23: #{bilstm_fc_forward.4} parent=5 // pred_region
        // Predicated region
        $region25: #{bilstm_fc_forward.4} parent=23 // pred_check
          %p187 = pneg %p53
        $region26: #{bilstm_fc_forward.4} parent=23 // pred_check_branch
          %189 = sbr.rel (%p187) target = $region28
        $region27: #{bilstm_fc_forward.4} parent=23 // pred_region
          %s190 = sand.u32 %s43, 1
          %s191 = sand.u32 %s43, 1
          %s192 = smul.addr %s191, 128
          %s193 = scalar_lea.vmem [#allocation4], %s192
          %s194 = smul.u32 4, %s12
          %s195 = smul.addr %s194, 16
          %s196 = smul.addr %s195, 4
          %s197 = scalar_lea.vmem %s1, %s196
          // Predicated region
          $region29: #{bilstm_fc_forward.4} parent=27 // pred_check
            _
          $region30: #{bilstm_fc_forward.4} parent=27 // pred_check_branch
            %199 = sbr.rel (0) target = $region32
          $region31: #{bilstm_fc_forward.4} parent=27 // pred_region
            // Predicated region
            $region33: #{bilstm_fc_forward.4} parent=31 // pred_check
              _
            $region34: #{bilstm_fc_forward.4} parent=31 // pred_check_branch
              %201 = sbr.rel (0) target = $region36
            $region35: #{bilstm_fc_forward.4} parent=31 // pred_region
              loop: start=0, step=1, limit=1
              $region37: #{bilstm_fc_forward.4} parent=35 // loop_pre_header
                _
              $region38: #{bilstm_fc_forward.4} parent=35 // loop_header
                %s203 = sphi 0, %s207
                %p204 = scmp.ge.s32.totalorder %s203, 1
                %s208 = sphi %s197, %s197
                %s209 = sphi %s193, %s193
              $region39: #{bilstm_fc_forward.4} parent=35 // loop_header_branch
                %206 = sbr.rel (%p204) target = $region43
              $region40: #{bilstm_fc_forward.4} parent=35 // loop_body
                %v210 = vld [vmem:[%s208] sm:$0xff]
                %211 = vst [vmem:[%s209] sm:$0xff] %v210
                %v212 = vld [vmem:[%s208 + $0x8] sm:$0xff]
                %213 = vst [vmem:[%s209 + $0x8] sm:$0xff] %v212
                %v214 = vld [vmem:[%s208 + $0x20] sm:$0xff]
                %215 = vst [vmem:[%s209 + $0x10] sm:$0xff] %v214
                %v216 = vld [vmem:[%s208 + $0x28] sm:$0xff]
                %217 = vst [vmem:[%s209 + $0x18] sm:$0xff] %v216
                %v218 = vld [vmem:[%s208 + $0x40] sm:$0xff]
                %219 = vst [vmem:[%s209 + $0x20] sm:$0xff] %v218
                %v220 = vld [vmem:[%s208 + $0x48] sm:$0xff]
                %221 = vst [vmem:[%s209 + $0x28] sm:$0xff] %v220
                %v222 = vld [vmem:[%s208 + $0x60] sm:$0xff]
                %223 = vst [vmem:[%s209 + $0x30] sm:$0xff] %v222
                %v224 = vld [vmem:[%s208 + $0x68] sm:$0xff]
                %225 = vst [vmem:[%s209 + $0x38] sm:$0xff] %v224
                %v226 = vld [vmem:[%s208 + $0x80] sm:$0xff]
                %227 = vst [vmem:[%s209 + $0x40] sm:$0xff] %v226
                %v228 = vld [vmem:[%s208 + $0x88] sm:$0xff]
                %229 = vst [vmem:[%s209 + $0x48] sm:$0xff] %v228
                %v230 = vld [vmem:[%s208 + $0xa0] sm:$0xff]
                %231 = vst [vmem:[%s209 + $0x50] sm:$0xff] %v230
                %v232 = vld [vmem:[%s208 + $0xa8] sm:$0xff]
                %233 = vst [vmem:[%s209 + $0x58] sm:$0xff] %v232
                %v234 = vld [vmem:[%s208 + $0xc0] sm:$0xff]
                %235 = vst [vmem:[%s209 + $0x60] sm:$0xff] %v234
                %v236 = vld [vmem:[%s208 + $0xc8] sm:$0xff]
                %237 = vst [vmem:[%s209 + $0x68] sm:$0xff] %v236
                %v238 = vld [vmem:[%s208 + $0xe0] sm:$0xff]
                %239 = vst [vmem:[%s209 + $0x70] sm:$0xff] %v238
                %v240 = vld [vmem:[%s208 + $0xe8] sm:$0xff]
                %241 = vst [vmem:[%s209 + $0x78] sm:$0xff] %v240
              $region41: #{bilstm_fc_forward.4} parent=35 // loop_footer
                %s207 = sadd.s32 1, %s203
              $region42: #{bilstm_fc_forward.4} parent=35 // loop_footer_branch
                %202 = sbr.rel target = $region38
              $region43: #{bilstm_fc_forward.4} parent=35 // loop_exit
                _
            $region36: #{bilstm_fc_forward.4} parent=31 // pred_fallthru
              _
            // Predicated region
            $region44: #{bilstm_fc_forward.4} parent=31 // pred_check
              _
            $region45: #{bilstm_fc_forward.4} parent=31 // pred_check_branch
              %243 = sbr.rel target = $region47
            $region46: #{bilstm_fc_forward.4} parent=31 // pred_region
              _
            $region47: #{bilstm_fc_forward.4} parent=31 // pred_fallthru
              _
          $region32: #{bilstm_fc_forward.4} parent=27 // pred_fallthru
            _
          %244 = vnop
        $region28: #{bilstm_fc_forward.4} parent=23 // pred_fallthru
          _
        // Predicated region
        $region48: #{bilstm_fc_forward.4} parent=23 // pred_check
          %p245 = pneg %p81
        $region49: #{bilstm_fc_forward.4} parent=23 // pred_check_branch
          %247 = sbr.rel (%p245) target = $region51
        $region50: #{bilstm_fc_forward.4} parent=23 // pred_region
          %s248 = sand.u32 %s71, 1
          %s249 = sand.u32 %s71, 1
          %s250 = smul.addr %s249, 128
          %s251 = scalar_lea.vmem [#allocation5], %s250
          %s252 = ssub.s32 1, %s12
          %s253 = smul.u32 4, %s252
          %s254 = smul.addr %s253, 16
          %s255 = sadd.s32 4, %s254
          %s256 = smul.addr %s255, 4
          %s257 = scalar_lea.vmem %s2, %s256
          // Predicated region
          $region52: #{bilstm_fc_forward.4} parent=50 // pred_check
            _
          $region53: #{bilstm_fc_forward.4} parent=50 // pred_check_branch
            %259 = sbr.rel (0) target = $region55
          $region54: #{bilstm_fc_forward.4} parent=50 // pred_region
            // Predicated region
            $region56: #{bilstm_fc_forward.4} parent=54 // pred_check
              _
            $region57: #{bilstm_fc_forward.4} parent=54 // pred_check_branch
              %261 = sbr.rel (0) target = $region59
            $region58: #{bilstm_fc_forward.4} parent=54 // pred_region
              loop: start=0, step=1, limit=1
              $region60: #{bilstm_fc_forward.4} parent=58 // loop_pre_header
                _
              $region61: #{bilstm_fc_forward.4} parent=58 // loop_header
                %s263 = sphi 0, %s267
                %p264 = scmp.ge.s32.totalorder %s263, 1
                %s268 = sphi %s257, %s257
                %s269 = sphi %s251, %s251
              $region62: #{bilstm_fc_forward.4} parent=58 // loop_header_branch
                %266 = sbr.rel (%p264) target = $region66
              $region63: #{bilstm_fc_forward.4} parent=58 // loop_body
                %v270 = vld [vmem:[%s268] sm:$0xff]
                %271 = vst [vmem:[%s269] sm:$0xff] %v270
                %v272 = vld [vmem:[%s268 + $0x8] sm:$0xff]
                %273 = vst [vmem:[%s269 + $0x8] sm:$0xff] %v272
                %v274 = vld [vmem:[%s268 + $0x20] sm:$0xff]
                %275 = vst [vmem:[%s269 + $0x10] sm:$0xff] %v274
                %v276 = vld [vmem:[%s268 + $0x28] sm:$0xff]
                %277 = vst [vmem:[%s269 + $0x18] sm:$0xff] %v276
                %v278 = vld [vmem:[%s268 + $0x40] sm:$0xff]
                %279 = vst [vmem:[%s269 + $0x20] sm:$0xff] %v278
                %v280 = vld [vmem:[%s268 + $0x48] sm:$0xff]
                %281 = vst [vmem:[%s269 + $0x28] sm:$0xff] %v280
                %v282 = vld [vmem:[%s268 + $0x60] sm:$0xff]
                %283 = vst [vmem:[%s269 + $0x30] sm:$0xff] %v282
                %v284 = vld [vmem:[%s268 + $0x68] sm:$0xff]
                %285 = vst [vmem:[%s269 + $0x38] sm:$0xff] %v284
                %v286 = vld [vmem:[%s268 + $0x80] sm:$0xff]
                %287 = vst [vmem:[%s269 + $0x40] sm:$0xff] %v286
                %v288 = vld [vmem:[%s268 + $0x88] sm:$0xff]
                %289 = vst [vmem:[%s269 + $0x48] sm:$0xff] %v288
                %v290 = vld [vmem:[%s268 + $0xa0] sm:$0xff]
                %291 = vst [vmem:[%s269 + $0x50] sm:$0xff] %v290
                %v292 = vld [vmem:[%s268 + $0xa8] sm:$0xff]
                %293 = vst [vmem:[%s269 + $0x58] sm:$0xff] %v292
                %v294 = vld [vmem:[%s268 + $0xc0] sm:$0xff]
                %295 = vst [vmem:[%s269 + $0x60] sm:$0xff] %v294
                %v296 = vld [vmem:[%s268 + $0xc8] sm:$0xff]
                %297 = vst [vmem:[%s269 + $0x68] sm:$0xff] %v296
                %v298 = vld [vmem:[%s268 + $0xe0] sm:$0xff]
                %299 = vst [vmem:[%s269 + $0x70] sm:$0xff] %v298
                %v300 = vld [vmem:[%s268 + $0xe8] sm:$0xff]
                %301 = vst [vmem:[%s269 + $0x78] sm:$0xff] %v300
              $region64: #{bilstm_fc_forward.4} parent=58 // loop_footer
                %s267 = sadd.s32 1, %s263
              $region65: #{bilstm_fc_forward.4} parent=58 // loop_footer_branch
                %262 = sbr.rel target = $region61
              $region66: #{bilstm_fc_forward.4} parent=58 // loop_exit
                _
            $region59: #{bilstm_fc_forward.4} parent=54 // pred_fallthru
              _
            // Predicated region
            $region67: #{bilstm_fc_forward.4} parent=54 // pred_check
              _
            $region68: #{bilstm_fc_forward.4} parent=54 // pred_check_branch
              %303 = sbr.rel target = $region70
            $region69: #{bilstm_fc_forward.4} parent=54 // pred_region
              _
            $region70: #{bilstm_fc_forward.4} parent=54 // pred_fallthru
              _
          $region55: #{bilstm_fc_forward.4} parent=50 // pred_fallthru
            _
          %304 = vnop
        $region51: #{bilstm_fc_forward.4} parent=23 // pred_fallthru
          _
      $region24: #{bilstm_fc_forward.4} parent=5 // pred_fallthru
        _
      %p305 = scmp.le.s32.totalorder 1, %s12
      %p306 = scmp.lt.s32.totalorder %s12, 3
      %p307 = pnand %p305, %p306
      %p308 = pneg %p307
      // Predicated region
      $region71: #{bilstm_fc_forward.4} parent=5 // pred_check
        _
      $region72: #{bilstm_fc_forward.4} parent=5 // pred_check_branch
        %310 = sbr.rel (%p307) target = $region74
      $region73: #{bilstm_fc_forward.4} parent=5 // pred_region
        %s311 = ssub.s32 %s12, 1
        %s312 = sand.u32 %s46, 1
        %s313 = sand.u32 %s46, 1
        %s314 = smul.addr %s313, 128
        %s315 = scalar_lea.vmem [#allocation4], %s314
        // Predicated region
        $region75: #{bilstm_fc_forward.4} parent=73 // pred_check
          %p316 = pneg %p59
        $region76: #{bilstm_fc_forward.4} parent=73 // pred_check_branch
          %318 = sbr.rel (%p316) target = $region78
        $region77: #{bilstm_fc_forward.4} parent=73 // pred_region
          _
        $region78: #{bilstm_fc_forward.4} parent=73 // pred_fallthru
          _
        %s319 = sand.u32 %s74, 1
        %s320 = sand.u32 %s74, 1
        %s321 = smul.addr %s320, 128
        %s322 = scalar_lea.vmem [#allocation5], %s321
        // Predicated region
        $region79: #{bilstm_fc_forward.4} parent=73 // pred_check
          %p323 = pneg %p87
        $region80: #{bilstm_fc_forward.4} parent=73 // pred_check_branch
          %325 = sbr.rel (%p323) target = $region82
        $region81: #{bilstm_fc_forward.4} parent=73 // pred_region
          _
        $region82: #{bilstm_fc_forward.4} parent=73 // pred_fallthru
          _
        %p326 = pneg %p33
        %p327 = pneg %p30
        %s328 = sand.u32 %s46, 1
        %s329 = sand.u32 %s46, 1
        %s330 = smul.addr %s329, 128
        %s331 = scalar_lea.vmem [#allocation4], %s330
        %p332 = pneg %p59
        %p333 = pneg %p56
        %s334 = sand.u32 %s74, 1
        %s335 = sand.u32 %s74, 1
        %s336 = smul.addr %s335, 128
        %s337 = scalar_lea.vmem [#allocation5], %s336
        %p338 = pneg %p87
        %p339 = pneg %p84
        %p340 = pneg %p108
        %p341 = pneg %p105
        %p342 = pneg %p134
        %p343 = pneg %p131
        %s344 = smul.u32 4, %s17
        %p345 = scmp.lt.s32.totalorder %s344, 7
        %s346 = scalar_select %p345, %s344, 7
        %s347 = smul.addr %s346, 2
        %s348 = smul.addr %s347, 4
        %s349 = scalar_lea.vmem %s4, %s348
        %p350 = pneg %p162
        %p351 = pneg %p159
        %s352 = ssub.s32 1, %s17
        %s353 = smul.u32 4, %s352
        %p354 = scmp.lt.s32.totalorder %s353, 7
        %s355 = scalar_select %p354, %s353, 7
        %s356 = smul.addr %s355, 2
        %s357 = smul.addr %s356, 4
        %s358 = scalar_lea.vmem %s5, %s357
        %s359 = smul.u32 4, %s17
        %s360 = ssub.s32 1, %s17
        %s361 = smul.u32 4, %s360
        %s362 = smul.u32 4, %s17
        %p363 = scmp.lt.s32.totalorder %s362, 7
        %s364 = scalar_select %p363, %s362, 7
        %s365 = smul.addr %s364, 2
        %s366 = smul.addr %s365, 4
        %s367 = scalar_lea.vmem %s4, %s366
        %s368 = smul.u32 4, %s17
        %s369 = ssub.s32 1, %s17
        %s370 = smul.u32 4, %s369
        %p371 = scmp.lt.s32.totalorder %s370, 7
        %s372 = scalar_select %p371, %s370, 7
        %s373 = smul.addr %s372, 2
        %s374 = smul.addr %s373, 4
        %s375 = scalar_lea.vmem %s5, %s374
        %s376 = ssub.s32 1, %s17
        %s377 = smul.u32 4, %s376
        %p378 = scmp.eq.s32.totalorder %s17, 0
        // Predicated region
        $region83: #{bilstm_fc_forward.4} parent=73 // pred_check
          %p379 = pneg %p378
        $region84: #{bilstm_fc_forward.4} parent=73 // pred_check_branch
          %381 = sbr.rel (%p379) target = $region86
        $region85: #{bilstm_fc_forward.4} parent=73 // pred_region
          %382 = vst [vmem:[#allocation2] sm:$0xff] 0.0
          %383 = vst [vmem:[#allocation2 + $0x8] sm:$0xff] 0.0
          %384 = vst [vmem:[#allocation2 + $0x10] sm:$0xff] 0.0
          %385 = vst [vmem:[#allocation2 + $0x18] sm:$0xff] 0.0
          %386 = vst [vmem:[#allocation3] sm:$0xff] 0.0
          %387 = vst [vmem:[#allocation3 + $0x8] sm:$0xff] 0.0
          %388 = vst [vmem:[#allocation3 + $0x10] sm:$0xff] 0.0
          %389 = vst [vmem:[#allocation3 + $0x18] sm:$0xff] 0.0
        $region86: #{bilstm_fc_forward.4} parent=73 // pred_fallthru
          _
        %v390 = vld [vmem:[%s0] sm:$0xff]
        %v391 = vld [vmem:[%s0 + $0x8] sm:$0xff]
        %v392 = vld [vmem:[%s3] sm:$0xff]
        %v393 = vld [vmem:[%s3 + $0x8] sm:$0xff]
        %v394 = vld [vmem:[%s3 + $0x10] sm:$0xff]
        %v395 = vld [vmem:[%s3 + $0x18] sm:$0xff]
        %v396 = vld [vmem:[%s3 + $0x20] sm:$0xff]
        %v397 = vld [vmem:[%s3 + $0x28] sm:$0xff]
        %v398 = vld [vmem:[%s3 + $0x30] sm:$0xff]
        %v399 = vld [vmem:[%s3 + $0x38] sm:$0xff]
        %v400 = vld [vmem:[%s3 + $0x40] sm:$0xff]
        %v401 = vld [vmem:[%s3 + $0x48] sm:$0xff]
        %v402 = vld [vmem:[%s3 + $0x50] sm:$0xff]
        %v403 = vld [vmem:[%s3 + $0x58] sm:$0xff]
        %v404 = vld [vmem:[%s3 + $0x60] sm:$0xff]
        %v405 = vld [vmem:[%s3 + $0x68] sm:$0xff]
        %v406 = vld [vmem:[%s3 + $0x70] sm:$0xff]
        %v407 = vld [vmem:[%s3 + $0x78] sm:$0xff]
        %v408 = vld [vmem:[%s3 + $0x80] sm:$0xff]
        %v409 = vld [vmem:[%s3 + $0x88] sm:$0xff]
        %v410 = vld [vmem:[%s3 + $0x90] sm:$0xff]
        %v411 = vld [vmem:[%s3 + $0x98] sm:$0xff]
        %v412 = vld [vmem:[%s3 + $0xa0] sm:$0xff]
        %v413 = vld [vmem:[%s3 + $0xa8] sm:$0xff]
        %v414 = vld [vmem:[%s3 + $0xb0] sm:$0xff]
        %v415 = vld [vmem:[%s3 + $0xb8] sm:$0xff]
        %v416 = vld [vmem:[%s3 + $0xc0] sm:$0xff]
        %v417 = vld [vmem:[%s3 + $0xc8] sm:$0xff]
        %v418 = vld [vmem:[%s3 + $0xd0] sm:$0xff]
        %v419 = vld [vmem:[%s3 + $0xd8] sm:$0xff]
        %v420 = vld [vmem:[%s3 + $0xe0] sm:$0xff]
        %v421 = vld [vmem:[%s3 + $0xe8] sm:$0xff]
        %v422 = vld [vmem:[%s3 + $0xf0] sm:$0xff]
        %v423 = vld [vmem:[%s3 + $0xf8] sm:$0xff]
        %v424 = vld [vmem:[%s3 + $0x100] sm:$0xff]
        %v425 = vld [vmem:[%s3 + $0x108] sm:$0xff]
        %v426 = vld [vmem:[%s3 + $0x110] sm:$0xff]
        %v427 = vld [vmem:[%s3 + $0x118] sm:$0xff]
        %v428 = vld [vmem:[%s3 + $0x120] sm:$0xff]
        %v429 = vld [vmem:[%s3 + $0x128] sm:$0xff]
        %v430 = vld [vmem:[%s3 + $0x130] sm:$0xff]
        %v431 = vld [vmem:[%s3 + $0x138] sm:$0xff]
        %v432 = vld [vmem:[%s3 + $0x140] sm:$0xff]
        %v433 = vld [vmem:[%s3 + $0x148] sm:$0xff]
        %v434 = vld [vmem:[%s3 + $0x150] sm:$0xff]
        %v435 = vld [vmem:[%s3 + $0x158] sm:$0xff]
        %v436 = vld [vmem:[%s3 + $0x160] sm:$0xff]
        %v437 = vld [vmem:[%s3 + $0x168] sm:$0xff]
        %v438 = vld [vmem:[%s3 + $0x170] sm:$0xff]
        %v439 = vld [vmem:[%s3 + $0x178] sm:$0xff]
        %v440 = vld [vmem:[%s3 + $0x180] sm:$0xff]
        %v441 = vld [vmem:[%s3 + $0x188] sm:$0xff]
        %v442 = vld [vmem:[%s3 + $0x190] sm:$0xff]
        %v443 = vld [vmem:[%s3 + $0x198] sm:$0xff]
        %v444 = vld [vmem:[%s3 + $0x1a0] sm:$0xff]
        %v445 = vld [vmem:[%s3 + $0x1a8] sm:$0xff]
        %v446 = vld [vmem:[%s3 + $0x1b0] sm:$0xff]
        %v447 = vld [vmem:[%s3 + $0x1b8] sm:$0xff]
        %v448 = vld [vmem:[%s3 + $0x1c0] sm:$0xff]
        %v449 = vld [vmem:[%s3 + $0x1c8] sm:$0xff]
        %v450 = vld [vmem:[%s3 + $0x1d0] sm:$0xff]
        %v451 = vld [vmem:[%s3 + $0x1d8] sm:$0xff]
        %v452 = vld [vmem:[%s3 + $0x1e0] sm:$0xff]
        %v453 = vld [vmem:[%s3 + $0x1e8] sm:$0xff]
        %v454 = vld [vmem:[%s3 + $0x1f0] sm:$0xff]
        %v455 = vld [vmem:[%s3 + $0x1f8] sm:$0xff]
        %v456 = vld [vmem:[%s3 + $0x200] sm:$0xff]
        %v457 = vld [vmem:[%s3 + $0x208] sm:$0xff]
        %v458 = vld [vmem:[%s3 + $0x210] sm:$0xff]
        %v459 = vld [vmem:[%s3 + $0x218] sm:$0xff]
        %v460 = vld [vmem:[%s3 + $0x220] sm:$0xff]
        %v461 = vld [vmem:[%s3 + $0x228] sm:$0xff]
        %v462 = vld [vmem:[%s3 + $0x230] sm:$0xff]
        %v463 = vld [vmem:[%s3 + $0x238] sm:$0xff]
        %v464 = vld [vmem:[%s3 + $0x240] sm:$0xff]
        %v465 = vld [vmem:[%s3 + $0x248] sm:$0xff]
        %v466 = vld [vmem:[%s3 + $0x250] sm:$0xff]
        %v467 = vld [vmem:[%s3 + $0x258] sm:$0xff]
        %v468 = vld [vmem:[%s3 + $0x260] sm:$0xff]
        %v469 = vld [vmem:[%s3 + $0x268] sm:$0xff]
        %v470 = vld [vmem:[%s3 + $0x270] sm:$0xff]
        %v471 = vld [vmem:[%s3 + $0x278] sm:$0xff]
        %v472 = vld [vmem:[%s3 + $0x280] sm:$0xff]
        %v473 = vld [vmem:[%s3 + $0x288] sm:$0xff]
        %v474 = vld [vmem:[%s3 + $0x290] sm:$0xff]
        %v475 = vld [vmem:[%s3 + $0x298] sm:$0xff]
        %v476 = vld [vmem:[%s3 + $0x2a0] sm:$0xff]
        %v477 = vld [vmem:[%s3 + $0x2a8] sm:$0xff]
        %v478 = vld [vmem:[%s3 + $0x2b0] sm:$0xff]
        %v479 = vld [vmem:[%s3 + $0x2b8] sm:$0xff]
        %v480 = vld [vmem:[%s3 + $0x2c0] sm:$0xff]
        %v481 = vld [vmem:[%s3 + $0x2c8] sm:$0xff]
        %v482 = vld [vmem:[%s3 + $0x2d0] sm:$0xff]
        %v483 = vld [vmem:[%s3 + $0x2d8] sm:$0xff]
        %v484 = vld [vmem:[%s3 + $0x2e0] sm:$0xff]
        %v485 = vld [vmem:[%s3 + $0x2e8] sm:$0xff]
        %v486 = vld [vmem:[%s3 + $0x2f0] sm:$0xff]
        %v487 = vld [vmem:[%s3 + $0x2f8] sm:$0xff]
        %v488 = vld [vmem:[%s3 + $0x300] sm:$0xff]
        %v489 = vld [vmem:[%s3 + $0x308] sm:$0xff]
        %v490 = vld [vmem:[%s3 + $0x310] sm:$0xff]
        %v491 = vld [vmem:[%s3 + $0x318] sm:$0xff]
        %v492 = vld [vmem:[%s3 + $0x320] sm:$0xff]
        %v493 = vld [vmem:[%s3 + $0x328] sm:$0xff]
        %v494 = vld [vmem:[%s3 + $0x330] sm:$0xff]
        %v495 = vld [vmem:[%s3 + $0x338] sm:$0xff]
        %v496 = vld [vmem:[%s3 + $0x340] sm:$0xff]
        %v497 = vld [vmem:[%s3 + $0x348] sm:$0xff]
        %v498 = vld [vmem:[%s3 + $0x350] sm:$0xff]
        %v499 = vld [vmem:[%s3 + $0x358] sm:$0xff]
        %v500 = vld [vmem:[%s3 + $0x360] sm:$0xff]
        %v501 = vld [vmem:[%s3 + $0x368] sm:$0xff]
        %v502 = vld [vmem:[%s3 + $0x370] sm:$0xff]
        %v503 = vld [vmem:[%s3 + $0x378] sm:$0xff]
        %v504 = vld [vmem:[%s3 + $0x380] sm:$0xff]
        %v505 = vld [vmem:[%s3 + $0x388] sm:$0xff]
        %v506 = vld [vmem:[%s3 + $0x390] sm:$0xff]
        %v507 = vld [vmem:[%s3 + $0x398] sm:$0xff]
        %v508 = vld [vmem:[%s3 + $0x3a0] sm:$0xff]
        %v509 = vld [vmem:[%s3 + $0x3a8] sm:$0xff]
        %v510 = vld [vmem:[%s3 + $0x3b0] sm:$0xff]
        %v511 = vld [vmem:[%s3 + $0x3b8] sm:$0xff]
        %v512 = vld [vmem:[%s3 + $0x3c0] sm:$0xff]
        %v513 = vld [vmem:[%s3 + $0x3c8] sm:$0xff]
        %v514 = vld [vmem:[%s3 + $0x3d0] sm:$0xff]
        %v515 = vld [vmem:[%s3 + $0x3d8] sm:$0xff]
        %v516 = vld [vmem:[%s3 + $0x3e0] sm:$0xff]
        %v517 = vld [vmem:[%s3 + $0x3e8] sm:$0xff]
        %v518 = vld [vmem:[%s3 + $0x3f0] sm:$0xff]
        %v519 = vld [vmem:[%s3 + $0x3f8] sm:$0xff]
        %s520 = smul.u32 %s17, 4
        %s521 = ssub.s32 7, %s520
        %v522 = vld [vmem:[#allocation2] sm:$0xff]
        %v523 = vld [vmem:[#allocation2 + $0x8] sm:$0xff]
        %v524 = vld [vmem:[#allocation2 + $0x10] sm:$0xff]
        %v525 = vld [vmem:[#allocation2 + $0x18] sm:$0xff]
        %v526 = vpack.c.bf16 %v524, %v522
        %v527 = vpack.c.bf16 %v525, %v523
        %v656 = vunpack.c.l.b16 %v392
        %v657 = vunpack.c.h.b16 %v392
        %v658 = vunpack.c.l.b16 %v393
        %v659 = vunpack.c.h.b16 %v393
        %v660 = vunpack.c.l.b16 %v394
        %v661 = vunpack.c.h.b16 %v394
        %v662 = vunpack.c.l.b16 %v395
        %v663 = vunpack.c.h.b16 %v395
        %v664 = vunpack.c.l.b16 %v396
        %v665 = vunpack.c.h.b16 %v396
        %v666 = vunpack.c.l.b16 %v397
        %v667 = vunpack.c.h.b16 %v397
        %v668 = vunpack.c.l.b16 %v398
        %v669 = vunpack.c.h.b16 %v398
        %v670 = vunpack.c.l.b16 %v399
        %v671 = vunpack.c.h.b16 %v399
        %v672 = vunpack.c.l.b16 %v400
        %v673 = vunpack.c.h.b16 %v400
        %v674 = vunpack.c.l.b16 %v401
        %v675 = vunpack.c.h.b16 %v401
        %v676 = vunpack.c.l.b16 %v402
        %v677 = vunpack.c.h.b16 %v402
        %v678 = vunpack.c.l.b16 %v403
        %v679 = vunpack.c.h.b16 %v403
        %v680 = vunpack.c.l.b16 %v404
        %v681 = vunpack.c.h.b16 %v404
        %v682 = vunpack.c.l.b16 %v405
        %v683 = vunpack.c.h.b16 %v405
        %v684 = vunpack.c.l.b16 %v406
        %v685 = vunpack.c.h.b16 %v406
        %v686 = vunpack.c.l.b16 %v407
        %v687 = vunpack.c.h.b16 %v407
        %v688 = vunpack.c.l.b16 %v408
        %v689 = vunpack.c.h.b16 %v408
        %v690 = vunpack.c.l.b16 %v409
        %v691 = vunpack.c.h.b16 %v409
        %v692 = vunpack.c.l.b16 %v410
        %v693 = vunpack.c.h.b16 %v410
        %v694 = vunpack.c.l.b16 %v411
        %v695 = vunpack.c.h.b16 %v411
        %v696 = vunpack.c.l.b16 %v412
        %v697 = vunpack.c.h.b16 %v412
        %v698 = vunpack.c.l.b16 %v413
        %v699 = vunpack.c.h.b16 %v413
        %v700 = vunpack.c.l.b16 %v414
        %v701 = vunpack.c.h.b16 %v414
        %v702 = vunpack.c.l.b16 %v415
        %v703 = vunpack.c.h.b16 %v415
        %v704 = vunpack.c.l.b16 %v416
        %v705 = vunpack.c.h.b16 %v416
        %v706 = vunpack.c.l.b16 %v417
        %v707 = vunpack.c.h.b16 %v417
        %v708 = vunpack.c.l.b16 %v418
        %v709 = vunpack.c.h.b16 %v418
        %v710 = vunpack.c.l.b16 %v419
        %v711 = vunpack.c.h.b16 %v419
        %v712 = vunpack.c.l.b16 %v420
        %v713 = vunpack.c.h.b16 %v420
        %v714 = vunpack.c.l.b16 %v421
        %v715 = vunpack.c.h.b16 %v421
        %v716 = vunpack.c.l.b16 %v422
        %v717 = vunpack.c.h.b16 %v422
        %v718 = vunpack.c.l.b16 %v423
        %v719 = vunpack.c.h.b16 %v423
        %v720 = vunpack.c.l.b16 %v424
        %v721 = vunpack.c.h.b16 %v424
        %v722 = vunpack.c.l.b16 %v425
        %v723 = vunpack.c.h.b16 %v425
        %v724 = vunpack.c.l.b16 %v426
        %v725 = vunpack.c.h.b16 %v426
        %v726 = vunpack.c.l.b16 %v427
        %v727 = vunpack.c.h.b16 %v427
        %v728 = vunpack.c.l.b16 %v428
        %v729 = vunpack.c.h.b16 %v428
        %v730 = vunpack.c.l.b16 %v429
        %v731 = vunpack.c.h.b16 %v429
        %v732 = vunpack.c.l.b16 %v430
        %v733 = vunpack.c.h.b16 %v430
        %v734 = vunpack.c.l.b16 %v431
        %v735 = vunpack.c.h.b16 %v431
        %v736 = vunpack.c.l.b16 %v432
        %v737 = vunpack.c.h.b16 %v432
        %v738 = vunpack.c.l.b16 %v433
        %v739 = vunpack.c.h.b16 %v433
        %v740 = vunpack.c.l.b16 %v434
        %v741 = vunpack.c.h.b16 %v434
        %v742 = vunpack.c.l.b16 %v435
        %v743 = vunpack.c.h.b16 %v435
        %v744 = vunpack.c.l.b16 %v436
        %v745 = vunpack.c.h.b16 %v436
        %v746 = vunpack.c.l.b16 %v437
        %v747 = vunpack.c.h.b16 %v437
        %v748 = vunpack.c.l.b16 %v438
        %v749 = vunpack.c.h.b16 %v438
        %v750 = vunpack.c.l.b16 %v439
        %v751 = vunpack.c.h.b16 %v439
        %v752 = vunpack.c.l.b16 %v440
        %v753 = vunpack.c.h.b16 %v440
        %v754 = vunpack.c.l.b16 %v441
        %v755 = vunpack.c.h.b16 %v441
        %v756 = vunpack.c.l.b16 %v442
        %v757 = vunpack.c.h.b16 %v442
        %v758 = vunpack.c.l.b16 %v443
        %v759 = vunpack.c.h.b16 %v443
        %v760 = vunpack.c.l.b16 %v444
        %v761 = vunpack.c.h.b16 %v444
        %v762 = vunpack.c.l.b16 %v445
        %v763 = vunpack.c.h.b16 %v445
        %v764 = vunpack.c.l.b16 %v446
        %v765 = vunpack.c.h.b16 %v446
        %v766 = vunpack.c.l.b16 %v447
        %v767 = vunpack.c.h.b16 %v447
        %v768 = vunpack.c.l.b16 %v448
        %v769 = vunpack.c.h.b16 %v448
        %v770 = vunpack.c.l.b16 %v449
        %v771 = vunpack.c.h.b16 %v449
        %v772 = vunpack.c.l.b16 %v450
        %v773 = vunpack.c.h.b16 %v450
        %v774 = vunpack.c.l.b16 %v451
        %v775 = vunpack.c.h.b16 %v451
        %v776 = vunpack.c.l.b16 %v452
        %v777 = vunpack.c.h.b16 %v452
        %v778 = vunpack.c.l.b16 %v453
        %v779 = vunpack.c.h.b16 %v453
        %v780 = vunpack.c.l.b16 %v454
        %v781 = vunpack.c.h.b16 %v454
        %v782 = vunpack.c.l.b16 %v455
        %v783 = vunpack.c.h.b16 %v455
        %v784 = vunpack.c.l.b16 %v456
        %v785 = vunpack.c.h.b16 %v456
        %v786 = vunpack.c.l.b16 %v457
        %v787 = vunpack.c.h.b16 %v457
        %v788 = vunpack.c.l.b16 %v458
        %v789 = vunpack.c.h.b16 %v458
        %v790 = vunpack.c.l.b16 %v459
        %v791 = vunpack.c.h.b16 %v459
        %v792 = vunpack.c.l.b16 %v460
        %v793 = vunpack.c.h.b16 %v460
        %v794 = vunpack.c.l.b16 %v461
        %v795 = vunpack.c.h.b16 %v461
        %v796 = vunpack.c.l.b16 %v462
        %v797 = vunpack.c.h.b16 %v462
        %v798 = vunpack.c.l.b16 %v463
        %v799 = vunpack.c.h.b16 %v463
        %v800 = vunpack.c.l.b16 %v464
        %v801 = vunpack.c.h.b16 %v464
        %v802 = vunpack.c.l.b16 %v465
        %v803 = vunpack.c.h.b16 %v465
        %v804 = vunpack.c.l.b16 %v466
        %v805 = vunpack.c.h.b16 %v466
        %v806 = vunpack.c.l.b16 %v467
        %v807 = vunpack.c.h.b16 %v467
        %v808 = vunpack.c.l.b16 %v468
        %v809 = vunpack.c.h.b16 %v468
        %v810 = vunpack.c.l.b16 %v469
        %v811 = vunpack.c.h.b16 %v469
        %v812 = vunpack.c.l.b16 %v470
        %v813 = vunpack.c.h.b16 %v470
        %v814 = vunpack.c.l.b16 %v471
        %v815 = vunpack.c.h.b16 %v471
        %v816 = vunpack.c.l.b16 %v472
        %v817 = vunpack.c.h.b16 %v472
        %v818 = vunpack.c.l.b16 %v473
        %v819 = vunpack.c.h.b16 %v473
        %v820 = vunpack.c.l.b16 %v474
        %v821 = vunpack.c.h.b16 %v474
        %v822 = vunpack.c.l.b16 %v475
        %v823 = vunpack.c.h.b16 %v475
        %v824 = vunpack.c.l.b16 %v476
        %v825 = vunpack.c.h.b16 %v476
        %v826 = vunpack.c.l.b16 %v477
        %v827 = vunpack.c.h.b16 %v477
        %v828 = vunpack.c.l.b16 %v478
        %v829 = vunpack.c.h.b16 %v478
        %v830 = vunpack.c.l.b16 %v479
        %v831 = vunpack.c.h.b16 %v479
        %v832 = vunpack.c.l.b16 %v480
        %v833 = vunpack.c.h.b16 %v480
        %v834 = vunpack.c.l.b16 %v481
        %v835 = vunpack.c.h.b16 %v481
        %v836 = vunpack.c.l.b16 %v482
        %v837 = vunpack.c.h.b16 %v482
        %v838 = vunpack.c.l.b16 %v483
        %v839 = vunpack.c.h.b16 %v483
        %v840 = vunpack.c.l.b16 %v484
        %v841 = vunpack.c.h.b16 %v484
        %v842 = vunpack.c.l.b16 %v485
        %v843 = vunpack.c.h.b16 %v485
        %v844 = vunpack.c.l.b16 %v486
        %v845 = vunpack.c.h.b16 %v486
        %v846 = vunpack.c.l.b16 %v487
        %v847 = vunpack.c.h.b16 %v487
        %v848 = vunpack.c.l.b16 %v488
        %v849 = vunpack.c.h.b16 %v488
        %v850 = vunpack.c.l.b16 %v489
        %v851 = vunpack.c.h.b16 %v489
        %v852 = vunpack.c.l.b16 %v490
        %v853 = vunpack.c.h.b16 %v490
        %v854 = vunpack.c.l.b16 %v491
        %v855 = vunpack.c.h.b16 %v491
        %v856 = vunpack.c.l.b16 %v492
        %v857 = vunpack.c.h.b16 %v492
        %v858 = vunpack.c.l.b16 %v493
        %v859 = vunpack.c.h.b16 %v493
        %v860 = vunpack.c.l.b16 %v494
        %v861 = vunpack.c.h.b16 %v494
        %v862 = vunpack.c.l.b16 %v495
        %v863 = vunpack.c.h.b16 %v495
        %v864 = vunpack.c.l.b16 %v496
        %v865 = vunpack.c.h.b16 %v496
        %v866 = vunpack.c.l.b16 %v497
        %v867 = vunpack.c.h.b16 %v497
        %v868 = vunpack.c.l.b16 %v498
        %v869 = vunpack.c.h.b16 %v498
        %v870 = vunpack.c.l.b16 %v499
        %v871 = vunpack.c.h.b16 %v499
        %v872 = vunpack.c.l.b16 %v500
        %v873 = vunpack.c.h.b16 %v500
        %v874 = vunpack.c.l.b16 %v501
        %v875 = vunpack.c.h.b16 %v501
        %v876 = vunpack.c.l.b16 %v502
        %v877 = vunpack.c.h.b16 %v502
        %v878 = vunpack.c.l.b16 %v503
        %v879 = vunpack.c.h.b16 %v503
        %v880 = vunpack.c.l.b16 %v504
        %v881 = vunpack.c.h.b16 %v504
        %v882 = vunpack.c.l.b16 %v505
        %v883 = vunpack.c.h.b16 %v505
        %v884 = vunpack.c.l.b16 %v506
        %v885 = vunpack.c.h.b16 %v506
        %v886 = vunpack.c.l.b16 %v507
        %v887 = vunpack.c.h.b16 %v507
        %v888 = vunpack.c.l.b16 %v508
        %v889 = vunpack.c.h.b16 %v508
        %v890 = vunpack.c.l.b16 %v509
        %v891 = vunpack.c.h.b16 %v509
        %v892 = vunpack.c.l.b16 %v510
        %v893 = vunpack.c.h.b16 %v510
        %v894 = vunpack.c.l.b16 %v511
        %v895 = vunpack.c.h.b16 %v511
        %v896 = vunpack.c.l.b16 %v512
        %v897 = vunpack.c.h.b16 %v512
        %v898 = vunpack.c.l.b16 %v513
        %v899 = vunpack.c.h.b16 %v513
        %v900 = vunpack.c.l.b16 %v514
        %v901 = vunpack.c.h.b16 %v514
        %v902 = vunpack.c.l.b16 %v515
        %v903 = vunpack.c.h.b16 %v515
        %v904 = vunpack.c.l.b16 %v516
        %v905 = vunpack.c.h.b16 %v516
        %v906 = vunpack.c.l.b16 %v517
        %v907 = vunpack.c.h.b16 %v517
        %v908 = vunpack.c.l.b16 %v518
        %v909 = vunpack.c.h.b16 %v518
        %v910 = vunpack.c.l.b16 %v519
        %v911 = vunpack.c.h.b16 %v519
        %v912 = vpack.c.b16 %v664, %v656
        %v913 = vpack.c.b16 %v665, %v657
        %v914 = vpack.c.b16 %v666, %v658
        %v915 = vpack.c.b16 %v667, %v659
        %v916 = vpack.c.b16 %v668, %v660
        %v917 = vpack.c.b16 %v669, %v661
        %v918 = vpack.c.b16 %v670, %v662
        %v919 = vpack.c.b16 %v671, %v663
        %v920 = vpack.c.b16 %v680, %v672
        %v921 = vpack.c.b16 %v681, %v673
        %v922 = vpack.c.b16 %v682, %v674
        %v923 = vpack.c.b16 %v683, %v675
        %v924 = vpack.c.b16 %v684, %v676
        %v925 = vpack.c.b16 %v685, %v677
        %v926 = vpack.c.b16 %v686, %v678
        %v927 = vpack.c.b16 %v687, %v679
        %v928 = vpack.c.b16 %v696, %v688
        %v929 = vpack.c.b16 %v697, %v689
        %v930 = vpack.c.b16 %v698, %v690
        %v931 = vpack.c.b16 %v699, %v691
        %v932 = vpack.c.b16 %v700, %v692
        %v933 = vpack.c.b16 %v701, %v693
        %v934 = vpack.c.b16 %v702, %v694
        %v935 = vpack.c.b16 %v703, %v695
        %v936 = vpack.c.b16 %v712, %v704
        %v937 = vpack.c.b16 %v713, %v705
        %v938 = vpack.c.b16 %v714, %v706
        %v939 = vpack.c.b16 %v715, %v707
        %v940 = vpack.c.b16 %v716, %v708
        %v941 = vpack.c.b16 %v717, %v709
        %v942 = vpack.c.b16 %v718, %v710
        %v943 = vpack.c.b16 %v719, %v711
        %v944 = vpack.c.b16 %v728, %v720
        %v945 = vpack.c.b16 %v729, %v721
        %v946 = vpack.c.b16 %v730, %v722
        %v947 = vpack.c.b16 %v731, %v723
        %v948 = vpack.c.b16 %v732, %v724
        %v949 = vpack.c.b16 %v733, %v725
        %v950 = vpack.c.b16 %v734, %v726
        %v951 = vpack.c.b16 %v735, %v727
        %v952 = vpack.c.b16 %v744, %v736
        %v953 = vpack.c.b16 %v745, %v737
        %v954 = vpack.c.b16 %v746, %v738
        %v955 = vpack.c.b16 %v747, %v739
        %v956 = vpack.c.b16 %v748, %v740
        %v957 = vpack.c.b16 %v749, %v741
        %v958 = vpack.c.b16 %v750, %v742
        %v959 = vpack.c.b16 %v751, %v743
        %v960 = vpack.c.b16 %v760, %v752
        %v961 = vpack.c.b16 %v761, %v753
        %v962 = vpack.c.b16 %v762, %v754
        %v963 = vpack.c.b16 %v763, %v755
        %v964 = vpack.c.b16 %v764, %v756
        %v965 = vpack.c.b16 %v765, %v757
        %v966 = vpack.c.b16 %v766, %v758
        %v967 = vpack.c.b16 %v767, %v759
        %v968 = vpack.c.b16 %v776, %v768
        %v969 = vpack.c.b16 %v777, %v769
        %v970 = vpack.c.b16 %v778, %v770
        %v971 = vpack.c.b16 %v779, %v771
        %v972 = vpack.c.b16 %v780, %v772
        %v973 = vpack.c.b16 %v781, %v773
        %v974 = vpack.c.b16 %v782, %v774
        %v975 = vpack.c.b16 %v783, %v775
        %v976 = vpack.c.b16 %v792, %v784
        %v977 = vpack.c.b16 %v793, %v785
        %v978 = vpack.c.b16 %v794, %v786
        %v979 = vpack.c.b16 %v795, %v787
        %v980 = vpack.c.b16 %v796, %v788
        %v981 = vpack.c.b16 %v797, %v789
        %v982 = vpack.c.b16 %v798, %v790
        %v983 = vpack.c.b16 %v799, %v791
        %v984 = vpack.c.b16 %v808, %v800
        %v985 = vpack.c.b16 %v809, %v801
        %v986 = vpack.c.b16 %v810, %v802
        %v987 = vpack.c.b16 %v811, %v803
        %v988 = vpack.c.b16 %v812, %v804
        %v989 = vpack.c.b16 %v813, %v805
        %v990 = vpack.c.b16 %v814, %v806
        %v991 = vpack.c.b16 %v815, %v807
        %v992 = vpack.c.b16 %v824, %v816
        %v993 = vpack.c.b16 %v825, %v817
        %v994 = vpack.c.b16 %v826, %v818
        %v995 = vpack.c.b16 %v827, %v819
        %v996 = vpack.c.b16 %v828, %v820
        %v997 = vpack.c.b16 %v829, %v821
        %v998 = vpack.c.b16 %v830, %v822
        %v999 = vpack.c.b16 %v831, %v823
        %v1000 = vpack.c.b16 %v840, %v832
        %v1001 = vpack.c.b16 %v841, %v833
        %v1002 = vpack.c.b16 %v842, %v834
        %v1003 = vpack.c.b16 %v843, %v835
        %v1004 = vpack.c.b16 %v844, %v836
        %v1005 = vpack.c.b16 %v845, %v837
        %v1006 = vpack.c.b16 %v846, %v838
        %v1007 = vpack.c.b16 %v847, %v839
        %v1008 = vpack.c.b16 %v856, %v848
        %v1009 = vpack.c.b16 %v857, %v849
        %v1010 = vpack.c.b16 %v858, %v850
        %v1011 = vpack.c.b16 %v859, %v851
        %v1012 = vpack.c.b16 %v860, %v852
        %v1013 = vpack.c.b16 %v861, %v853
        %v1014 = vpack.c.b16 %v862, %v854
        %v1015 = vpack.c.b16 %v863, %v855
        %v1016 = vpack.c.b16 %v872, %v864
        %v1017 = vpack.c.b16 %v873, %v865
        %v1018 = vpack.c.b16 %v874, %v866
        %v1019 = vpack.c.b16 %v875, %v867
        %v1020 = vpack.c.b16 %v876, %v868
        %v1021 = vpack.c.b16 %v877, %v869
        %v1022 = vpack.c.b16 %v878, %v870
        %v1023 = vpack.c.b16 %v879, %v871
        %v1024 = vpack.c.b16 %v888, %v880
        %v1025 = vpack.c.b16 %v889, %v881
        %v1026 = vpack.c.b16 %v890, %v882
        %v1027 = vpack.c.b16 %v891, %v883
        %v1028 = vpack.c.b16 %v892, %v884
        %v1029 = vpack.c.b16 %v893, %v885
        %v1030 = vpack.c.b16 %v894, %v886
        %v1031 = vpack.c.b16 %v895, %v887
        %v1032 = vpack.c.b16 %v904, %v896
        %v1033 = vpack.c.b16 %v905, %v897
        %v1034 = vpack.c.b16 %v906, %v898
        %v1035 = vpack.c.b16 %v907, %v899
        %v1036 = vpack.c.b16 %v908, %v900
        %v1037 = vpack.c.b16 %v909, %v901
        %v1038 = vpack.c.b16 %v910, %v902
        %v1039 = vpack.c.b16 %v911, %v903
        %1168 = vmatprep.subr.bf16.mxu0 %v969
        %1169 = vmatpush1.bf16.msra.mxu0 %v968
        %1170 = vmatprep.subr.bf16.mxu0 %v961
        %1171 = vmatpush1.bf16.msra.mxu0 %v960
        %1172 = vmatprep.subr.bf16.mxu0 %v953
        %1173 = vmatpush1.bf16.msra.mxu0 %v952
        %1174 = vmatprep.subr.bf16.mxu0 %v945
        %1175 = vmatpush1.bf16.msra.mxu0 %v944
        %1176 = vmatprep.subr.bf16.mxu0 %v937
        %1177 = vmatpush1.bf16.msra.mxu0 %v936
        %1178 = vmatprep.subr.bf16.mxu0 %v929
        %1179 = vmatpush1.bf16.msra.mxu0 %v928
        %1180 = vmatprep.subr.bf16.mxu0 %v921
        %1181 = vmatpush1.bf16.msra.mxu0 %v920
        %1182 = vmatprep.subr.bf16.mxu0 %v913
        %1183 = vmatpush1.bf16.msra.mxu0 %v912
        %1184 = vmatprep.subr.bf16.mxu0 %v1033
        %1185 = vmatpush2.bf16.msra.mxu0 %v1032
        %1186 = vmatprep.subr.bf16.mxu0 %v1025
        %1187 = vmatpush2.bf16.msra.mxu0 %v1024
        %1188 = vmatprep.subr.bf16.mxu0 %v1017
        %1189 = vmatpush2.bf16.msra.mxu0 %v1016
        %1190 = vmatprep.subr.bf16.mxu0 %v1009
        %1191 = vmatpush2.bf16.msra.mxu0 %v1008
        %1192 = vmatprep.subr.bf16.mxu0 %v1001
        %1193 = vmatpush2.bf16.msra.mxu0 %v1000
        %1194 = vmatprep.subr.bf16.mxu0 %v993
        %1195 = vmatpush2.bf16.msra.mxu0 %v992
        %1196 = vmatprep.subr.bf16.mxu0 %v985
        %1197 = vmatpush2.bf16.msra.mxu0 %v984
        %1198 = vmatprep.subr.bf16.mxu0 %v977
        %1199 = vmatpush2.bf16.msra.mxu0 %v976
        %1200 = vmatprep.mubr.bf16.mxu0 %v527
        %1201 = vmatmul.mubr.bf16.gmra.mxu0 %v526
        %v1202 = vpop.f32.mrf.mxu0
        %v1203 = vadd.f32 0.0, %v1202
        %v1204 = vpop.f32.mrf.mxu0
        %v1205 = vadd.f32 0.0, %v1204
        %v1206 = vpop.f32.mrf.mxu0
        %v1207 = vadd.f32 0.0, %v1206
        %v1208 = vpop.f32.mrf.mxu0
        %v1209 = vadd.f32 0.0, %v1208
        %1210 = vdwg.mxu0
        %1211 = vmatprep.subr.bf16.mxu0 %v971
        %1212 = vmatpush1.bf16.msra.mxu0 %v970
        %1213 = vmatprep.subr.bf16.mxu0 %v963
        %1214 = vmatpush1.bf16.msra.mxu0 %v962
        %1215 = vmatprep.subr.bf16.mxu0 %v955
        %1216 = vmatpush1.bf16.msra.mxu0 %v954
        %1217 = vmatprep.subr.bf16.mxu0 %v947
        %1218 = vmatpush1.bf16.msra.mxu0 %v946
        %1219 = vmatprep.subr.bf16.mxu0 %v939
        %1220 = vmatpush1.bf16.msra.mxu0 %v938
        %1221 = vmatprep.subr.bf16.mxu0 %v931
        %1222 = vmatpush1.bf16.msra.mxu0 %v930
        %1223 = vmatprep.subr.bf16.mxu0 %v923
        %1224 = vmatpush1.bf16.msra.mxu0 %v922
        %1225 = vmatprep.subr.bf16.mxu0 %v915
        %1226 = vmatpush1.bf16.msra.mxu0 %v914
        %1227 = vmatprep.subr.bf16.mxu0 %v1035
        %1228 = vmatpush2.bf16.msra.mxu0 %v1034
        %1229 = vmatprep.subr.bf16.mxu0 %v1027
        %1230 = vmatpush2.bf16.msra.mxu0 %v1026
        %1231 = vmatprep.subr.bf16.mxu0 %v1019
        %1232 = vmatpush2.bf16.msra.mxu0 %v1018
        %1233 = vmatprep.subr.bf16.mxu0 %v1011
        %1234 = vmatpush2.bf16.msra.mxu0 %v1010
        %1235 = vmatprep.subr.bf16.mxu0 %v1003
        %1236 = vmatpush2.bf16.msra.mxu0 %v1002
        %1237 = vmatprep.subr.bf16.mxu0 %v995
        %1238 = vmatpush2.bf16.msra.mxu0 %v994
        %1239 = vmatprep.subr.bf16.mxu0 %v987
        %1240 = vmatpush2.bf16.msra.mxu0 %v986
        %1241 = vmatprep.subr.bf16.mxu0 %v979
        %1242 = vmatpush2.bf16.msra.mxu0 %v978
        %1243 = vmatprep.mubr.bf16.mxu0 %v527
        %1244 = vmatmul.mubr.bf16.gmra.mxu0 %v526
        %v1245 = vpop.f32.mrf.mxu0
        %v1246 = vadd.f32 0.0, %v1245
        %v1247 = vpop.f32.mrf.mxu0
        %v1248 = vadd.f32 0.0, %v1247
        %v1249 = vpop.f32.mrf.mxu0
        %v1250 = vadd.f32 0.0, %v1249
        %v1251 = vpop.f32.mrf.mxu0
        %v1252 = vadd.f32 0.0, %v1251
        %1253 = vdwg.mxu0
        %1254 = vmatprep.subr.bf16.mxu0 %v973
        %1255 = vmatpush1.bf16.msra.mxu0 %v972
        %1256 = vmatprep.subr.bf16.mxu0 %v965
        %1257 = vmatpush1.bf16.msra.mxu0 %v964
        %1258 = vmatprep.subr.bf16.mxu0 %v957
        %1259 = vmatpush1.bf16.msra.mxu0 %v956
        %1260 = vmatprep.subr.bf16.mxu0 %v949
        %1261 = vmatpush1.bf16.msra.mxu0 %v948
        %1262 = vmatprep.subr.bf16.mxu0 %v941
        %1263 = vmatpush1.bf16.msra.mxu0 %v940
        %1264 = vmatprep.subr.bf16.mxu0 %v933
        %1265 = vmatpush1.bf16.msra.mxu0 %v932
        %1266 = vmatprep.subr.bf16.mxu0 %v925
        %1267 = vmatpush1.bf16.msra.mxu0 %v924
        %1268 = vmatprep.subr.bf16.mxu0 %v917
        %1269 = vmatpush1.bf16.msra.mxu0 %v916
        %1270 = vmatprep.subr.bf16.mxu0 %v1037
        %1271 = vmatpush2.bf16.msra.mxu0 %v1036
        %1272 = vmatprep.subr.bf16.mxu0 %v1029
        %1273 = vmatpush2.bf16.msra.mxu0 %v1028
        %1274 = vmatprep.subr.bf16.mxu0 %v1021
        %1275 = vmatpush2.bf16.msra.mxu0 %v1020
        %1276 = vmatprep.subr.bf16.mxu0 %v1013
        %1277 = vmatpush2.bf16.msra.mxu0 %v1012
        %1278 = vmatprep.subr.bf16.mxu0 %v1005
        %1279 = vmatpush2.bf16.msra.mxu0 %v1004
        %1280 = vmatprep.subr.bf16.mxu0 %v997
        %1281 = vmatpush2.bf16.msra.mxu0 %v996
        %1282 = vmatprep.subr.bf16.mxu0 %v989
        %1283 = vmatpush2.bf16.msra.mxu0 %v988
        %1284 = vmatprep.subr.bf16.mxu0 %v981
        %1285 = vmatpush2.bf16.msra.mxu0 %v980
        %1286 = vmatprep.mubr.bf16.mxu0 %v527
        %1287 = vmatmul.mubr.bf16.gmra.mxu0 %v526
        %v1288 = vpop.f32.mrf.mxu0
        %v1289 = vadd.f32 0.0, %v1288
        %v1290 = vpop.f32.mrf.mxu0
        %v1291 = vadd.f32 0.0, %v1290
        %v1292 = vpop.f32.mrf.mxu0
        %v1293 = vadd.f32 0.0, %v1292
        %v1294 = vpop.f32.mrf.mxu0
        %v1295 = vadd.f32 0.0, %v1294
        %1296 = vdwg.mxu0
        %1297 = vmatprep.subr.bf16.mxu0 %v975
        %1298 = vmatpush1.bf16.msra.mxu0 %v974
        %1299 = vmatprep.subr.bf16.mxu0 %v967
        %1300 = vmatpush1.bf16.msra.mxu0 %v966
        %1301 = vmatprep.subr.bf16.mxu0 %v959
        %1302 = vmatpush1.bf16.msra.mxu0 %v958
        %1303 = vmatprep.subr.bf16.mxu0 %v951
        %1304 = vmatpush1.bf16.msra.mxu0 %v950
        %1305 = vmatprep.subr.bf16.mxu0 %v943
        %1306 = vmatpush1.bf16.msra.mxu0 %v942
        %1307 = vmatprep.subr.bf16.mxu0 %v935
        %1308 = vmatpush1.bf16.msra.mxu0 %v934
        %1309 = vmatprep.subr.bf16.mxu0 %v927
        %1310 = vmatpush1.bf16.msra.mxu0 %v926
        %1311 = vmatprep.subr.bf16.mxu0 %v919
        %1312 = vmatpush1.bf16.msra.mxu0 %v918
        %1313 = vmatprep.subr.bf16.mxu0 %v1039
        %1314 = vmatpush2.bf16.msra.mxu0 %v1038
        %1315 = vmatprep.subr.bf16.mxu0 %v1031
        %1316 = vmatpush2.bf16.msra.mxu0 %v1030
        %1317 = vmatprep.subr.bf16.mxu0 %v1023
        %1318 = vmatpush2.bf16.msra.mxu0 %v1022
        %1319 = vmatprep.subr.bf16.mxu0 %v1015
        %1320 = vmatpush2.bf16.msra.mxu0 %v1014
        %1321 = vmatprep.subr.bf16.mxu0 %v1007
        %1322 = vmatpush2.bf16.msra.mxu0 %v1006
        %1323 = vmatprep.subr.bf16.mxu0 %v999
        %1324 = vmatpush2.bf16.msra.mxu0 %v998
        %1325 = vmatprep.subr.bf16.mxu0 %v991
        %1326 = vmatpush2.bf16.msra.mxu0 %v990
        %1327 = vmatprep.subr.bf16.mxu0 %v983
        %1328 = vmatpush2.bf16.msra.mxu0 %v982
        %1329 = vmatprep.mubr.bf16.mxu0 %v527
        %1330 = vmatmul.mubr.bf16.gmra.mxu0 %v526
        %v1331 = vpop.f32.mrf.mxu0
        %v1332 = vadd.f32 0.0, %v1331
        %v1333 = vpop.f32.mrf.mxu0
        %v1334 = vadd.f32 0.0, %v1333
        %v1335 = vpop.f32.mrf.mxu0
        %v1336 = vadd.f32 0.0, %v1335
        %v1337 = vpop.f32.mrf.mxu0
        %v1338 = vadd.f32 0.0, %v1337
        %1339 = vdwg.mxu0
        %v1340 = vld [vmem:[%s315] sm:$0xff]
        %v1341 = vld [vmem:[%s315 + $0x8] sm:$0xff]
        %v1342 = vld [vmem:[%s315 + $0x10] sm:$0xff]
        %v1343 = vld [vmem:[%s315 + $0x18] sm:$0xff]
        %v1344 = vunpack.c.l.bf16 %v1340
        %v1345 = vunpack.c.h.bf16 %v1340
        %v1346 = vunpack.c.l.bf16 %v1341
        %v1347 = vunpack.c.h.bf16 %v1341
        %v1348 = vunpack.c.l.bf16 %v1342
        %v1349 = vunpack.c.h.bf16 %v1342
        %v1350 = vunpack.c.l.bf16 %v1343
        %v1351 = vunpack.c.h.bf16 %v1343
        %v1352 = vadd.f32 %v1344, %v1203
        %v1353 = vadd.f32 %v1345, %v1205
        %v1354 = vadd.f32 %v1346, %v1246
        %v1355 = vadd.f32 %v1347, %v1248
        %v1356 = vadd.f32 %v1348, %v1207
        %v1357 = vadd.f32 %v1349, %v1209
        %v1358 = vadd.f32 %v1350, %v1250
        %v1359 = vadd.f32 %v1351, %v1252
        %s1360 = scalar_lea.vmem %s322, 96 [#allocation5]
        %v1361 = vld [vmem:[%s1360] sm:$0xff]
        %v1362 = vld [vmem:[%s1360 + $0x8] sm:$0xff]
        %v1363 = vld [vmem:[%s1360 + $0x10] sm:$0xff]
        %v1364 = vld [vmem:[%s1360 + $0x18] sm:$0xff]
        %v1365 = vunpack.c.l.bf16 %v1361
        %v1366 = vunpack.c.h.bf16 %v1361
        %v1367 = vunpack.c.l.bf16 %v1362
        %v1368 = vunpack.c.h.bf16 %v1362
        %v1369 = vunpack.c.l.bf16 %v1363
        %v1370 = vunpack.c.h.bf16 %v1363
        %v1371 = vunpack.c.l.bf16 %v1364
        %v1372 = vunpack.c.h.bf16 %v1364
        %v1373 = vadd.f32 %v1365, %v1289
        %v1374 = vadd.f32 %v1366, %v1291
        %v1375 = vadd.f32 %v1367, %v1332
        %v1376 = vadd.f32 %v1368, %v1334
        %v1377 = vadd.f32 %v1369, %v1293
        %v1378 = vadd.f32 %v1370, %v1295
        %v1379 = vadd.f32 %v1371, %v1336
        %v1380 = vadd.f32 %v1372, %v1338
        %v1381 = vxor.u32 %v1352, 2147483648
        %v1382 = vxor.u32 %v1353, 2147483648
        %v1383 = vxor.u32 %v1354, 2147483648
        %v1384 = vxor.u32 %v1356, 2147483648
        %v1385 = vxor.u32 %v1357, 2147483648
        %v1386 = vxor.u32 %v1358, 2147483648
        %v1387 = vmul.f32 %v1381, 1.442695
        %v1388 = vpow.pop %v1387
        %v1389 = vmul.f32 %v1382, 1.442695
        %v1390 = vpow.pop %v1389
        %v1391 = vmul.f32 %v1383, 1.442695
        %v1392 = vpow.pop %v1391
        %v1393 = vmul.f32 %v1384, 1.442695
        %v1394 = vpow.pop %v1393
        %v1395 = vmul.f32 %v1385, 1.442695
        %v1396 = vpow.pop %v1395
        %v1397 = vmul.f32 %v1386, 1.442695
        %v1398 = vpow.pop %v1397
        %v1399 = vadd.f32 %v1388, 1.0
        %v1400 = vadd.f32 %v1390, 1.0
        %v1401 = vadd.f32 %v1392, 1.0
        %v1402 = vadd.f32 %v1394, 1.0
        %v1403 = vadd.f32 %v1396, 1.0
        %v1404 = vadd.f32 %v1398, 1.0
        %v1405 = vrcp.pop %v1399
        %v1406 = vmul.f32 1.0, %v1405
        %v1407 = vrcp.pop %v1400
        %v1408 = vmul.f32 1.0, %v1407
        %v1409 = vrcp.pop %v1401
        %v1410 = vmul.f32 1.0, %v1409
        %v1411 = vrcp.pop %v1402
        %v1412 = vmul.f32 1.0, %v1411
        %v1413 = vrcp.pop %v1403
        %v1414 = vmul.f32 1.0, %v1413
        %v1415 = vrcp.pop %v1404
        %v1416 = vmul.f32 1.0, %v1415
        %v1417 = vxor.u32 %v1373, 2147483648
        %v1418 = vxor.u32 %v1374, 2147483648
        %v1419 = vxor.u32 %v1375, 2147483648
        %v1420 = vxor.u32 %v1377, 2147483648
        %v1421 = vxor.u32 %v1378, 2147483648
        %v1422 = vxor.u32 %v1379, 2147483648
        %v1423 = vmul.f32 %v1417, 1.442695
        %v1424 = vpow.pop %v1423
        %v1425 = vmul.f32 %v1418, 1.442695
        %v1426 = vpow.pop %v1425
        %v1427 = vmul.f32 %v1419, 1.442695
        %v1428 = vpow.pop %v1427
        %v1429 = vmul.f32 %v1420, 1.442695
        %v1430 = vpow.pop %v1429
        %v1431 = vmul.f32 %v1421, 1.442695
        %v1432 = vpow.pop %v1431
        %v1433 = vmul.f32 %v1422, 1.442695
        %v1434 = vpow.pop %v1433
        %v1435 = vadd.f32 %v1424, 1.0
        %v1436 = vadd.f32 %v1426, 1.0
        %v1437 = vadd.f32 %v1428, 1.0
        %v1438 = vadd.f32 %v1430, 1.0
        %v1439 = vadd.f32 %v1432, 1.0
        %v1440 = vadd.f32 %v1434, 1.0
        %v1441 = vrcp.pop %v1435
        %v1442 = vmul.f32 1.0, %v1441
        %v1443 = vrcp.pop %v1436
        %v1444 = vmul.f32 1.0, %v1443
        %v1445 = vrcp.pop %v1437
        %v1446 = vmul.f32 1.0, %v1445
        %v1447 = vrcp.pop %v1438
        %v1448 = vmul.f32 1.0, %v1447
        %v1449 = vrcp.pop %v1439
        %v1450 = vmul.f32 1.0, %v1449
        %v1451 = vrcp.pop %v1440
        %v1452 = vmul.f32 1.0, %v1451
        %v1453 = vtanh.pop %v1355
        %v1454 = vtanh.pop %v1359
        %v1455 = vtanh.pop %v1376
        %v1456 = vtanh.pop %v1380
        %v1457 = vld [vmem:[#allocation3] sm:$0xff]
        %v1458 = vld [vmem:[#allocation3 + $0x10] sm:$0xff]
        %v1459 = vmul.f32 %v1408, %v1457
        %v1460 = vmul.f32 %v1414, %v1458
        %v1461 = vmul.f32 %v1406, %v1453
        %v1462 = vmul.f32 %v1412, %v1454
        %v1463 = vadd.f32 %v1459, %v1461
        %v1464 = vadd.f32 %v1460, %v1462
        %v1465 = vld [vmem:[#allocation3 + $0x8] sm:$0xff]
        %v1466 = vld [vmem:[#allocation3 + $0x18] sm:$0xff]
        %v1467 = vmul.f32 %v1444, %v1465
        %v1468 = vmul.f32 %v1450, %v1466
        %v1469 = vmul.f32 %v1442, %v1455
        %v1470 = vmul.f32 %v1448, %v1456
        %v1471 = vadd.f32 %v1467, %v1469
        %v1472 = vadd.f32 %v1468, %v1470
        %v1473 = vtanh.pop %v1463
        %v1474 = vtanh.pop %v1464
        %v1475 = vmul.f32 %v1410, %v1473
        %v1476 = vmul.f32 %v1416, %v1474
        %v1477 = vtanh.pop %v1471
        %v1478 = vtanh.pop %v1472
        %v1479 = vmul.f32 %v1446, %v1477
        %v1480 = vmul.f32 %v1452, %v1478
        %v1481 = vstv %s520
        %vm1482 = vcmp.lt.s32.totalorder %v1481, %v390
        %vm1483 = vcmp.lt.s32.totalorder %v1481, %v391
        %v1484 = vstv %s521
        %vm1485 = vcmp.lt.s32.totalorder %v1484, %v390
        %vm1486 = vcmp.lt.s32.totalorder %v1484, %v391
        %v1487 = vsel %vm1482, 1, 0
        %v1488 = vsel %vm1483, 1, 0
        %1489 = vset.pattern.permute.xlu0 0
        %1490 = vperm.xlu0 %1489, %v1487
        %v1491 = vpop.permute.xlu0 %1490
        %1492 = vset.pattern.permute.xlu0 0
        %1493 = vperm.xlu0 %1492, %v1488
        %v1494 = vpop.permute.xlu0 %1493
        %vm1495 = vcmp.eq.s32.totalorder %v1491, 1
        %vm1496 = vcmp.eq.s32.totalorder %v1494, 1
        %v1497 = vsel %vm1495, %v1463, %v1457
        %v1498 = vsel %vm1496, %v1464, %v1458
        %1499 = vst [vmem:[#allocation3] sm:$0xff] %v1497
        %1500 = vst [vmem:[#allocation3 + $0x10] sm:$0xff] %v1498
        %v1501 = vld [vmem:[#allocation2] sm:$0xff]
        %v1502 = vld [vmem:[#allocation2 + $0x10] sm:$0xff]
        %v1503 = vsel %vm1495, %v1475, %v1501
        %v1504 = vsel %vm1496, %v1476, %v1502
        %1505 = vst [vmem:[#allocation2] sm:$0xff] %v1503
        %1506 = vst [vmem:[#allocation2 + $0x10] sm:$0xff] %v1504
        %v1507 = vld [vmem:[#allocation3 + $0x8] sm:$0xff]
        %v1508 = vld [vmem:[#allocation3 + $0x18] sm:$0xff]
        %v1509 = vsel %vm1485, 1, 0
        %v1510 = vsel %vm1486, 1, 0
        %1511 = vset.pattern.permute.xlu0 0
        %1512 = vperm.xlu0 %1511, %v1509
        %v1513 = vpop.permute.xlu0 %1512
        %1514 = vset.pattern.permute.xlu0 0
        %1515 = vperm.xlu0 %1514, %v1510
        %v1516 = vpop.permute.xlu0 %1515
        %vm1517 = vcmp.eq.s32.totalorder %v1513, 1
        %vm1518 = vcmp.eq.s32.totalorder %v1516, 1
        %v1519 = vsel %vm1517, %v1471, %v1507
        %v1520 = vsel %vm1518, %v1472, %v1508
        %1521 = vst [vmem:[#allocation3 + $0x8] sm:$0xff] %v1519
        %1522 = vst [vmem:[#allocation3 + $0x18] sm:$0xff] %v1520
        %v1523 = vld [vmem:[#allocation2 + $0x8] sm:$0xff]
        %v1524 = vld [vmem:[#allocation2 + $0x18] sm:$0xff]
        %v1525 = vsel %vm1517, %v1479, %v1523
        %v1526 = vsel %vm1518, %v1480, %v1524
        %1527 = vst [vmem:[#allocation2 + $0x8] sm:$0xff] %v1525
        %1528 = vst [vmem:[#allocation2 + $0x18] sm:$0xff] %v1526
        %v1529 = vsel %vm1495, %v1475, 0.0
        %v1530 = vsel %vm1496, %v1476, 0.0
        %v1531 = vpack.c.bf16 %v1530, %v1529
        %v1533 = vunpack.c.l.b16 %v1531
        %v1534 = vunpack.c.h.b16 %v1531
        %v1535 = vpack.c.b16 %v1533, %v1533
        %v1536 = vpack.c.b16 %v1534, %v1534
        %1539 = vst [vmem:[%s367] sm:$0xf] %v1535
        %1540 = vst [vmem:[%s367 + $0x4] sm:$0xf] %v1536
        %v1541 = vsel %vm1517, %v1479, 0.0
        %v1542 = vsel %vm1518, %v1480, 0.0
        %v1543 = vpack.c.bf16 %v1542, %v1541
        %v1545 = vunpack.c.l.b16 %v1543
        %v1546 = vunpack.c.h.b16 %v1543
        %v1547 = vpack.c.b16 %v1545, %v1545
        %v1548 = vpack.c.b16 %v1546, %v1546
        %s1551 = scalar_lea.vmem %s375, 24
        %1552 = vst [vmem:[%s1551] sm:$0xf] %v1547
        %1553 = vst [vmem:[%s1551 + $0x4] sm:$0xf] %v1548
        %s1554 = sadd.s32 %s520, 1
        %s1555 = ssub.s32 6, %s520
        %v1556 = vld [vmem:[#allocation2] sm:$0xff]
        %v1557 = vld [vmem:[#allocation2 + $0x8] sm:$0xff]
        %v1558 = vld [vmem:[#allocation2 + $0x10] sm:$0xff]
        %v1559 = vld [vmem:[#allocation2 + $0x18] sm:$0xff]
        %v1560 = vpack.c.bf16 %v1558, %v1556
        %v1561 = vpack.c.bf16 %v1559, %v1557
        %1562 = vmatprep.subr.bf16.mxu0 %v969
        %1563 = vmatpush1.bf16.msra.mxu0 %v968
        %1564 = vmatprep.subr.bf16.mxu0 %v961
        %1565 = vmatpush1.bf16.msra.mxu0 %v960
        %1566 = vmatprep.subr.bf16.mxu0 %v953
        %1567 = vmatpush1.bf16.msra.mxu0 %v952
        %1568 = vmatprep.subr.bf16.mxu0 %v945
        %1569 = vmatpush1.bf16.msra.mxu0 %v944
        %1570 = vmatprep.subr.bf16.mxu0 %v937
        %1571 = vmatpush1.bf16.msra.mxu0 %v936
        %1572 = vmatprep.subr.bf16.mxu0 %v929
        %1573 = vmatpush1.bf16.msra.mxu0 %v928
        %1574 = vmatprep.subr.bf16.mxu0 %v921
        %1575 = vmatpush1.bf16.msra.mxu0 %v920
        %1576 = vmatprep.subr.bf16.mxu0 %v913
        %1577 = vmatpush1.bf16.msra.mxu0 %v912
        %1578 = vmatprep.subr.bf16.mxu0 %v1033
        %1579 = vmatpush2.bf16.msra.mxu0 %v1032
        %1580 = vmatprep.subr.bf16.mxu0 %v1025
        %1581 = vmatpush2.bf16.msra.mxu0 %v1024
        %1582 = vmatprep.subr.bf16.mxu0 %v1017
        %1583 = vmatpush2.bf16.msra.mxu0 %v1016
        %1584 = vmatprep.subr.bf16.mxu0 %v1009
        %1585 = vmatpush2.bf16.msra.mxu0 %v1008
        %1586 = vmatprep.subr.bf16.mxu0 %v1001
        %1587 = vmatpush2.bf16.msra.mxu0 %v1000
        %1588 = vmatprep.subr.bf16.mxu0 %v993
        %1589 = vmatpush2.bf16.msra.mxu0 %v992
        %1590 = vmatprep.subr.bf16.mxu0 %v985
        %1591 = vmatpush2.bf16.msra.mxu0 %v984
        %1592 = vmatprep.subr.bf16.mxu0 %v977
        %1593 = vmatpush2.bf16.msra.mxu0 %v976
        %1594 = vmatprep.mubr.bf16.mxu0 %v1561
        %1595 = vmatmul.mubr.bf16.gmra.mxu0 %v1560
        %v1596 = vpop.f32.mrf.mxu0
        %v1597 = vadd.f32 0.0, %v1596
        %v1598 = vpop.f32.mrf.mxu0
        %v1599 = vadd.f32 0.0, %v1598
        %v1600 = vpop.f32.mrf.mxu0
        %v1601 = vadd.f32 0.0, %v1600
        %v1602 = vpop.f32.mrf.mxu0
        %v1603 = vadd.f32 0.0, %v1602
        %1604 = vdwg.mxu0
        %1605 = vmatprep.subr.bf16.mxu0 %v971
        %1606 = vmatpush1.bf16.msra.mxu0 %v970
        %1607 = vmatprep.subr.bf16.mxu0 %v963
        %1608 = vmatpush1.bf16.msra.mxu0 %v962
        %1609 = vmatprep.subr.bf16.mxu0 %v955
        %1610 = vmatpush1.bf16.msra.mxu0 %v954
        %1611 = vmatprep.subr.bf16.mxu0 %v947
        %1612 = vmatpush1.bf16.msra.mxu0 %v946
        %1613 = vmatprep.subr.bf16.mxu0 %v939
        %1614 = vmatpush1.bf16.msra.mxu0 %v938
        %1615 = vmatprep.subr.bf16.mxu0 %v931
        %1616 = vmatpush1.bf16.msra.mxu0 %v930
        %1617 = vmatprep.subr.bf16.mxu0 %v923
        %1618 = vmatpush1.bf16.msra.mxu0 %v922
        %1619 = vmatprep.subr.bf16.mxu0 %v915
        %1620 = vmatpush1.bf16.msra.mxu0 %v914
        %1621 = vmatprep.subr.bf16.mxu0 %v1035
        %1622 = vmatpush2.bf16.msra.mxu0 %v1034
        %1623 = vmatprep.subr.bf16.mxu0 %v1027
        %1624 = vmatpush2.bf16.msra.mxu0 %v1026
        %1625 = vmatprep.subr.bf16.mxu0 %v1019
        %1626 = vmatpush2.bf16.msra.mxu0 %v1018
        %1627 = vmatprep.subr.bf16.mxu0 %v1011
        %1628 = vmatpush2.bf16.msra.mxu0 %v1010
        %1629 = vmatprep.subr.bf16.mxu0 %v1003
        %1630 = vmatpush2.bf16.msra.mxu0 %v1002
        %1631 = vmatprep.subr.bf16.mxu0 %v995
        %1632 = vmatpush2.bf16.msra.mxu0 %v994
        %1633 = vmatprep.subr.bf16.mxu0 %v987
        %1634 = vmatpush2.bf16.msra.mxu0 %v986
        %1635 = vmatprep.subr.bf16.mxu0 %v979
        %1636 = vmatpush2.bf16.msra.mxu0 %v978
        %1637 = vmatprep.mubr.bf16.mxu0 %v1561
        %1638 = vmatmul.mubr.bf16.gmra.mxu0 %v1560
        %v1639 = vpop.f32.mrf.mxu0
        %v1640 = vadd.f32 0.0, %v1639
        %v1641 = vpop.f32.mrf.mxu0
        %v1642 = vadd.f32 0.0, %v1641
        %v1643 = vpop.f32.mrf.mxu0
        %v1644 = vadd.f32 0.0, %v1643
        %v1645 = vpop.f32.mrf.mxu0
        %v1646 = vadd.f32 0.0, %v1645
        %1647 = vdwg.mxu0
        %1648 = vmatprep.subr.bf16.mxu0 %v973
        %1649 = vmatpush1.bf16.msra.mxu0 %v972
        %1650 = vmatprep.subr.bf16.mxu0 %v965
        %1651 = vmatpush1.bf16.msra.mxu0 %v964
        %1652 = vmatprep.subr.bf16.mxu0 %v957
        %1653 = vmatpush1.bf16.msra.mxu0 %v956
        %1654 = vmatprep.subr.bf16.mxu0 %v949
        %1655 = vmatpush1.bf16.msra.mxu0 %v948
        %1656 = vmatprep.subr.bf16.mxu0 %v941
        %1657 = vmatpush1.bf16.msra.mxu0 %v940
        %1658 = vmatprep.subr.bf16.mxu0 %v933
        %1659 = vmatpush1.bf16.msra.mxu0 %v932
        %1660 = vmatprep.subr.bf16.mxu0 %v925
        %1661 = vmatpush1.bf16.msra.mxu0 %v924
        %1662 = vmatprep.subr.bf16.mxu0 %v917
        %1663 = vmatpush1.bf16.msra.mxu0 %v916
        %1664 = vmatprep.subr.bf16.mxu0 %v1037
        %1665 = vmatpush2.bf16.msra.mxu0 %v1036
        %1666 = vmatprep.subr.bf16.mxu0 %v1029
        %1667 = vmatpush2.bf16.msra.mxu0 %v1028
        %1668 = vmatprep.subr.bf16.mxu0 %v1021
        %1669 = vmatpush2.bf16.msra.mxu0 %v1020
        %1670 = vmatprep.subr.bf16.mxu0 %v1013
        %1671 = vmatpush2.bf16.msra.mxu0 %v1012
        %1672 = vmatprep.subr.bf16.mxu0 %v1005
        %1673 = vmatpush2.bf16.msra.mxu0 %v1004
        %1674 = vmatprep.subr.bf16.mxu0 %v997
        %1675 = vmatpush2.bf16.msra.mxu0 %v996
        %1676 = vmatprep.subr.bf16.mxu0 %v989
        %1677 = vmatpush2.bf16.msra.mxu0 %v988
        %1678 = vmatprep.subr.bf16.mxu0 %v981
        %1679 = vmatpush2.bf16.msra.mxu0 %v980
        %1680 = vmatprep.mubr.bf16.mxu0 %v1561
        %1681 = vmatmul.mubr.bf16.gmra.mxu0 %v1560
        %v1682 = vpop.f32.mrf.mxu0
        %v1683 = vadd.f32 0.0, %v1682
        %v1684 = vpop.f32.mrf.mxu0
        %v1685 = vadd.f32 0.0, %v1684
        %v1686 = vpop.f32.mrf.mxu0
        %v1687 = vadd.f32 0.0, %v1686
        %v1688 = vpop.f32.mrf.mxu0
        %v1689 = vadd.f32 0.0, %v1688
        %1690 = vdwg.mxu0
        %1691 = vmatprep.subr.bf16.mxu0 %v975
        %1692 = vmatpush1.bf16.msra.mxu0 %v974
        %1693 = vmatprep.subr.bf16.mxu0 %v967
        %1694 = vmatpush1.bf16.msra.mxu0 %v966
        %1695 = vmatprep.subr.bf16.mxu0 %v959
        %1696 = vmatpush1.bf16.msra.mxu0 %v958
        %1697 = vmatprep.subr.bf16.mxu0 %v951
        %1698 = vmatpush1.bf16.msra.mxu0 %v950
        %1699 = vmatprep.subr.bf16.mxu0 %v943
        %1700 = vmatpush1.bf16.msra.mxu0 %v942
        %1701 = vmatprep.subr.bf16.mxu0 %v935
        %1702 = vmatpush1.bf16.msra.mxu0 %v934
        %1703 = vmatprep.subr.bf16.mxu0 %v927
        %1704 = vmatpush1.bf16.msra.mxu0 %v926
        %1705 = vmatprep.subr.bf16.mxu0 %v919
        %1706 = vmatpush1.bf16.msra.mxu0 %v918
        %1707 = vmatprep.subr.bf16.mxu0 %v1039
        %1708 = vmatpush2.bf16.msra.mxu0 %v1038
        %1709 = vmatprep.subr.bf16.mxu0 %v1031
        %1710 = vmatpush2.bf16.msra.mxu0 %v1030
        %1711 = vmatprep.subr.bf16.mxu0 %v1023
        %1712 = vmatpush2.bf16.msra.mxu0 %v1022
        %1713 = vmatprep.subr.bf16.mxu0 %v1015
        %1714 = vmatpush2.bf16.msra.mxu0 %v1014
        %1715 = vmatprep.subr.bf16.mxu0 %v1007
        %1716 = vmatpush2.bf16.msra.mxu0 %v1006
        %1717 = vmatprep.subr.bf16.mxu0 %v999
        %1718 = vmatpush2.bf16.msra.mxu0 %v998
        %1719 = vmatprep.subr.bf16.mxu0 %v991
        %1720 = vmatpush2.bf16.msra.mxu0 %v990
        %1721 = vmatprep.subr.bf16.mxu0 %v983
        %1722 = vmatpush2.bf16.msra.mxu0 %v982
        %1723 = vmatprep.mubr.bf16.mxu0 %v1561
        %1724 = vmatmul.mubr.bf16.gmra.mxu0 %v1560
        %v1725 = vpop.f32.mrf.mxu0
        %v1726 = vadd.f32 0.0, %v1725
        %v1727 = vpop.f32.mrf.mxu0
        %v1728 = vadd.f32 0.0, %v1727
        %v1729 = vpop.f32.mrf.mxu0
        %v1730 = vadd.f32 0.0, %v1729
        %v1731 = vpop.f32.mrf.mxu0
        %v1732 = vadd.f32 0.0, %v1731
        %1733 = vdwg.mxu0
        %s1734 = scalar_lea.vmem %s315, 32 [#allocation4]
        %v1735 = vld [vmem:[%s1734] sm:$0xff]
        %v1736 = vld [vmem:[%s1734 + $0x8] sm:$0xff]
        %v1737 = vld [vmem:[%s1734 + $0x10] sm:$0xff]
        %v1738 = vld [vmem:[%s1734 + $0x18] sm:$0xff]
        %v1739 = vunpack.c.l.bf16 %v1735
        %v1740 = vunpack.c.h.bf16 %v1735
        %v1741 = vunpack.c.l.bf16 %v1736
        %v1742 = vunpack.c.h.bf16 %v1736
        %v1743 = vunpack.c.l.bf16 %v1737
        %v1744 = vunpack.c.h.bf16 %v1737
        %v1745 = vunpack.c.l.bf16 %v1738
        %v1746 = vunpack.c.h.bf16 %v1738
        %v1747 = vadd.f32 %v1739, %v1597
        %v1748 = vadd.f32 %v1740, %v1599
        %v1749 = vadd.f32 %v1741, %v1640
        %v1750 = vadd.f32 %v1742, %v1642
        %v1751 = vadd.f32 %v1743, %v1601
        %v1752 = vadd.f32 %v1744, %v1603
        %v1753 = vadd.f32 %v1745, %v1644
        %v1754 = vadd.f32 %v1746, %v1646
        %s1755 = scalar_lea.vmem %s322, 64 [#allocation5]
        %v1756 = vld [vmem:[%s1755] sm:$0xff]
        %v1757 = vld [vmem:[%s1755 + $0x8] sm:$0xff]
        %v1758 = vld [vmem:[%s1755 + $0x10] sm:$0xff]
        %v1759 = vld [vmem:[%s1755 + $0x18] sm:$0xff]
        %v1760 = vunpack.c.l.bf16 %v1756
        %v1761 = vunpack.c.h.bf16 %v1756
        %v1762 = vunpack.c.l.bf16 %v1757
        %v1763 = vunpack.c.h.bf16 %v1757
        %v1764 = vunpack.c.l.bf16 %v1758
        %v1765 = vunpack.c.h.bf16 %v1758
        %v1766 = vunpack.c.l.bf16 %v1759
        %v1767 = vunpack.c.h.bf16 %v1759
        %v1768 = vadd.f32 %v1760, %v1683
        %v1769 = vadd.f32 %v1761, %v1685
        %v1770 = vadd.f32 %v1762, %v1726
        %v1771 = vadd.f32 %v1763, %v1728
        %v1772 = vadd.f32 %v1764, %v1687
        %v1773 = vadd.f32 %v1765, %v1689
        %v1774 = vadd.f32 %v1766, %v1730
        %v1775 = vadd.f32 %v1767, %v1732
        %v1776 = vxor.u32 %v1747, 2147483648
        %v1777 = vxor.u32 %v1748, 2147483648
        %v1778 = vxor.u32 %v1749, 2147483648
        %v1779 = vxor.u32 %v1751, 2147483648
        %v1780 = vxor.u32 %v1752, 2147483648
        %v1781 = vxor.u32 %v1753, 2147483648
        %v1782 = vmul.f32 %v1776, 1.442695
        %v1783 = vpow.pop %v1782
        %v1784 = vmul.f32 %v1777, 1.442695
        %v1785 = vpow.pop %v1784
        %v1786 = vmul.f32 %v1778, 1.442695
        %v1787 = vpow.pop %v1786
        %v1788 = vmul.f32 %v1779, 1.442695
        %v1789 = vpow.pop %v1788
        %v1790 = vmul.f32 %v1780, 1.442695
        %v1791 = vpow.pop %v1790
        %v1792 = vmul.f32 %v1781, 1.442695
        %v1793 = vpow.pop %v1792
        %v1794 = vadd.f32 %v1783, 1.0
        %v1795 = vadd.f32 %v1785, 1.0
        %v1796 = vadd.f32 %v1787, 1.0
        %v1797 = vadd.f32 %v1789, 1.0
        %v1798 = vadd.f32 %v1791, 1.0
        %v1799 = vadd.f32 %v1793, 1.0
        %v1800 = vrcp.pop %v1794
        %v1801 = vmul.f32 1.0, %v1800
        %v1802 = vrcp.pop %v1795
        %v1803 = vmul.f32 1.0, %v1802
        %v1804 = vrcp.pop %v1796
        %v1805 = vmul.f32 1.0, %v1804
        %v1806 = vrcp.pop %v1797
        %v1807 = vmul.f32 1.0, %v1806
        %v1808 = vrcp.pop %v1798
        %v1809 = vmul.f32 1.0, %v1808
        %v1810 = vrcp.pop %v1799
        %v1811 = vmul.f32 1.0, %v1810
        %v1812 = vxor.u32 %v1768, 2147483648
        %v1813 = vxor.u32 %v1769, 2147483648
        %v1814 = vxor.u32 %v1770, 2147483648
        %v1815 = vxor.u32 %v1772, 2147483648
        %v1816 = vxor.u32 %v1773, 2147483648
        %v1817 = vxor.u32 %v1774, 2147483648
        %v1818 = vmul.f32 %v1812, 1.442695
        %v1819 = vpow.pop %v1818
        %v1820 = vmul.f32 %v1813, 1.442695
        %v1821 = vpow.pop %v1820
        %v1822 = vmul.f32 %v1814, 1.442695
        %v1823 = vpow.pop %v1822
        %v1824 = vmul.f32 %v1815, 1.442695
        %v1825 = vpow.pop %v1824
        %v1826 = vmul.f32 %v1816, 1.442695
        %v1827 = vpow.pop %v1826
        %v1828 = vmul.f32 %v1817, 1.442695
        %v1829 = vpow.pop %v1828
        %v1830 = vadd.f32 %v1819, 1.0
        %v1831 = vadd.f32 %v1821, 1.0
        %v1832 = vadd.f32 %v1823, 1.0
        %v1833 = vadd.f32 %v1825, 1.0
        %v1834 = vadd.f32 %v1827, 1.0
        %v1835 = vadd.f32 %v1829, 1.0
        %v1836 = vrcp.pop %v1830
        %v1837 = vmul.f32 1.0, %v1836
        %v1838 = vrcp.pop %v1831
        %v1839 = vmul.f32 1.0, %v1838
        %v1840 = vrcp.pop %v1832
        %v1841 = vmul.f32 1.0, %v1840
        %v1842 = vrcp.pop %v1833
        %v1843 = vmul.f32 1.0, %v1842
        %v1844 = vrcp.pop %v1834
        %v1845 = vmul.f32 1.0, %v1844
        %v1846 = vrcp.pop %v1835
        %v1847 = vmul.f32 1.0, %v1846
        %v1848 = vtanh.pop %v1750
        %v1849 = vtanh.pop %v1754
        %v1850 = vtanh.pop %v1771
        %v1851 = vtanh.pop %v1775
        %v1852 = vld [vmem:[#allocation3] sm:$0xff]
        %v1853 = vld [vmem:[#allocation3 + $0x10] sm:$0xff]
        %v1854 = vmul.f32 %v1803, %v1852
        %v1855 = vmul.f32 %v1809, %v1853
        %v1856 = vmul.f32 %v1801, %v1848
        %v1857 = vmul.f32 %v1807, %v1849
        %v1858 = vadd.f32 %v1854, %v1856
        %v1859 = vadd.f32 %v1855, %v1857
        %v1860 = vld [vmem:[#allocation3 + $0x8] sm:$0xff]
        %v1861 = vld [vmem:[#allocation3 + $0x18] sm:$0xff]
        %v1862 = vmul.f32 %v1839, %v1860
        %v1863 = vmul.f32 %v1845, %v1861
        %v1864 = vmul.f32 %v1837, %v1850
        %v1865 = vmul.f32 %v1843, %v1851
        %v1866 = vadd.f32 %v1862, %v1864
        %v1867 = vadd.f32 %v1863, %v1865
        %v1868 = vtanh.pop %v1858
        %v1869 = vtanh.pop %v1859
        %v1870 = vmul.f32 %v1805, %v1868
        %v1871 = vmul.f32 %v1811, %v1869
        %v1872 = vtanh.pop %v1866
        %v1873 = vtanh.pop %v1867
        %v1874 = vmul.f32 %v1841, %v1872
        %v1875 = vmul.f32 %v1847, %v1873
        %v1876 = vstv %s1554
        %vm1877 = vcmp.lt.s32.totalorder %v1876, %v390
        %vm1878 = vcmp.lt.s32.totalorder %v1876, %v391
        %v1879 = vstv %s1555
        %vm1880 = vcmp.lt.s32.totalorder %v1879, %v390
        %vm1881 = vcmp.lt.s32.totalorder %v1879, %v391
        %v1882 = vsel %vm1877, 1, 0
        %v1883 = vsel %vm1878, 1, 0
        %1884 = vset.pattern.permute.xlu0 0
        %1885 = vperm.xlu0 %1884, %v1882
        %v1886 = vpop.permute.xlu0 %1885
        %1887 = vset.pattern.permute.xlu0 0
        %1888 = vperm.xlu0 %1887, %v1883
        %v1889 = vpop.permute.xlu0 %1888
        %vm1890 = vcmp.eq.s32.totalorder %v1886, 1
        %vm1891 = vcmp.eq.s32.totalorder %v1889, 1
        %v1892 = vsel %vm1890, %v1858, %v1852
        %v1893 = vsel %vm1891, %v1859, %v1853
        %1894 = vst [vmem:[#allocation3] sm:$0xff] %v1892
        %1895 = vst [vmem:[#allocation3 + $0x10] sm:$0xff] %v1893
        %v1896 = vld [vmem:[#allocation2] sm:$0xff]
        %v1897 = vld [vmem:[#allocation2 + $0x10] sm:$0xff]
        %v1898 = vsel %vm1890, %v1870, %v1896
        %v1899 = vsel %vm1891, %v1871, %v1897
        %1900 = vst [vmem:[#allocation2] sm:$0xff] %v1898
        %1901 = vst [vmem:[#allocation2 + $0x10] sm:$0xff] %v1899
        %v1902 = vld [vmem:[#allocation3 + $0x8] sm:$0xff]
        %v1903 = vld [vmem:[#allocation3 + $0x18] sm:$0xff]
        %v1904 = vsel %vm1880, 1, 0
        %v1905 = vsel %vm1881, 1, 0
        %1906 = vset.pattern.permute.xlu0 0
        %1907 = vperm.xlu0 %1906, %v1904
        %v1908 = vpop.permute.xlu0 %1907
        %1909 = vset.pattern.permute.xlu0 0
        %1910 = vperm.xlu0 %1909, %v1905
        %v1911 = vpop.permute.xlu0 %1910
        %vm1912 = vcmp.eq.s32.totalorder %v1908, 1
        %vm1913 = vcmp.eq.s32.totalorder %v1911, 1
        %v1914 = vsel %vm1912, %v1866, %v1902
        %v1915 = vsel %vm1913, %v1867, %v1903
        %1916 = vst [vmem:[#allocation3 + $0x8] sm:$0xff] %v1914
        %1917 = vst [vmem:[#allocation3 + $0x18] sm:$0xff] %v1915
        %v1918 = vld [vmem:[#allocation2 + $0x8] sm:$0xff]
        %v1919 = vld [vmem:[#allocation2 + $0x18] sm:$0xff]
        %v1920 = vsel %vm1912, %v1874, %v1918
        %v1921 = vsel %vm1913, %v1875, %v1919
        %1922 = vst [vmem:[#allocation2 + $0x8] sm:$0xff] %v1920
        %1923 = vst [vmem:[#allocation2 + $0x18] sm:$0xff] %v1921
        %v1924 = vsel %vm1890, %v1870, 0.0
        %v1925 = vsel %vm1891, %v1871, 0.0
        %v1926 = vpack.c.bf16 %v1925, %v1924
        %v1928 = vunpack.c.l.b16 %v1926
        %v1929 = vunpack.c.h.b16 %v1926
        %v1930 = vpack.c.b16 %v1928, %v1928
        %v1931 = vpack.c.b16 %v1929, %v1929
        %s1934 = scalar_lea.vmem %s367, 8
        %1935 = vst [vmem:[%s1934] sm:$0xf] %v1930
        %1936 = vst [vmem:[%s1934 + $0x4] sm:$0xf] %v1931
        %v1937 = vsel %vm1912, %v1874, 0.0
        %v1938 = vsel %vm1913, %v1875, 0.0
        %v1939 = vpack.c.bf16 %v1938, %v1937
        %v1941 = vunpack.c.l.b16 %v1939
        %v1942 = vunpack.c.h.b16 %v1939
        %v1943 = vpack.c.b16 %v1941, %v1941
        %v1944 = vpack.c.b16 %v1942, %v1942
        %s1947 = scalar_lea.vmem %s375, 16
        %1948 = vst [vmem:[%s1947] sm:$0xf] %v1943
        %1949 = vst [vmem:[%s1947 + $0x4] sm:$0xf] %v1944
        %s1950 = sadd.s32 %s520, 2
        %s1951 = ssub.s32 5, %s520
        %v1952 = vld [vmem:[#allocation2] sm:$0xff]
        %v1953 = vld [vmem:[#allocation2 + $0x8] sm:$0xff]
        %v1954 = vld [vmem:[#allocation2 + $0x10] sm:$0xff]
        %v1955 = vld [vmem:[#allocation2 + $0x18] sm:$0xff]
        %v1956 = vpack.c.bf16 %v1954, %v1952
        %v1957 = vpack.c.bf16 %v1955, %v1953
        %1958 = vmatprep.subr.bf16.mxu0 %v969
        %1959 = vmatpush1.bf16.msra.mxu0 %v968
        %1960 = vmatprep.subr.bf16.mxu0 %v961
        %1961 = vmatpush1.bf16.msra.mxu0 %v960
        %1962 = vmatprep.subr.bf16.mxu0 %v953
        %1963 = vmatpush1.bf16.msra.mxu0 %v952
        %1964 = vmatprep.subr.bf16.mxu0 %v945
        %1965 = vmatpush1.bf16.msra.mxu0 %v944
        %1966 = vmatprep.subr.bf16.mxu0 %v937
        %1967 = vmatpush1.bf16.msra.mxu0 %v936
        %1968 = vmatprep.subr.bf16.mxu0 %v929
        %1969 = vmatpush1.bf16.msra.mxu0 %v928
        %1970 = vmatprep.subr.bf16.mxu0 %v921
        %1971 = vmatpush1.bf16.msra.mxu0 %v920
        %1972 = vmatprep.subr.bf16.mxu0 %v913
        %1973 = vmatpush1.bf16.msra.mxu0 %v912
        %1974 = vmatprep.subr.bf16.mxu0 %v1033
        %1975 = vmatpush2.bf16.msra.mxu0 %v1032
        %1976 = vmatprep.subr.bf16.mxu0 %v1025
        %1977 = vmatpush2.bf16.msra.mxu0 %v1024
        %1978 = vmatprep.subr.bf16.mxu0 %v1017
        %1979 = vmatpush2.bf16.msra.mxu0 %v1016
        %1980 = vmatprep.subr.bf16.mxu0 %v1009
        %1981 = vmatpush2.bf16.msra.mxu0 %v1008
        %1982 = vmatprep.subr.bf16.mxu0 %v1001
        %1983 = vmatpush2.bf16.msra.mxu0 %v1000
        %1984 = vmatprep.subr.bf16.mxu0 %v993
        %1985 = vmatpush2.bf16.msra.mxu0 %v992
        %1986 = vmatprep.subr.bf16.mxu0 %v985
        %1987 = vmatpush2.bf16.msra.mxu0 %v984
        %1988 = vmatprep.subr.bf16.mxu0 %v977
        %1989 = vmatpush2.bf16.msra.mxu0 %v976
        %1990 = vmatprep.mubr.bf16.mxu0 %v1957
        %1991 = vmatmul.mubr.bf16.gmra.mxu0 %v1956
        %v1992 = vpop.f32.mrf.mxu0
        %v1993 = vadd.f32 0.0, %v1992
        %v1994 = vpop.f32.mrf.mxu0
        %v1995 = vadd.f32 0.0, %v1994
        %v1996 = vpop.f32.mrf.mxu0
        %v1997 = vadd.f32 0.0, %v1996
        %v1998 = vpop.f32.mrf.mxu0
        %v1999 = vadd.f32 0.0, %v1998
        %2000 = vdwg.mxu0
        %2001 = vmatprep.subr.bf16.mxu0 %v971
        %2002 = vmatpush1.bf16.msra.mxu0 %v970
        %2003 = vmatprep.subr.bf16.mxu0 %v963
        %2004 = vmatpush1.bf16.msra.mxu0 %v962
        %2005 = vmatprep.subr.bf16.mxu0 %v955
        %2006 = vmatpush1.bf16.msra.mxu0 %v954
        %2007 = vmatprep.subr.bf16.mxu0 %v947
        %2008 = vmatpush1.bf16.msra.mxu0 %v946
        %2009 = vmatprep.subr.bf16.mxu0 %v939
        %2010 = vmatpush1.bf16.msra.mxu0 %v938
        %2011 = vmatprep.subr.bf16.mxu0 %v931
        %2012 = vmatpush1.bf16.msra.mxu0 %v930
        %2013 = vmatprep.subr.bf16.mxu0 %v923
        %2014 = vmatpush1.bf16.msra.mxu0 %v922
        %2015 = vmatprep.subr.bf16.mxu0 %v915
        %2016 = vmatpush1.bf16.msra.mxu0 %v914
        %2017 = vmatprep.subr.bf16.mxu0 %v1035
        %2018 = vmatpush2.bf16.msra.mxu0 %v1034
        %2019 = vmatprep.subr.bf16.mxu0 %v1027
        %2020 = vmatpush2.bf16.msra.mxu0 %v1026
        %2021 = vmatprep.subr.bf16.mxu0 %v1019
        %2022 = vmatpush2.bf16.msra.mxu0 %v1018
        %2023 = vmatprep.subr.bf16.mxu0 %v1011
        %2024 = vmatpush2.bf16.msra.mxu0 %v1010
        %2025 = vmatprep.subr.bf16.mxu0 %v1003
        %2026 = vmatpush2.bf16.msra.mxu0 %v1002
        %2027 = vmatprep.subr.bf16.mxu0 %v995
        %2028 = vmatpush2.bf16.msra.mxu0 %v994
        %2029 = vmatprep.subr.bf16.mxu0 %v987
        %2030 = vmatpush2.bf16.msra.mxu0 %v986
        %2031 = vmatprep.subr.bf16.mxu0 %v979
        %2032 = vmatpush2.bf16.msra.mxu0 %v978
        %2033 = vmatprep.mubr.bf16.mxu0 %v1957
        %2034 = vmatmul.mubr.bf16.gmra.mxu0 %v1956
        %v2035 = vpop.f32.mrf.mxu0
        %v2036 = vadd.f32 0.0, %v2035
        %v2037 = vpop.f32.mrf.mxu0
        %v2038 = vadd.f32 0.0, %v2037
        %v2039 = vpop.f32.mrf.mxu0
        %v2040 = vadd.f32 0.0, %v2039
        %v2041 = vpop.f32.mrf.mxu0
        %v2042 = vadd.f32 0.0, %v2041
        %2043 = vdwg.mxu0
        %2044 = vmatprep.subr.bf16.mxu0 %v973
        %2045 = vmatpush1.bf16.msra.mxu0 %v972
        %2046 = vmatprep.subr.bf16.mxu0 %v965
        %2047 = vmatpush1.bf16.msra.mxu0 %v964
        %2048 = vmatprep.subr.bf16.mxu0 %v957
        %2049 = vmatpush1.bf16.msra.mxu0 %v956
        %2050 = vmatprep.subr.bf16.mxu0 %v949
        %2051 = vmatpush1.bf16.msra.mxu0 %v948
        %2052 = vmatprep.subr.bf16.mxu0 %v941
        %2053 = vmatpush1.bf16.msra.mxu0 %v940
        %2054 = vmatprep.subr.bf16.mxu0 %v933
        %2055 = vmatpush1.bf16.msra.mxu0 %v932
        %2056 = vmatprep.subr.bf16.mxu0 %v925
        %2057 = vmatpush1.bf16.msra.mxu0 %v924
        %2058 = vmatprep.subr.bf16.mxu0 %v917
        %2059 = vmatpush1.bf16.msra.mxu0 %v916
        %2060 = vmatprep.subr.bf16.mxu0 %v1037
        %2061 = vmatpush2.bf16.msra.mxu0 %v1036
        %2062 = vmatprep.subr.bf16.mxu0 %v1029
        %2063 = vmatpush2.bf16.msra.mxu0 %v1028
        %2064 = vmatprep.subr.bf16.mxu0 %v1021
        %2065 = vmatpush2.bf16.msra.mxu0 %v1020
        %2066 = vmatprep.subr.bf16.mxu0 %v1013
        %2067 = vmatpush2.bf16.msra.mxu0 %v1012
        %2068 = vmatprep.subr.bf16.mxu0 %v1005
        %2069 = vmatpush2.bf16.msra.mxu0 %v1004
        %2070 = vmatprep.subr.bf16.mxu0 %v997
        %2071 = vmatpush2.bf16.msra.mxu0 %v996
        %2072 = vmatprep.subr.bf16.mxu0 %v989
        %2073 = vmatpush2.bf16.msra.mxu0 %v988
        %2074 = vmatprep.subr.bf16.mxu0 %v981
        %2075 = vmatpush2.bf16.msra.mxu0 %v980
        %2076 = vmatprep.mubr.bf16.mxu0 %v1957
        %2077 = vmatmul.mubr.bf16.gmra.mxu0 %v1956
        %v2078 = vpop.f32.mrf.mxu0
        %v2079 = vadd.f32 0.0, %v2078
        %v2080 = vpop.f32.mrf.mxu0
        %v2081 = vadd.f32 0.0, %v2080
        %v2082 = vpop.f32.mrf.mxu0
        %v2083 = vadd.f32 0.0, %v2082
        %v2084 = vpop.f32.mrf.mxu0
        %v2085 = vadd.f32 0.0, %v2084
        %2086 = vdwg.mxu0
        %2087 = vmatprep.subr.bf16.mxu0 %v975
        %2088 = vmatpush1.bf16.msra.mxu0 %v974
        %2089 = vmatprep.subr.bf16.mxu0 %v967
        %2090 = vmatpush1.bf16.msra.mxu0 %v966
        %2091 = vmatprep.subr.bf16.mxu0 %v959
        %2092 = vmatpush1.bf16.msra.mxu0 %v958
        %2093 = vmatprep.subr.bf16.mxu0 %v951
        %2094 = vmatpush1.bf16.msra.mxu0 %v950
        %2095 = vmatprep.subr.bf16.mxu0 %v943
        %2096 = vmatpush1.bf16.msra.mxu0 %v942
        %2097 = vmatprep.subr.bf16.mxu0 %v935
        %2098 = vmatpush1.bf16.msra.mxu0 %v934
        %2099 = vmatprep.subr.bf16.mxu0 %v927
        %2100 = vmatpush1.bf16.msra.mxu0 %v926
        %2101 = vmatprep.subr.bf16.mxu0 %v919
        %2102 = vmatpush1.bf16.msra.mxu0 %v918
        %2103 = vmatprep.subr.bf16.mxu0 %v1039
        %2104 = vmatpush2.bf16.msra.mxu0 %v1038
        %2105 = vmatprep.subr.bf16.mxu0 %v1031
        %2106 = vmatpush2.bf16.msra.mxu0 %v1030
        %2107 = vmatprep.subr.bf16.mxu0 %v1023
        %2108 = vmatpush2.bf16.msra.mxu0 %v1022
        %2109 = vmatprep.subr.bf16.mxu0 %v1015
        %2110 = vmatpush2.bf16.msra.mxu0 %v1014
        %2111 = vmatprep.subr.bf16.mxu0 %v1007
        %2112 = vmatpush2.bf16.msra.mxu0 %v1006
        %2113 = vmatprep.subr.bf16.mxu0 %v999
        %2114 = vmatpush2.bf16.msra.mxu0 %v998
        %2115 = vmatprep.subr.bf16.mxu0 %v991
        %2116 = vmatpush2.bf16.msra.mxu0 %v990
        %2117 = vmatprep.subr.bf16.mxu0 %v983
        %2118 = vmatpush2.bf16.msra.mxu0 %v982
        %2119 = vmatprep.mubr.bf16.mxu0 %v1957
        %2120 = vmatmul.mubr.bf16.gmra.mxu0 %v1956
        %v2121 = vpop.f32.mrf.mxu0
        %v2122 = vadd.f32 0.0, %v2121
        %v2123 = vpop.f32.mrf.mxu0
        %v2124 = vadd.f32 0.0, %v2123
        %v2125 = vpop.f32.mrf.mxu0
        %v2126 = vadd.f32 0.0, %v2125
        %v2127 = vpop.f32.mrf.mxu0
        %v2128 = vadd.f32 0.0, %v2127
        %2129 = vdwg.mxu0
        %s2130 = scalar_lea.vmem %s315, 64 [#allocation4]
        %v2131 = vld [vmem:[%s2130] sm:$0xff]
        %v2132 = vld [vmem:[%s2130 + $0x8] sm:$0xff]
        %v2133 = vld [vmem:[%s2130 + $0x10] sm:$0xff]
        %v2134 = vld [vmem:[%s2130 + $0x18] sm:$0xff]
        %v2135 = vunpack.c.l.bf16 %v2131
        %v2136 = vunpack.c.h.bf16 %v2131
        %v2137 = vunpack.c.l.bf16 %v2132
        %v2138 = vunpack.c.h.bf16 %v2132
        %v2139 = vunpack.c.l.bf16 %v2133
        %v2140 = vunpack.c.h.bf16 %v2133
        %v2141 = vunpack.c.l.bf16 %v2134
        %v2142 = vunpack.c.h.bf16 %v2134
        %v2143 = vadd.f32 %v2135, %v1993
        %v2144 = vadd.f32 %v2136, %v1995
        %v2145 = vadd.f32 %v2137, %v2036
        %v2146 = vadd.f32 %v2138, %v2038
        %v2147 = vadd.f32 %v2139, %v1997
        %v2148 = vadd.f32 %v2140, %v1999
        %v2149 = vadd.f32 %v2141, %v2040
        %v2150 = vadd.f32 %v2142, %v2042
        %s2151 = scalar_lea.vmem %s322, 32 [#allocation5]
        %v2152 = vld [vmem:[%s2151] sm:$0xff]
        %v2153 = vld [vmem:[%s2151 + $0x8] sm:$0xff]
        %v2154 = vld [vmem:[%s2151 + $0x10] sm:$0xff]
        %v2155 = vld [vmem:[%s2151 + $0x18] sm:$0xff]
        %v2156 = vunpack.c.l.bf16 %v2152
        %v2157 = vunpack.c.h.bf16 %v2152
        %v2158 = vunpack.c.l.bf16 %v2153
        %v2159 = vunpack.c.h.bf16 %v2153
        %v2160 = vunpack.c.l.bf16 %v2154
        %v2161 = vunpack.c.h.bf16 %v2154
        %v2162 = vunpack.c.l.bf16 %v2155
        %v2163 = vunpack.c.h.bf16 %v2155
        %v2164 = vadd.f32 %v2156, %v2079
        %v2165 = vadd.f32 %v2157, %v2081
        %v2166 = vadd.f32 %v2158, %v2122
        %v2167 = vadd.f32 %v2159, %v2124
        %v2168 = vadd.f32 %v2160, %v2083
        %v2169 = vadd.f32 %v2161, %v2085
        %v2170 = vadd.f32 %v2162, %v2126
        %v2171 = vadd.f32 %v2163, %v2128
        %v2172 = vxor.u32 %v2143, 2147483648
        %v2173 = vxor.u32 %v2144, 2147483648
        %v2174 = vxor.u32 %v2145, 2147483648
        %v2175 = vxor.u32 %v2147, 2147483648
        %v2176 = vxor.u32 %v2148, 2147483648
        %v2177 = vxor.u32 %v2149, 2147483648
        %v2178 = vmul.f32 %v2172, 1.442695
        %v2179 = vpow.pop %v2178
        %v2180 = vmul.f32 %v2173, 1.442695
        %v2181 = vpow.pop %v2180
        %v2182 = vmul.f32 %v2174, 1.442695
        %v2183 = vpow.pop %v2182
        %v2184 = vmul.f32 %v2175, 1.442695
        %v2185 = vpow.pop %v2184
        %v2186 = vmul.f32 %v2176, 1.442695
        %v2187 = vpow.pop %v2186
        %v2188 = vmul.f32 %v2177, 1.442695
        %v2189 = vpow.pop %v2188
        %v2190 = vadd.f32 %v2179, 1.0
        %v2191 = vadd.f32 %v2181, 1.0
        %v2192 = vadd.f32 %v2183, 1.0
        %v2193 = vadd.f32 %v2185, 1.0
        %v2194 = vadd.f32 %v2187, 1.0
        %v2195 = vadd.f32 %v2189, 1.0
        %v2196 = vrcp.pop %v2190
        %v2197 = vmul.f32 1.0, %v2196
        %v2198 = vrcp.pop %v2191
        %v2199 = vmul.f32 1.0, %v2198
        %v2200 = vrcp.pop %v2192
        %v2201 = vmul.f32 1.0, %v2200
        %v2202 = vrcp.pop %v2193
        %v2203 = vmul.f32 1.0, %v2202
        %v2204 = vrcp.pop %v2194
        %v2205 = vmul.f32 1.0, %v2204
        %v2206 = vrcp.pop %v2195
        %v2207 = vmul.f32 1.0, %v2206
        %v2208 = vxor.u32 %v2164, 2147483648
        %v2209 = vxor.u32 %v2165, 2147483648
        %v2210 = vxor.u32 %v2166, 2147483648
        %v2211 = vxor.u32 %v2168, 2147483648
        %v2212 = vxor.u32 %v2169, 2147483648
        %v2213 = vxor.u32 %v2170, 2147483648
        %v2214 = vmul.f32 %v2208, 1.442695
        %v2215 = vpow.pop %v2214
        %v2216 = vmul.f32 %v2209, 1.442695
        %v2217 = vpow.pop %v2216
        %v2218 = vmul.f32 %v2210, 1.442695
        %v2219 = vpow.pop %v2218
        %v2220 = vmul.f32 %v2211, 1.442695
        %v2221 = vpow.pop %v2220
        %v2222 = vmul.f32 %v2212, 1.442695
        %v2223 = vpow.pop %v2222
        %v2224 = vmul.f32 %v2213, 1.442695
        %v2225 = vpow.pop %v2224
        %v2226 = vadd.f32 %v2215, 1.0
        %v2227 = vadd.f32 %v2217, 1.0
        %v2228 = vadd.f32 %v2219, 1.0
        %v2229 = vadd.f32 %v2221, 1.0
        %v2230 = vadd.f32 %v2223, 1.0
        %v2231 = vadd.f32 %v2225, 1.0
        %v2232 = vrcp.pop %v2226
        %v2233 = vmul.f32 1.0, %v2232
        %v2234 = vrcp.pop %v2227
        %v2235 = vmul.f32 1.0, %v2234
        %v2236 = vrcp.pop %v2228
        %v2237 = vmul.f32 1.0, %v2236
        %v2238 = vrcp.pop %v2229
        %v2239 = vmul.f32 1.0, %v2238
        %v2240 = vrcp.pop %v2230
        %v2241 = vmul.f32 1.0, %v2240
        %v2242 = vrcp.pop %v2231
        %v2243 = vmul.f32 1.0, %v2242
        %v2244 = vtanh.pop %v2146
        %v2245 = vtanh.pop %v2150
        %v2246 = vtanh.pop %v2167
        %v2247 = vtanh.pop %v2171
        %v2248 = vld [vmem:[#allocation3] sm:$0xff]
        %v2249 = vld [vmem:[#allocation3 + $0x10] sm:$0xff]
        %v2250 = vmul.f32 %v2199, %v2248
        %v2251 = vmul.f32 %v2205, %v2249
        %v2252 = vmul.f32 %v2197, %v2244
        %v2253 = vmul.f32 %v2203, %v2245
        %v2254 = vadd.f32 %v2250, %v2252
        %v2255 = vadd.f32 %v2251, %v2253
        %v2256 = vld [vmem:[#allocation3 + $0x8] sm:$0xff]
        %v2257 = vld [vmem:[#allocation3 + $0x18] sm:$0xff]
        %v2258 = vmul.f32 %v2235, %v2256
        %v2259 = vmul.f32 %v2241, %v2257
        %v2260 = vmul.f32 %v2233, %v2246
        %v2261 = vmul.f32 %v2239, %v2247
        %v2262 = vadd.f32 %v2258, %v2260
        %v2263 = vadd.f32 %v2259, %v2261
        %v2264 = vtanh.pop %v2254
        %v2265 = vtanh.pop %v2255
        %v2266 = vmul.f32 %v2201, %v2264
        %v2267 = vmul.f32 %v2207, %v2265
        %v2268 = vtanh.pop %v2262
        %v2269 = vtanh.pop %v2263
        %v2270 = vmul.f32 %v2237, %v2268
        %v2271 = vmul.f32 %v2243, %v2269
        %v2272 = vstv %s1950
        %vm2273 = vcmp.lt.s32.totalorder %v2272, %v390
        %vm2274 = vcmp.lt.s32.totalorder %v2272, %v391
        %v2275 = vstv %s1951
        %vm2276 = vcmp.lt.s32.totalorder %v2275, %v390
        %vm2277 = vcmp.lt.s32.totalorder %v2275, %v391
        %v2278 = vsel %vm2273, 1, 0
        %v2279 = vsel %vm2274, 1, 0
        %2280 = vset.pattern.permute.xlu0 0
        %2281 = vperm.xlu0 %2280, %v2278
        %v2282 = vpop.permute.xlu0 %2281
        %2283 = vset.pattern.permute.xlu0 0
        %2284 = vperm.xlu0 %2283, %v2279
        %v2285 = vpop.permute.xlu0 %2284
        %vm2286 = vcmp.eq.s32.totalorder %v2282, 1
        %vm2287 = vcmp.eq.s32.totalorder %v2285, 1
        %v2288 = vsel %vm2286, %v2254, %v2248
        %v2289 = vsel %vm2287, %v2255, %v2249
        %2290 = vst [vmem:[#allocation3] sm:$0xff] %v2288
        %2291 = vst [vmem:[#allocation3 + $0x10] sm:$0xff] %v2289
        %v2292 = vld [vmem:[#allocation2] sm:$0xff]
        %v2293 = vld [vmem:[#allocation2 + $0x10] sm:$0xff]
        %v2294 = vsel %vm2286, %v2266, %v2292
        %v2295 = vsel %vm2287, %v2267, %v2293
        %2296 = vst [vmem:[#allocation2] sm:$0xff] %v2294
        %2297 = vst [vmem:[#allocation2 + $0x10] sm:$0xff] %v2295
        %v2298 = vld [vmem:[#allocation3 + $0x8] sm:$0xff]
        %v2299 = vld [vmem:[#allocation3 + $0x18] sm:$0xff]
        %v2300 = vsel %vm2276, 1, 0
        %v2301 = vsel %vm2277, 1, 0
        %2302 = vset.pattern.permute.xlu0 0
        %2303 = vperm.xlu0 %2302, %v2300
        %v2304 = vpop.permute.xlu0 %2303
        %2305 = vset.pattern.permute.xlu0 0
        %2306 = vperm.xlu0 %2305, %v2301
        %v2307 = vpop.permute.xlu0 %2306
        %vm2308 = vcmp.eq.s32.totalorder %v2304, 1
        %vm2309 = vcmp.eq.s32.totalorder %v2307, 1
        %v2310 = vsel %vm2308, %v2262, %v2298
        %v2311 = vsel %vm2309, %v2263, %v2299
        %2312 = vst [vmem:[#allocation3 + $0x8] sm:$0xff] %v2310
        %2313 = vst [vmem:[#allocation3 + $0x18] sm:$0xff] %v2311
        %v2314 = vld [vmem:[#allocation2 + $0x8] sm:$0xff]
        %v2315 = vld [vmem:[#allocation2 + $0x18] sm:$0xff]
        %v2316 = vsel %vm2308, %v2270, %v2314
        %v2317 = vsel %vm2309, %v2271, %v2315
        %2318 = vst [vmem:[#allocation2 + $0x8] sm:$0xff] %v2316
        %2319 = vst [vmem:[#allocation2 + $0x18] sm:$0xff] %v2317
        %v2320 = vsel %vm2286, %v2266, 0.0
        %v2321 = vsel %vm2287, %v2267, 0.0
        %v2322 = vpack.c.bf16 %v2321, %v2320
        %v2324 = vunpack.c.l.b16 %v2322
        %v2325 = vunpack.c.h.b16 %v2322
        %v2326 = vpack.c.b16 %v2324, %v2324
        %v2327 = vpack.c.b16 %v2325, %v2325
        %s2330 = scalar_lea.vmem %s367, 16
        %2331 = vst [vmem:[%s2330] sm:$0xf] %v2326
        %2332 = vst [vmem:[%s2330 + $0x4] sm:$0xf] %v2327
        %v2333 = vsel %vm2308, %v2270, 0.0
        %v2334 = vsel %vm2309, %v2271, 0.0
        %v2335 = vpack.c.bf16 %v2334, %v2333
        %v2337 = vunpack.c.l.b16 %v2335
        %v2338 = vunpack.c.h.b16 %v2335
        %v2339 = vpack.c.b16 %v2337, %v2337
        %v2340 = vpack.c.b16 %v2338, %v2338
        %s2343 = scalar_lea.vmem %s375, 8
        %2344 = vst [vmem:[%s2343] sm:$0xf] %v2339
        %2345 = vst [vmem:[%s2343 + $0x4] sm:$0xf] %v2340
        %s2346 = sadd.s32 %s520, 3
        %s2347 = ssub.s32 4, %s520
        %v2348 = vld [vmem:[#allocation2] sm:$0xff]
        %v2349 = vld [vmem:[#allocation2 + $0x8] sm:$0xff]
        %v2350 = vld [vmem:[#allocation2 + $0x10] sm:$0xff]
        %v2351 = vld [vmem:[#allocation2 + $0x18] sm:$0xff]
        %v2352 = vpack.c.bf16 %v2350, %v2348
        %v2353 = vpack.c.bf16 %v2351, %v2349
        %2354 = vmatprep.subr.bf16.mxu0 %v969
        %2355 = vmatpush1.bf16.msra.mxu0 %v968
        %2356 = vmatprep.subr.bf16.mxu0 %v961
        %2357 = vmatpush1.bf16.msra.mxu0 %v960
        %2358 = vmatprep.subr.bf16.mxu0 %v953
        %2359 = vmatpush1.bf16.msra.mxu0 %v952
        %2360 = vmatprep.subr.bf16.mxu0 %v945
        %2361 = vmatpush1.bf16.msra.mxu0 %v944
        %2362 = vmatprep.subr.bf16.mxu0 %v937
        %2363 = vmatpush1.bf16.msra.mxu0 %v936
        %2364 = vmatprep.subr.bf16.mxu0 %v929
        %2365 = vmatpush1.bf16.msra.mxu0 %v928
        %2366 = vmatprep.subr.bf16.mxu0 %v921
        %2367 = vmatpush1.bf16.msra.mxu0 %v920
        %2368 = vmatprep.subr.bf16.mxu0 %v913
        %2369 = vmatpush1.bf16.msra.mxu0 %v912
        %2370 = vmatprep.subr.bf16.mxu0 %v1033
        %2371 = vmatpush2.bf16.msra.mxu0 %v1032
        %2372 = vmatprep.subr.bf16.mxu0 %v1025
        %2373 = vmatpush2.bf16.msra.mxu0 %v1024
        %2374 = vmatprep.subr.bf16.mxu0 %v1017
        %2375 = vmatpush2.bf16.msra.mxu0 %v1016
        %2376 = vmatprep.subr.bf16.mxu0 %v1009
        %2377 = vmatpush2.bf16.msra.mxu0 %v1008
        %2378 = vmatprep.subr.bf16.mxu0 %v1001
        %2379 = vmatpush2.bf16.msra.mxu0 %v1000
        %2380 = vmatprep.subr.bf16.mxu0 %v993
        %2381 = vmatpush2.bf16.msra.mxu0 %v992
        %2382 = vmatprep.subr.bf16.mxu0 %v985
        %2383 = vmatpush2.bf16.msra.mxu0 %v984
        %2384 = vmatprep.subr.bf16.mxu0 %v977
        %2385 = vmatpush2.bf16.msra.mxu0 %v976
        %2386 = vmatprep.mubr.bf16.mxu0 %v2353
        %2387 = vmatmul.mubr.bf16.gmra.mxu0 %v2352
        %v2388 = vpop.f32.mrf.mxu0
        %v2389 = vadd.f32 0.0, %v2388
        %v2390 = vpop.f32.mrf.mxu0
        %v2391 = vadd.f32 0.0, %v2390
        %v2392 = vpop.f32.mrf.mxu0
        %v2393 = vadd.f32 0.0, %v2392
        %v2394 = vpop.f32.mrf.mxu0
        %v2395 = vadd.f32 0.0, %v2394
        %2396 = vdwg.mxu0
        %2397 = vmatprep.subr.bf16.mxu0 %v971
        %2398 = vmatpush1.bf16.msra.mxu0 %v970
        %2399 = vmatprep.subr.bf16.mxu0 %v963
        %2400 = vmatpush1.bf16.msra.mxu0 %v962
        %2401 = vmatprep.subr.bf16.mxu0 %v955
        %2402 = vmatpush1.bf16.msra.mxu0 %v954
        %2403 = vmatprep.subr.bf16.mxu0 %v947
        %2404 = vmatpush1.bf16.msra.mxu0 %v946
        %2405 = vmatprep.subr.bf16.mxu0 %v939
        %2406 = vmatpush1.bf16.msra.mxu0 %v938
        %2407 = vmatprep.subr.bf16.mxu0 %v931
        %2408 = vmatpush1.bf16.msra.mxu0 %v930
        %2409 = vmatprep.subr.bf16.mxu0 %v923
        %2410 = vmatpush1.bf16.msra.mxu0 %v922
        %2411 = vmatprep.subr.bf16.mxu0 %v915
        %2412 = vmatpush1.bf16.msra.mxu0 %v914
        %2413 = vmatprep.subr.bf16.mxu0 %v1035
        %2414 = vmatpush2.bf16.msra.mxu0 %v1034
        %2415 = vmatprep.subr.bf16.mxu0 %v1027
        %2416 = vmatpush2.bf16.msra.mxu0 %v1026
        %2417 = vmatprep.subr.bf16.mxu0 %v1019
        %2418 = vmatpush2.bf16.msra.mxu0 %v1018
        %2419 = vmatprep.subr.bf16.mxu0 %v1011
        %2420 = vmatpush2.bf16.msra.mxu0 %v1010
        %2421 = vmatprep.subr.bf16.mxu0 %v1003
        %2422 = vmatpush2.bf16.msra.mxu0 %v1002
        %2423 = vmatprep.subr.bf16.mxu0 %v995
        %2424 = vmatpush2.bf16.msra.mxu0 %v994
        %2425 = vmatprep.subr.bf16.mxu0 %v987
        %2426 = vmatpush2.bf16.msra.mxu0 %v986
        %2427 = vmatprep.subr.bf16.mxu0 %v979
        %2428 = vmatpush2.bf16.msra.mxu0 %v978
        %2429 = vmatprep.mubr.bf16.mxu0 %v2353
        %2430 = vmatmul.mubr.bf16.gmra.mxu0 %v2352
        %v2431 = vpop.f32.mrf.mxu0
        %v2432 = vadd.f32 0.0, %v2431
        %v2433 = vpop.f32.mrf.mxu0
        %v2434 = vadd.f32 0.0, %v2433
        %v2435 = vpop.f32.mrf.mxu0
        %v2436 = vadd.f32 0.0, %v2435
        %v2437 = vpop.f32.mrf.mxu0
        %v2438 = vadd.f32 0.0, %v2437
        %2439 = vdwg.mxu0
        %2440 = vmatprep.subr.bf16.mxu0 %v973
        %2441 = vmatpush1.bf16.msra.mxu0 %v972
        %2442 = vmatprep.subr.bf16.mxu0 %v965
        %2443 = vmatpush1.bf16.msra.mxu0 %v964
        %2444 = vmatprep.subr.bf16.mxu0 %v957
        %2445 = vmatpush1.bf16.msra.mxu0 %v956
        %2446 = vmatprep.subr.bf16.mxu0 %v949
        %2447 = vmatpush1.bf16.msra.mxu0 %v948
        %2448 = vmatprep.subr.bf16.mxu0 %v941
        %2449 = vmatpush1.bf16.msra.mxu0 %v940
        %2450 = vmatprep.subr.bf16.mxu0 %v933
        %2451 = vmatpush1.bf16.msra.mxu0 %v932
        %2452 = vmatprep.subr.bf16.mxu0 %v925
        %2453 = vmatpush1.bf16.msra.mxu0 %v924
        %2454 = vmatprep.subr.bf16.mxu0 %v917
        %2455 = vmatpush1.bf16.msra.mxu0 %v916
        %2456 = vmatprep.subr.bf16.mxu0 %v1037
        %2457 = vmatpush2.bf16.msra.mxu0 %v1036
        %2458 = vmatprep.subr.bf16.mxu0 %v1029
        %2459 = vmatpush2.bf16.msra.mxu0 %v1028
        %2460 = vmatprep.subr.bf16.mxu0 %v1021
        %2461 = vmatpush2.bf16.msra.mxu0 %v1020
        %2462 = vmatprep.subr.bf16.mxu0 %v1013
        %2463 = vmatpush2.bf16.msra.mxu0 %v1012
        %2464 = vmatprep.subr.bf16.mxu0 %v1005
        %2465 = vmatpush2.bf16.msra.mxu0 %v1004
        %2466 = vmatprep.subr.bf16.mxu0 %v997
        %2467 = vmatpush2.bf16.msra.mxu0 %v996
        %2468 = vmatprep.subr.bf16.mxu0 %v989
        %2469 = vmatpush2.bf16.msra.mxu0 %v988
        %2470 = vmatprep.subr.bf16.mxu0 %v981
        %2471 = vmatpush2.bf16.msra.mxu0 %v980
        %2472 = vmatprep.mubr.bf16.mxu0 %v2353
        %2473 = vmatmul.mubr.bf16.gmra.mxu0 %v2352
        %v2474 = vpop.f32.mrf.mxu0
        %v2475 = vadd.f32 0.0, %v2474
        %v2476 = vpop.f32.mrf.mxu0
        %v2477 = vadd.f32 0.0, %v2476
        %v2478 = vpop.f32.mrf.mxu0
        %v2479 = vadd.f32 0.0, %v2478
        %v2480 = vpop.f32.mrf.mxu0
        %v2481 = vadd.f32 0.0, %v2480
        %2482 = vdwg.mxu0
        %2483 = vmatprep.subr.bf16.mxu0 %v975
        %2484 = vmatpush1.bf16.msra.mxu0 %v974
        %2485 = vmatprep.subr.bf16.mxu0 %v967
        %2486 = vmatpush1.bf16.msra.mxu0 %v966
        %2487 = vmatprep.subr.bf16.mxu0 %v959
        %2488 = vmatpush1.bf16.msra.mxu0 %v958
        %2489 = vmatprep.subr.bf16.mxu0 %v951
        %2490 = vmatpush1.bf16.msra.mxu0 %v950
        %2491 = vmatprep.subr.bf16.mxu0 %v943
        %2492 = vmatpush1.bf16.msra.mxu0 %v942
        %2493 = vmatprep.subr.bf16.mxu0 %v935
        %2494 = vmatpush1.bf16.msra.mxu0 %v934
        %2495 = vmatprep.subr.bf16.mxu0 %v927
        %2496 = vmatpush1.bf16.msra.mxu0 %v926
        %2497 = vmatprep.subr.bf16.mxu0 %v919
        %2498 = vmatpush1.bf16.msra.mxu0 %v918
        %2499 = vmatprep.subr.bf16.mxu0 %v1039
        %2500 = vmatpush2.bf16.msra.mxu0 %v1038
        %2501 = vmatprep.subr.bf16.mxu0 %v1031
        %2502 = vmatpush2.bf16.msra.mxu0 %v1030
        %2503 = vmatprep.subr.bf16.mxu0 %v1023
        %2504 = vmatpush2.bf16.msra.mxu0 %v1022
        %2505 = vmatprep.subr.bf16.mxu0 %v1015
        %2506 = vmatpush2.bf16.msra.mxu0 %v1014
        %2507 = vmatprep.subr.bf16.mxu0 %v1007
        %2508 = vmatpush2.bf16.msra.mxu0 %v1006
        %2509 = vmatprep.subr.bf16.mxu0 %v999
        %2510 = vmatpush2.bf16.msra.mxu0 %v998
        %2511 = vmatprep.subr.bf16.mxu0 %v991
        %2512 = vmatpush2.bf16.msra.mxu0 %v990
        %2513 = vmatprep.subr.bf16.mxu0 %v983
        %2514 = vmatpush2.bf16.msra.mxu0 %v982
        %2515 = vmatprep.mubr.bf16.mxu0 %v2353
        %2516 = vmatmul.mubr.bf16.gmra.mxu0 %v2352
        %v2517 = vpop.f32.mrf.mxu0
        %v2518 = vadd.f32 0.0, %v2517
        %v2519 = vpop.f32.mrf.mxu0
        %v2520 = vadd.f32 0.0, %v2519
        %v2521 = vpop.f32.mrf.mxu0
        %v2522 = vadd.f32 0.0, %v2521
        %v2523 = vpop.f32.mrf.mxu0
        %v2524 = vadd.f32 0.0, %v2523
        %2525 = vdwg.mxu0
        %s2526 = scalar_lea.vmem %s315, 96 [#allocation4]
        %v2527 = vld [vmem:[%s2526] sm:$0xff]
        %v2528 = vld [vmem:[%s2526 + $0x8] sm:$0xff]
        %v2529 = vld [vmem:[%s2526 + $0x10] sm:$0xff]
        %v2530 = vld [vmem:[%s2526 + $0x18] sm:$0xff]
        %v2531 = vunpack.c.l.bf16 %v2527
        %v2532 = vunpack.c.h.bf16 %v2527
        %v2533 = vunpack.c.l.bf16 %v2528
        %v2534 = vunpack.c.h.bf16 %v2528
        %v2535 = vunpack.c.l.bf16 %v2529
        %v2536 = vunpack.c.h.bf16 %v2529
        %v2537 = vunpack.c.l.bf16 %v2530
        %v2538 = vunpack.c.h.bf16 %v2530
        %v2539 = vadd.f32 %v2531, %v2389
        %v2540 = vadd.f32 %v2532, %v2391
        %v2541 = vadd.f32 %v2533, %v2432
        %v2542 = vadd.f32 %v2534, %v2434
        %v2543 = vadd.f32 %v2535, %v2393
        %v2544 = vadd.f32 %v2536, %v2395
        %v2545 = vadd.f32 %v2537, %v2436
        %v2546 = vadd.f32 %v2538, %v2438
        %v2547 = vld [vmem:[%s322] sm:$0xff]
        %v2548 = vld [vmem:[%s322 + $0x8] sm:$0xff]
        %v2549 = vld [vmem:[%s322 + $0x10] sm:$0xff]
        %v2550 = vld [vmem:[%s322 + $0x18] sm:$0xff]
        %v2551 = vunpack.c.l.bf16 %v2547
        %v2552 = vunpack.c.h.bf16 %v2547
        %v2553 = vunpack.c.l.bf16 %v2548
        %v2554 = vunpack.c.h.bf16 %v2548
        %v2555 = vunpack.c.l.bf16 %v2549
        %v2556 = vunpack.c.h.bf16 %v2549
        %v2557 = vunpack.c.l.bf16 %v2550
        %v2558 = vunpack.c.h.bf16 %v2550
        %v2559 = vadd.f32 %v2551, %v2475
        %v2560 = vadd.f32 %v2552, %v2477
        %v2561 = vadd.f32 %v2553, %v2518
        %v2562 = vadd.f32 %v2554, %v2520
        %v2563 = vadd.f32 %v2555, %v2479
        %v2564 = vadd.f32 %v2556, %v2481
        %v2565 = vadd.f32 %v2557, %v2522
        %v2566 = vadd.f32 %v2558, %v2524
        %v2567 = vxor.u32 %v2539, 2147483648
        %v2568 = vxor.u32 %v2540, 2147483648
        %v2569 = vxor.u32 %v2541, 2147483648
        %v2570 = vxor.u32 %v2543, 2147483648
        %v2571 = vxor.u32 %v2544, 2147483648
        %v2572 = vxor.u32 %v2545, 2147483648
        %v2573 = vmul.f32 %v2567, 1.442695
        %v2574 = vpow.pop %v2573
        %v2575 = vmul.f32 %v2568, 1.442695
        %v2576 = vpow.pop %v2575
        %v2577 = vmul.f32 %v2569, 1.442695
        %v2578 = vpow.pop %v2577
        %v2579 = vmul.f32 %v2570, 1.442695
        %v2580 = vpow.pop %v2579
        %v2581 = vmul.f32 %v2571, 1.442695
        %v2582 = vpow.pop %v2581
        %v2583 = vmul.f32 %v2572, 1.442695
        %v2584 = vpow.pop %v2583
        %v2585 = vadd.f32 %v2574, 1.0
        %v2586 = vadd.f32 %v2576, 1.0
        %v2587 = vadd.f32 %v2578, 1.0
        %v2588 = vadd.f32 %v2580, 1.0
        %v2589 = vadd.f32 %v2582, 1.0
        %v2590 = vadd.f32 %v2584, 1.0
        %v2591 = vrcp.pop %v2585
        %v2592 = vmul.f32 1.0, %v2591
        %v2593 = vrcp.pop %v2586
        %v2594 = vmul.f32 1.0, %v2593
        %v2595 = vrcp.pop %v2587
        %v2596 = vmul.f32 1.0, %v2595
        %v2597 = vrcp.pop %v2588
        %v2598 = vmul.f32 1.0, %v2597
        %v2599 = vrcp.pop %v2589
        %v2600 = vmul.f32 1.0, %v2599
        %v2601 = vrcp.pop %v2590
        %v2602 = vmul.f32 1.0, %v2601
        %v2603 = vxor.u32 %v2559, 2147483648
        %v2604 = vxor.u32 %v2560, 2147483648
        %v2605 = vxor.u32 %v2561, 2147483648
        %v2606 = vxor.u32 %v2563, 2147483648
        %v2607 = vxor.u32 %v2564, 2147483648
        %v2608 = vxor.u32 %v2565, 2147483648
        %v2609 = vmul.f32 %v2603, 1.442695
        %v2610 = vpow.pop %v2609
        %v2611 = vmul.f32 %v2604, 1.442695
        %v2612 = vpow.pop %v2611
        %v2613 = vmul.f32 %v2605, 1.442695
        %v2614 = vpow.pop %v2613
        %v2615 = vmul.f32 %v2606, 1.442695
        %v2616 = vpow.pop %v2615
        %v2617 = vmul.f32 %v2607, 1.442695
        %v2618 = vpow.pop %v2617
        %v2619 = vmul.f32 %v2608, 1.442695
        %v2620 = vpow.pop %v2619
        %v2621 = vadd.f32 %v2610, 1.0
        %v2622 = vadd.f32 %v2612, 1.0
        %v2623 = vadd.f32 %v2614, 1.0
        %v2624 = vadd.f32 %v2616, 1.0
        %v2625 = vadd.f32 %v2618, 1.0
        %v2626 = vadd.f32 %v2620, 1.0
        %v2627 = vrcp.pop %v2621
        %v2628 = vmul.f32 1.0, %v2627
        %v2629 = vrcp.pop %v2622
        %v2630 = vmul.f32 1.0, %v2629
        %v2631 = vrcp.pop %v2623
        %v2632 = vmul.f32 1.0, %v2631
        %v2633 = vrcp.pop %v2624
        %v2634 = vmul.f32 1.0, %v2633
        %v2635 = vrcp.pop %v2625
        %v2636 = vmul.f32 1.0, %v2635
        %v2637 = vrcp.pop %v2626
        %v2638 = vmul.f32 1.0, %v2637
        %v2639 = vtanh.pop %v2542
        %v2640 = vtanh.pop %v2546
        %v2641 = vtanh.pop %v2562
        %v2642 = vtanh.pop %v2566
        %v2643 = vld [vmem:[#allocation3] sm:$0xff]
        %v2644 = vld [vmem:[#allocation3 + $0x10] sm:$0xff]
        %v2645 = vmul.f32 %v2594, %v2643
        %v2646 = vmul.f32 %v2600, %v2644
        %v2647 = vmul.f32 %v2592, %v2639
        %v2648 = vmul.f32 %v2598, %v2640
        %v2649 = vadd.f32 %v2645, %v2647
        %v2650 = vadd.f32 %v2646, %v2648
        %v2651 = vld [vmem:[#allocation3 + $0x8] sm:$0xff]
        %v2652 = vld [vmem:[#allocation3 + $0x18] sm:$0xff]
        %v2653 = vmul.f32 %v2630, %v2651
        %v2654 = vmul.f32 %v2636, %v2652
        %v2655 = vmul.f32 %v2628, %v2641
        %v2656 = vmul.f32 %v2634, %v2642
        %v2657 = vadd.f32 %v2653, %v2655
        %v2658 = vadd.f32 %v2654, %v2656
        %v2659 = vtanh.pop %v2649
        %v2660 = vtanh.pop %v2650
        %v2661 = vmul.f32 %v2596, %v2659
        %v2662 = vmul.f32 %v2602, %v2660
        %v2663 = vtanh.pop %v2657
        %v2664 = vtanh.pop %v2658
        %v2665 = vmul.f32 %v2632, %v2663
        %v2666 = vmul.f32 %v2638, %v2664
        %v2667 = vstv %s2346
        %vm2668 = vcmp.lt.s32.totalorder %v2667, %v390
        %vm2669 = vcmp.lt.s32.totalorder %v2667, %v391
        %v2670 = vstv %s2347
        %vm2671 = vcmp.lt.s32.totalorder %v2670, %v390
        %vm2672 = vcmp.lt.s32.totalorder %v2670, %v391
        %v2673 = vsel %vm2668, 1, 0
        %v2674 = vsel %vm2669, 1, 0
        %2675 = vset.pattern.permute.xlu0 0
        %2676 = vperm.xlu0 %2675, %v2673
        %v2677 = vpop.permute.xlu0 %2676
        %2678 = vset.pattern.permute.xlu0 0
        %2679 = vperm.xlu0 %2678, %v2674
        %v2680 = vpop.permute.xlu0 %2679
        %vm2681 = vcmp.eq.s32.totalorder %v2677, 1
        %vm2682 = vcmp.eq.s32.totalorder %v2680, 1
        %v2683 = vsel %vm2681, %v2649, %v2643
        %v2684 = vsel %vm2682, %v2650, %v2644
        %2685 = vst [vmem:[#allocation3] sm:$0xff] %v2683
        %2686 = vst [vmem:[#allocation3 + $0x10] sm:$0xff] %v2684
        %v2687 = vld [vmem:[#allocation2] sm:$0xff]
        %v2688 = vld [vmem:[#allocation2 + $0x10] sm:$0xff]
        %v2689 = vsel %vm2681, %v2661, %v2687
        %v2690 = vsel %vm2682, %v2662, %v2688
        %2691 = vst [vmem:[#allocation2] sm:$0xff] %v2689
        %2692 = vst [vmem:[#allocation2 + $0x10] sm:$0xff] %v2690
        %v2693 = vld [vmem:[#allocation3 + $0x8] sm:$0xff]
        %v2694 = vld [vmem:[#allocation3 + $0x18] sm:$0xff]
        %v2695 = vsel %vm2671, 1, 0
        %v2696 = vsel %vm2672, 1, 0
        %2697 = vset.pattern.permute.xlu0 0
        %2698 = vperm.xlu0 %2697, %v2695
        %v2699 = vpop.permute.xlu0 %2698
        %2700 = vset.pattern.permute.xlu0 0
        %2701 = vperm.xlu0 %2700, %v2696
        %v2702 = vpop.permute.xlu0 %2701
        %vm2703 = vcmp.eq.s32.totalorder %v2699, 1
        %vm2704 = vcmp.eq.s32.totalorder %v2702, 1
        %v2705 = vsel %vm2703, %v2657, %v2693
        %v2706 = vsel %vm2704, %v2658, %v2694
        %2707 = vst [vmem:[#allocation3 + $0x8] sm:$0xff] %v2705
        %2708 = vst [vmem:[#allocation3 + $0x18] sm:$0xff] %v2706
        %v2709 = vld [vmem:[#allocation2 + $0x8] sm:$0xff]
        %v2710 = vld [vmem:[#allocation2 + $0x18] sm:$0xff]
        %v2711 = vsel %vm2703, %v2665, %v2709
        %v2712 = vsel %vm2704, %v2666, %v2710
        %2713 = vst [vmem:[#allocation2 + $0x8] sm:$0xff] %v2711
        %2714 = vst [vmem:[#allocation2 + $0x18] sm:$0xff] %v2712
        %v2715 = vsel %vm2681, %v2661, 0.0
        %v2716 = vsel %vm2682, %v2662, 0.0
        %v2717 = vpack.c.bf16 %v2716, %v2715
        %v2719 = vunpack.c.l.b16 %v2717
        %v2720 = vunpack.c.h.b16 %v2717
        %v2721 = vpack.c.b16 %v2719, %v2719
        %v2722 = vpack.c.b16 %v2720, %v2720
        %s2725 = scalar_lea.vmem %s367, 24
        %2726 = vst [vmem:[%s2725] sm:$0xf] %v2721
        %2727 = vst [vmem:[%s2725 + $0x4] sm:$0xf] %v2722
        %v2728 = vsel %vm2703, %v2665, 0.0
        %v2729 = vsel %vm2704, %v2666, 0.0
        %v2730 = vpack.c.bf16 %v2729, %v2728
        %v2732 = vunpack.c.l.b16 %v2730
        %v2733 = vunpack.c.h.b16 %v2730
        %v2734 = vpack.c.b16 %v2732, %v2732
        %v2735 = vpack.c.b16 %v2733, %v2733
        %2738 = vst [vmem:[%s375] sm:$0xf] %v2734
        %2739 = vst [vmem:[%s375 + $0x4] sm:$0xf] %v2735
        %s2740 = smul.u32 4, %s17
        %p2741 = scmp.lt.s32.totalorder %s2740, 7
        %s2742 = scalar_select %p2741, %s2740, 7
        %s2743 = smul.addr %s2742, 2
        %s2744 = smul.addr %s2743, 4
        %s2745 = scalar_lea.vmem %s4, %s2744
        %s2746 = ssub.s32 1, %s17
        %s2747 = smul.u32 4, %s2746
        %p2748 = scmp.lt.s32.totalorder %s2747, 7
        %s2749 = scalar_select %p2748, %s2747, 7
        %s2750 = smul.addr %s2749, 2
        %s2751 = smul.addr %s2750, 4
        %s2752 = scalar_lea.vmem %s5, %s2751
        // Predicated region
        $region87: #{bilstm_fc_forward.4} parent=73 // pred_check
          %p2753 = pneg %p131
        $region88: #{bilstm_fc_forward.4} parent=73 // pred_check_branch
          %2755 = sbr.rel (%p2753) target = $region90
        $region89: #{bilstm_fc_forward.4} parent=73 // pred_region
          %s2756 = smul.u32 4, %s17
        $region90: #{bilstm_fc_forward.4} parent=73 // pred_fallthru
          _
        // Predicated region
        $region91: #{bilstm_fc_forward.4} parent=73 // pred_check
          %p2757 = pneg %p159
        $region92: #{bilstm_fc_forward.4} parent=73 // pred_check_branch
          %2759 = sbr.rel (%p2757) target = $region94
        $region93: #{bilstm_fc_forward.4} parent=73 // pred_region
          %s2760 = ssub.s32 1, %s17
          %s2761 = smul.u32 4, %s2760
        $region94: #{bilstm_fc_forward.4} parent=73 // pred_fallthru
          _
      $region74: #{bilstm_fc_forward.4} parent=5 // pred_fallthru
        _
      %p2762 = scmp.le.s32.totalorder 2, %s12
      // Predicated region
      $region95: #{bilstm_fc_forward.4} parent=5 // pred_check
        %p2763 = pneg %p2762
      $region96: #{bilstm_fc_forward.4} parent=5 // pred_check_branch
        %2765 = sbr.rel (%p2763) target = $region98
      $region97: #{bilstm_fc_forward.4} parent=5 // pred_region
        %s2766 = ssub.s32 %s12, 2
        // Predicated region
        $region99: #{bilstm_fc_forward.4} parent=97 // pred_check
          %p2767 = pneg %p137
        $region100: #{bilstm_fc_forward.4} parent=97 // pred_check_branch
          %2769 = sbr.rel (%p2767) target = $region102
        $region101: #{bilstm_fc_forward.4} parent=97 // pred_region
          %s2770 = smul.u32 4, %s18
          %p2771 = scmp.lt.s32.totalorder %s2770, 7
          %s2772 = scalar_select %p2771, %s2770, 7
          %s2773 = smul.addr %s2772, 2
          %s2774 = smul.addr %s2773, 4
          %s2775 = scalar_lea.vmem %s4, %s2774
        $region102: #{bilstm_fc_forward.4} parent=97 // pred_fallthru
          _
        // Predicated region
        $region103: #{bilstm_fc_forward.4} parent=97 // pred_check
          %p2776 = pneg %p165
        $region104: #{bilstm_fc_forward.4} parent=97 // pred_check_branch
          %2778 = sbr.rel (%p2776) target = $region106
        $region105: #{bilstm_fc_forward.4} parent=97 // pred_region
          %s2779 = ssub.s32 1, %s18
          %s2780 = smul.u32 4, %s2779
          %p2781 = scmp.lt.s32.totalorder %s2780, 7
          %s2782 = scalar_select %p2781, %s2780, 7
          %s2783 = smul.addr %s2782, 2
          %s2784 = smul.addr %s2783, 4
          %s2785 = scalar_lea.vmem %s5, %s2784
        $region106: #{bilstm_fc_forward.4} parent=97 // pred_fallthru
          _
      $region98: #{bilstm_fc_forward.4} parent=5 // pred_fallthru
        _
    $region6: #{bilstm_fc_forward.4} parent=1 // loop_footer
      %s16 = sadd.s32 1, %s12
    $region7: #{bilstm_fc_forward.4} parent=1 // loop_footer_branch
      %11 = sbr.rel target = $region3
    $region8: #{bilstm_fc_forward.4} parent=1 // loop_exit
      _

</llo_original>
